<compile_context>
chip_gen: v6e
topology: v6e:2x2x1
jax: 0.10.0
libtpu: 0.0.40
codegen_flags: <defaults>
</compile_context>

<pallas_src>
import functools

import jax
import jax.numpy as jnp
from jax.experimental import pallas as pl
from jax.experimental.pallas import tpu as pltpu

# ---- module hyper-parameters (from the PyTorch source) ----
N_EMBD = 384                      # n_embd
NUM_HEADS = 6
HEAD_SIZE = N_EMBD // NUM_HEADS   # 64
BLOCK_SIZE = 256                  # causal context length (tril buffer size)


def _mha_kernel(x_ref, wqkv_ref, wpT_ref, bias_ref, mask_ref, o_ref, cat_ref,
                *, num_heads, head_size, bf16_exp):
    """One grid step = `Bb` batch elements.

    x_ref    : (Bb, T, C)       f32  VMEM
    wqkv_ref : (C, 3*H*D)       bf16 VMEM  columns = [Wq*scale | Wk | Wv], head-major
    wpT_ref  : (H*D, C)         bf16 VMEM  output projection weight, transposed
    bias_ref : (1, C)           f32  VMEM
    mask_ref : (T, T)           f32  VMEM  additive causal bias (0 / -1e30), resident
    o_ref    : (Bb, T, C)       f32  VMEM
    cat_ref  : (Bb, T, H*D)     bf16 VMEM scratch (concat of head outputs)
    """
    Bb, T, C = x_ref.shape
    H, D = num_heads, head_size
    HD = H * D

    xb = x_ref[...].reshape(Bb * T, C).astype(jnp.bfloat16)

    # One wide, fully packed QKV projection ((Bb*T, C) @ (C, 3*H*D)) with f32
    # accumulation, then a SINGLE cast to bf16 so every per-head slice below
    # copies half the bytes and needs no per-slice cast pass.
    qkv = jnp.dot(xb, wqkv_ref[...],
                  preferred_element_type=jnp.float32).astype(jnp.bfloat16)
    qkv = qkv.reshape(Bb, T, 3 * HD)

    mask_bias = mask_ref[...]                      # (T, T) f32, constant block

    def attend(q, k, v):
        """q, k, v: (Bb, T, D) bf16 -> (Bb, T, D) bf16 (softmax(qk^T) @ v)."""
        wei = jnp.einsum('bqd,bkd->bqk', q, k,
                         preferred_element_type=jnp.float32) + mask_bias
        wei_max = jnp.max(wei, axis=-1, keepdims=True)
        shifted = wei - wei_max
        if bf16_exp:
            # v6e / v7x: packed bf16 EUP/VPU -> half the exp pushes, and the
            # probs feed the p@v matmul directly (no separate cast pass).
            probs = jnp.exp(shifted.astype(jnp.bfloat16))
            row_sum = jnp.sum(probs, axis=-1, keepdims=True, dtype=jnp.float32)
        else:
            # v5e: no bf16 VPU/EUP -> keep the softmax math in f32.
            probs_f = jnp.exp(shifted)
            row_sum = jnp.sum(probs_f, axis=-1, keepdims=True)
            probs = probs_f.astype(jnp.bfloat16)
        # Deferred softmax normalization: scale the (T, D) output, not (T, T).
        inv = pl.reciprocal(row_sum, approx=True)              # EUP slot
        out = jnp.einsum('bqk,bkd->bqd', probs, v,
                         preferred_element_type=jnp.float32)
        return (out * inv).astype(jnp.bfloat16)

    # Head-PAIR loop: every VMEM slice of qkv and every store into cat_ref is
    # a 128-lane-aligned, 128-wide slab (D = 64); the per-head 64-wide split
    # happens in-register.
    for p in range(H // 2):
        c0 = 2 * p * D
        qp = qkv[:, :, c0:c0 + 2 * D]
        kp = qkv[:, :, HD + c0:HD + c0 + 2 * D]
        vp = qkv[:, :, 2 * HD + c0:2 * HD + c0 + 2 * D]
        o0 = attend(qp[..., :D], kp[..., :D], vp[..., :D])
        o1 = attend(qp[..., D:], kp[..., D:], vp[..., D:])
        cat_ref[:, :, c0:c0 + 2 * D] = jnp.concatenate([o0, o1], axis=-1)
    if H % 2:                                     # leftover head (unused for H=6)
        c0 = (H - 1) * D
        cat_ref[:, :, c0:c0 + D] = attend(qkv[:, :, c0:c0 + D],
                                          qkv[:, :, HD + c0:HD + c0 + D],
                                          qkv[:, :, 2 * HD + c0:2 * HD + c0 + D])

    # Single fully packed output projection from the bf16 scratch:
    # (Bb*T, H*D) @ (H*D, C), f32 accumulation, + bias.
    cat = cat_ref[...].reshape(Bb * T, HD)
    out = jnp.dot(cat, wpT_ref[...], preferred_element_type=jnp.float32)
    out = out + bias_ref[...]                     # (1, C) broadcast
    o_ref[...] = out.reshape(Bb, T, C).astype(o_ref.dtype)


def _tpu_kind():
    try:
        return jax.devices()[0].device_kind.lower()
    except Exception:
        return ""


def _pick_block_b(B, T, two_tc):
    """Pack up to ~512 rows into the M dim of the projection matmuls per grid
    step.  Keep >= 2 grid steps only on 2-TensorCore chips (v7x); on v5e/v6e a
    single fat step is preferred.  Require T % 8 == 0 for block_b > 1 so the
    per-batch row slabs of qkv stay sublane-aligned."""
    if T % 8 != 0:
        return 1
    best = 1
    for d in range(1, B + 1):
        if B % d:
            continue
        if d * T > 512:
            continue
        if two_tc and B > 1 and B // d < 2:
            continue
        best = d
    return best


def prepare_mha_params(wq, wk, wv, w_proj, b_proj):
    """Fuse / cast the weights ONCE, outside the per-call hot path.

    wq/wk/wv: (H, C, D) (pre-transposed so y = x @ W[h]).
    w_proj:   (C, C) PyTorch (out, in) layout.  b_proj: (C,).
    Returns (w_qkv bf16 (C, 3*H*D), wpT bf16 (H*D, C), bias f32 (1, C))."""
    H, C, D = wq.shape
    scale = D ** -0.5                          # 1/8 for D=64 -> exact in bf16
    wq_cols = jnp.transpose(wq * scale, (1, 0, 2)).reshape(C, H * D)
    wk_cols = jnp.transpose(wk, (1, 0, 2)).reshape(C, H * D)
    wv_cols = jnp.transpose(wv, (1, 0, 2)).reshape(C, H * D)
    w_qkv = jnp.concatenate([wq_cols, wk_cols, wv_cols], axis=-1).astype(jnp.bfloat16)
    wpT = w_proj.T.astype(jnp.bfloat16)        # (H*D, C): y = cat @ wpT + b
    bias = b_proj.reshape(1, C).astype(jnp.float32)
    return w_qkv, wpT, bias


def multi_head_attention(x, w_qkv, wpT, bias, *, num_heads=NUM_HEADS, block_b=None):
    """x: (B, T, C) f32; w_qkv/wpT/bias from prepare_mha_params. -> (B, T, C)."""
    B, T, C = x.shape
    H = num_heads
    D = w_qkv.shape[-1] // (3 * H)
    assert T <= BLOCK_SIZE, "sequence longer than the module's causal context"

    kind = _tpu_kind()
    two_tc = ("v7" in kind) or ("tpu7" in kind)        # v7x: 2 TensorCores / chip
    bf16_exp = two_tc or ("v6" in kind)                # v5e: no bf16 EUP/VPU

    if block_b is None:
        block_b = _pick_block_b(B, T, two_tc)
    assert B % block_b == 0, "block_b must divide B"

    # Additive causal bias, built once OUTSIDE the kernel and kept resident in
    # VMEM via a constant index_map (DMA'd once, no per-step iota/where work).
    row = jax.lax.broadcasted_iota(jnp.int32, (T, T), 0)
    col = jax.lax.broadcasted_iota(jnp.int32, (T, T), 1)
    mask_bias = jnp.where(col <= row, 0.0, -1e30).astype(jnp.float32)

    kernel = functools.partial(_mha_kernel, num_heads=H, head_size=D,
                               bf16_exp=bf16_exp)

    return pl.pallas_call(
        kernel,
        out_shape=jax.ShapeDtypeStruct((B, T, C), x.dtype),
        grid_spec=pltpu.PrefetchScalarGridSpec(
            num_scalar_prefetch=0,
            grid=(B // block_b,),
            in_specs=[
                pl.BlockSpec((block_b, T, C), lambda b: (b, 0, 0)),   # x
                pl.BlockSpec((C, 3 * H * D), lambda b: (0, 0)),       # fused Wqkv (bf16)
                pl.BlockSpec((H * D, C), lambda b: (0, 0)),           # Wproj^T   (bf16)
                pl.BlockSpec((1, C), lambda b: (0, 0)),               # bias
                pl.BlockSpec((T, T), lambda b: (0, 0)),               # causal bias
            ],
            out_specs=pl.BlockSpec((block_b, T, C), lambda b: (b, 0, 0)),
            scratch_shapes=[pltpu.VMEM((block_b, T, H * D), jnp.bfloat16)],
        ),
        compiler_params=pltpu.CompilerParams(
            dimension_semantics=("parallel",),
            vmem_limit_bytes=(48 if two_tc else 64) * 1024 * 1024),
    )(x, w_qkv, wpT, bias, mask_bias)


def _reference(x, wq, wk, wv, w_proj, b_proj):
    """Pure-JAX f32 reference mirroring the PyTorch module (eval mode)."""
    B, T, C = x.shape
    H, _, D = wq.shape
    outs = []
    for h in range(H):
        q = x @ wq[h]
        k = x @ wk[h]
        v = x @ wv[h]
        wei = (q @ jnp.swapaxes(k, -2, -1)) * (D ** -0.5)
        mask = jnp.tril(jnp.ones((T, T), dtype=bool))
        wei = jnp.where(mask, wei, -jnp.inf)
        wei = jax.nn.softmax(wei, axis=-1)
        outs.append(wei @ v)
    cat = jnp.concatenate(outs, axis=-1)
    return cat @ w_proj.T + b_proj


if __name__ == "__main__":
    key = jax.random.PRNGKey(0)
    kx, kq, kk, kv, kp, kb = jax.random.split(key, 6)

    B, T = 2, 8                                   # small, T <= block_size (256)
    C, H, D = N_EMBD, NUM_HEADS, HEAD_SIZE

    x = jax.random.normal(kx, (B, T, C), dtype=jnp.float32)

    # deterministic "PyTorch-like" init: uniform(-1/sqrt(fan_in), 1/sqrt(fan_in))
    lim = 1.0 / (C ** 0.5)
    wq = jax.random.uniform(kq, (H, C, D), jnp.float32, -lim, lim)
    wk = jax.random.uniform(kk, (H, C, D), jnp.float32, -lim, lim)
    wv = jax.random.uniform(kv, (H, C, D), jnp.float32, -lim, lim)
    w_proj = jax.random.uniform(kp, (C, C), jnp.float32, -lim, lim)   # (out, in)
    b_proj = jax.random.uniform(kb, (C,), jnp.float32, -lim, lim)

    # Weight fusion / casts happen once, outside the forward hot path.
    w_qkv, wpT, bias = prepare_mha_params(wq, wk, wv, w_proj, b_proj)

    out = multi_head_attention(x, w_qkv, wpT, bias)
    out = jax.block_until_ready(out)

    ref = _reference(x, wq, wk, wv, w_proj, b_proj)
    assert out.shape == (B, T, C)
    # bf16 MXU operands + bf16/approx softmax pieces -> looser tolerance than f32.
    assert jnp.allclose(out, ref, atol=3e-2, rtol=3e-2), "mismatch vs reference"

    print("KERNEL_OK")
</pallas_src>

<mosaic_0001>
module attributes {stable_mosaic.version = 11 : i64} {
  func.func @_mha_kernel(%arg0: i32, %arg1: memref<2x8x384xf32, #tpu.memory_space<vmem>>, %arg2: memref<384x1152xbf16, #tpu.memory_space<vmem>>, %arg3: memref<384x384xbf16, #tpu.memory_space<vmem>>, %arg4: memref<1x384xf32, #tpu.memory_space<vmem>>, %arg5: memref<8x8xf32, #tpu.memory_space<vmem>>, %arg6: memref<2x8x384xf32, #tpu.memory_space<vmem>>, %arg7: memref<2x8x384xbf16, #tpu.memory_space<vmem>>) attributes {dimension_semantics = [#tpu.dimension_semantics<parallel>], iteration_bounds = array<i64: 1>, scalar_prefetch = 0 : i64, scratch_operands = 1 : i64, tpu.core_type = #tpu.core_type<tc>, window_params = [{transform_indices = @transform_0, window_bounds = array<i64: 2, 8, 384>}, {pipeline_mode = #tpu.pipeline_mode<synchronous>, transform_indices = @transform_1, window_bounds = array<i64: 384, 1152>}, {pipeline_mode = #tpu.pipeline_mode<synchronous>, transform_indices = @transform_2, window_bounds = array<i64: 384, 384>}, {pipeline_mode = #tpu.pipeline_mode<synchronous>, transform_indices = @transform_3, window_bounds = array<i64: 1, 384>}, {pipeline_mode = #tpu.pipeline_mode<synchronous>, transform_indices = @transform_4, window_bounds = array<i64: 8, 8>}, {transform_indices = @transform_5, window_bounds = array<i64: 2, 8, 384>}]} {
    %c0 = arith.constant 0 : index
    %c0_0 = arith.constant 0 : index
    %c0_1 = arith.constant 0 : index
    %0 = vector.load %arg1[%c0, %c0_0, %c0_1] : memref<2x8x384xf32, #tpu.memory_space<vmem>>, vector<2x8x384xf32>
    %1 = vector.shape_cast %0 : vector<2x8x384xf32> to vector<16x384xf32>
    %2 = arith.truncf %1 : vector<16x384xf32> to vector<16x384xbf16>
    %c0_2 = arith.constant 0 : index
    %c0_3 = arith.constant 0 : index
    %3 = vector.load %arg2[%c0_2, %c0_3] : memref<384x1152xbf16, #tpu.memory_space<vmem>>, vector<384x1152xbf16>
    %cst = arith.constant dense<0.000000e+00> : vector<16x1152xf32>
    %4 = tpu.matmul %2, %3, %cst {dimension_numbers = #tpu.dot_dimension_numbers<[1], [0], [0], [1], [0, 0, 1, 1], [], []>} : vector<16x384xbf16>, vector<384x1152xbf16>, vector<16x1152xf32> -> vector<16x1152xf32>
    %5 = arith.truncf %4 : vector<16x1152xf32> to vector<16x1152xbf16>
    %6 = vector.shape_cast %5 : vector<16x1152xbf16> to vector<2x8x1152xbf16>
    %c0_4 = arith.constant 0 : index
    %c0_5 = arith.constant 0 : index
    %7 = vector.load %arg5[%c0_4, %c0_5] : memref<8x8xf32, #tpu.memory_space<vmem>>, vector<8x8xf32>
    %8 = vector.extract_strided_slice %6 {offsets = [0, 0, 0], sizes = [2, 8, 128], strides = [1, 1, 1]} : vector<2x8x1152xbf16> to vector<2x8x128xbf16>
    %9 = vector.extract_strided_slice %6 {offsets = [0, 0, 384], sizes = [2, 8, 128], strides = [1, 1, 1]} : vector<2x8x1152xbf16> to vector<2x8x128xbf16>
    %10 = vector.extract_strided_slice %6 {offsets = [0, 0, 768], sizes = [2, 8, 128], strides = [1, 1, 1]} : vector<2x8x1152xbf16> to vector<2x8x128xbf16>
    %11 = vector.extract_strided_slice %8 {offsets = [0, 0, 0], sizes = [2, 8, 64], strides = [1, 1, 1]} : vector<2x8x128xbf16> to vector<2x8x64xbf16>
    %12 = vector.extract_strided_slice %9 {offsets = [0, 0, 0], sizes = [2, 8, 64], strides = [1, 1, 1]} : vector<2x8x128xbf16> to vector<2x8x64xbf16>
    %13 = vector.extract_strided_slice %10 {offsets = [0, 0, 0], sizes = [2, 8, 64], strides = [1, 1, 1]} : vector<2x8x128xbf16> to vector<2x8x64xbf16>
    "tpu.trace_start"() <{level = 10 : i32, message = "bqd,bkd->bqk"}> : () -> ()
    %cst_6 = arith.constant dense<0.000000e+00> : vector<2x8x8xf32>
    %14 = tpu.matmul %11, %12, %cst_6 {dimension_numbers = #tpu.dot_dimension_numbers<[2], [2], [1], [1], [0, 0, 0, 1, 1, 1], [0], [0]>} : vector<2x8x64xbf16>, vector<2x8x64xbf16>, vector<2x8x8xf32> -> vector<2x8x8xf32>
    "tpu.trace_stop"() : () -> ()
    %15 = vector.shape_cast %7 : vector<8x8xf32> to vector<1x8x8xf32>
    %16 = vector.broadcast %15 : vector<1x8x8xf32> to vector<2x8x8xf32>
    %17 = arith.addf %14, %16 : vector<2x8x8xf32>
    %cst_7 = arith.constant dense<0xFF800000> : vector<2x8xf32>
    %18 = vector.multi_reduction <maximumf>, %17, %cst_7 [2] : vector<2x8x8xf32> to vector<2x8xf32>
    %19 = vector.shape_cast %18 : vector<2x8xf32> to vector<2x8x1xf32>
    %20 = vector.broadcast %19 : vector<2x8x1xf32> to vector<2x8x8xf32>
    %21 = arith.subf %17, %20 : vector<2x8x8xf32>
    %22 = math.exp %21 : vector<2x8x8xf32>
    %cst_8 = arith.constant dense<0.000000e+00> : vector<2x8xf32>
    %23 = vector.multi_reduction <add>, %22, %cst_8 [2] : vector<2x8x8xf32> to vector<2x8xf32>
    %24 = vector.shape_cast %23 : vector<2x8xf32> to vector<2x8x1xf32>
    %25 = arith.truncf %22 : vector<2x8x8xf32> to vector<2x8x8xbf16>
    %26 = tpu.reciprocal %24 {approx = true} : vector<2x8x1xf32> -> vector<2x8x1xf32>
    "tpu.trace_start"() <{level = 10 : i32, message = "bqk,bkd->bqd"}> : () -> ()
    %cst_9 = arith.constant dense<0.000000e+00> : vector<2x8x64xf32>
    %27 = tpu.matmul %25, %13, %cst_9 {dimension_numbers = #tpu.dot_dimension_numbers<[2], [1], [1], [2], [0, 0, 0, 1, 1, 2], [0], [0]>} : vector<2x8x8xbf16>, vector<2x8x64xbf16>, vector<2x8x64xf32> -> vector<2x8x64xf32>
    "tpu.trace_stop"() : () -> ()
    %28 = vector.broadcast %26 : vector<2x8x1xf32> to vector<2x8x64xf32>
    %29 = arith.mulf %27, %28 : vector<2x8x64xf32>
    %30 = arith.truncf %29 : vector<2x8x64xf32> to vector<2x8x64xbf16>
    %31 = vector.extract_strided_slice %8 {offsets = [0, 0, 64], sizes = [2, 8, 64], strides = [1, 1, 1]} : vector<2x8x128xbf16> to vector<2x8x64xbf16>
    %32 = vector.extract_strided_slice %9 {offsets = [0, 0, 64], sizes = [2, 8, 64], strides = [1, 1, 1]} : vector<2x8x128xbf16> to vector<2x8x64xbf16>
    %33 = vector.extract_strided_slice %10 {offsets = [0, 0, 64], sizes = [2, 8, 64], strides = [1, 1, 1]} : vector<2x8x128xbf16> to vector<2x8x64xbf16>
    "tpu.trace_start"() <{level = 10 : i32, message = "bqd,bkd->bqk"}> : () -> ()
    %cst_10 = arith.constant dense<0.000000e+00> : vector<2x8x8xf32>
    %34 = tpu.matmul %31, %32, %cst_10 {dimension_numbers = #tpu.dot_dimension_numbers<[2], [2], [1], [1], [0, 0, 0, 1, 1, 1], [0], [0]>} : vector<2x8x64xbf16>, vector<2x8x64xbf16>, vector<2x8x8xf32> -> vector<2x8x8xf32>
    "tpu.trace_stop"() : () -> ()
    %35 = vector.shape_cast %7 : vector<8x8xf32> to vector<1x8x8xf32>
    %36 = vector.broadcast %35 : vector<1x8x8xf32> to vector<2x8x8xf32>
    %37 = arith.addf %34, %36 : vector<2x8x8xf32>
    %cst_11 = arith.constant dense<0xFF800000> : vector<2x8xf32>
    %38 = vector.multi_reduction <maximumf>, %37, %cst_11 [2] : vector<2x8x8xf32> to vector<2x8xf32>
    %39 = vector.shape_cast %38 : vector<2x8xf32> to vector<2x8x1xf32>
    %40 = vector.broadcast %39 : vector<2x8x1xf32> to vector<2x8x8xf32>
    %41 = arith.subf %37, %40 : vector<2x8x8xf32>
    %42 = math.exp %41 : vector<2x8x8xf32>
    %cst_12 = arith.constant dense<0.000000e+00> : vector<2x8xf32>
    %43 = vector.multi_reduction <add>, %42, %cst_12 [2] : vector<2x8x8xf32> to vector<2x8xf32>
    %44 = vector.shape_cast %43 : vector<2x8xf32> to vector<2x8x1xf32>
    %45 = arith.truncf %42 : vector<2x8x8xf32> to vector<2x8x8xbf16>
    %46 = tpu.reciprocal %44 {approx = true} : vector<2x8x1xf32> -> vector<2x8x1xf32>
    "tpu.trace_start"() <{level = 10 : i32, message = "bqk,bkd->bqd"}> : () -> ()
    %cst_13 = arith.constant dense<0.000000e+00> : vector<2x8x64xf32>
    %47 = tpu.matmul %45, %33, %cst_13 {dimension_numbers = #tpu.dot_dimension_numbers<[2], [1], [1], [2], [0, 0, 0, 1, 1, 2], [0], [0]>} : vector<2x8x8xbf16>, vector<2x8x64xbf16>, vector<2x8x64xf32> -> vector<2x8x64xf32>
    "tpu.trace_stop"() : () -> ()
    %48 = vector.broadcast %46 : vector<2x8x1xf32> to vector<2x8x64xf32>
    %49 = arith.mulf %47, %48 : vector<2x8x64xf32>
    %50 = arith.truncf %49 : vector<2x8x64xf32> to vector<2x8x64xbf16>
    %51 = tpu.concatenate %30, %50 in 2 : vector<2x8x64xbf16>, vector<2x8x64xbf16> -> vector<2x8x128xbf16>
    %c0_14 = arith.constant 0 : index
    %c0_15 = arith.constant 0 : index
    %c0_16 = arith.constant 0 : index
    %52 = vector.load %arg7[%c0_14, %c0_15, %c0_16] : memref<2x8x384xbf16, #tpu.memory_space<vmem>>, vector<2x8x128xbf16>
    tpu.vector_store %arg7[%c0_14, %c0_15, %c0_16], %51 {strides = array<i32>} : memref<2x8x384xbf16, #tpu.memory_space<vmem>>, vector<2x8x128xbf16>,
    %53 = vector.extract_strided_slice %6 {offsets = [0, 0, 128], sizes = [2, 8, 128], strides = [1, 1, 1]} : vector<2x8x1152xbf16> to vector<2x8x128xbf16>
    %54 = vector.extract_strided_slice %6 {offsets = [0, 0, 512], sizes = [2, 8, 128], strides = [1, 1, 1]} : vector<2x8x1152xbf16> to vector<2x8x128xbf16>
    %55 = vector.extract_strided_slice %6 {offsets = [0, 0, 896], sizes = [2, 8, 128], strides = [1, 1, 1]} : vector<2x8x1152xbf16> to vector<2x8x128xbf16>
    %56 = vector.extract_strided_slice %53 {offsets = [0, 0, 0], sizes = [2, 8, 64], strides = [1, 1, 1]} : vector<2x8x128xbf16> to vector<2x8x64xbf16>
    %57 = vector.extract_strided_slice %54 {offsets = [0, 0, 0], sizes = [2, 8, 64], strides = [1, 1, 1]} : vector<2x8x128xbf16> to vector<2x8x64xbf16>
    %58 = vector.extract_strided_slice %55 {offsets = [0, 0, 0], sizes = [2, 8, 64], strides = [1, 1, 1]} : vector<2x8x128xbf16> to vector<2x8x64xbf16>
    "tpu.trace_start"() <{level = 10 : i32, message = "bqd,bkd->bqk"}> : () -> ()
    %cst_17 = arith.constant dense<0.000000e+00> : vector<2x8x8xf32>
    %59 = tpu.matmul %56, %57, %cst_17 {dimension_numbers = #tpu.dot_dimension_numbers<[2], [2], [1], [1], [0, 0, 0, 1, 1, 1], [0], [0]>} : vector<2x8x64xbf16>, vector<2x8x64xbf16>, vector<2x8x8xf32> -> vector<2x8x8xf32>
    "tpu.trace_stop"() : () -> ()
    %60 = vector.shape_cast %7 : vector<8x8xf32> to vector<1x8x8xf32>
    %61 = vector.broadcast %60 : vector<1x8x8xf32> to vector<2x8x8xf32>
    %62 = arith.addf %59, %61 : vector<2x8x8xf32>
    %cst_18 = arith.constant dense<0xFF800000> : vector<2x8xf32>
    %63 = vector.multi_reduction <maximumf>, %62, %cst_18 [2] : vector<2x8x8xf32> to vector<2x8xf32>
    %64 = vector.shape_cast %63 : vector<2x8xf32> to vector<2x8x1xf32>
    %65 = vector.broadcast %64 : vector<2x8x1xf32> to vector<2x8x8xf32>
    %66 = arith.subf %62, %65 : vector<2x8x8xf32>
    %67 = math.exp %66 : vector<2x8x8xf32>
    %cst_19 = arith.constant dense<0.000000e+00> : vector<2x8xf32>
    %68 = vector.multi_reduction <add>, %67, %cst_19 [2] : vector<2x8x8xf32> to vector<2x8xf32>
    %69 = vector.shape_cast %68 : vector<2x8xf32> to vector<2x8x1xf32>
    %70 = arith.truncf %67 : vector<2x8x8xf32> to vector<2x8x8xbf16>
    %71 = tpu.reciprocal %69 {approx = true} : vector<2x8x1xf32> -> vector<2x8x1xf32>
    "tpu.trace_start"() <{level = 10 : i32, message = "bqk,bkd->bqd"}> : () -> ()
    %cst_20 = arith.constant dense<0.000000e+00> : vector<2x8x64xf32>
    %72 = tpu.matmul %70, %58, %cst_20 {dimension_numbers = #tpu.dot_dimension_numbers<[2], [1], [1], [2], [0, 0, 0, 1, 1, 2], [0], [0]>} : vector<2x8x8xbf16>, vector<2x8x64xbf16>, vector<2x8x64xf32> -> vector<2x8x64xf32>
    "tpu.trace_stop"() : () -> ()
    %73 = vector.broadcast %71 : vector<2x8x1xf32> to vector<2x8x64xf32>
    %74 = arith.mulf %72, %73 : vector<2x8x64xf32>
    %75 = arith.truncf %74 : vector<2x8x64xf32> to vector<2x8x64xbf16>
    %76 = vector.extract_strided_slice %53 {offsets = [0, 0, 64], sizes = [2, 8, 64], strides = [1, 1, 1]} : vector<2x8x128xbf16> to vector<2x8x64xbf16>
    %77 = vector.extract_strided_slice %54 {offsets = [0, 0, 64], sizes = [2, 8, 64], strides = [1, 1, 1]} : vector<2x8x128xbf16> to vector<2x8x64xbf16>
    %78 = vector.extract_strided_slice %55 {offsets = [0, 0, 64], sizes = [2, 8, 64], strides = [1, 1, 1]} : vector<2x8x128xbf16> to vector<2x8x64xbf16>
    "tpu.trace_start"() <{level = 10 : i32, message = "bqd,bkd->bqk"}> : () -> ()
    %cst_21 = arith.constant dense<0.000000e+00> : vector<2x8x8xf32>
    %79 = tpu.matmul %76, %77, %cst_21 {dimension_numbers = #tpu.dot_dimension_numbers<[2], [2], [1], [1], [0, 0, 0, 1, 1, 1], [0], [0]>} : vector<2x8x64xbf16>, vector<2x8x64xbf16>, vector<2x8x8xf32> -> vector<2x8x8xf32>
    "tpu.trace_stop"() : () -> ()
    %80 = vector.shape_cast %7 : vector<8x8xf32> to vector<1x8x8xf32>
    %81 = vector.broadcast %80 : vector<1x8x8xf32> to vector<2x8x8xf32>
    %82 = arith.addf %79, %81 : vector<2x8x8xf32>
    %cst_22 = arith.constant dense<0xFF800000> : vector<2x8xf32>
    %83 = vector.multi_reduction <maximumf>, %82, %cst_22 [2] : vector<2x8x8xf32> to vector<2x8xf32>
    %84 = vector.shape_cast %83 : vector<2x8xf32> to vector<2x8x1xf32>
    %85 = vector.broadcast %84 : vector<2x8x1xf32> to vector<2x8x8xf32>
    %86 = arith.subf %82, %85 : vector<2x8x8xf32>
    %87 = math.exp %86 : vector<2x8x8xf32>
    %cst_23 = arith.constant dense<0.000000e+00> : vector<2x8xf32>
    %88 = vector.multi_reduction <add>, %87, %cst_23 [2] : vector<2x8x8xf32> to vector<2x8xf32>
    %89 = vector.shape_cast %88 : vector<2x8xf32> to vector<2x8x1xf32>
    %90 = arith.truncf %87 : vector<2x8x8xf32> to vector<2x8x8xbf16>
    %91 = tpu.reciprocal %89 {approx = true} : vector<2x8x1xf32> -> vector<2x8x1xf32>
    "tpu.trace_start"() <{level = 10 : i32, message = "bqk,bkd->bqd"}> : () -> ()
    %cst_24 = arith.constant dense<0.000000e+00> : vector<2x8x64xf32>
    %92 = tpu.matmul %90, %78, %cst_24 {dimension_numbers = #tpu.dot_dimension_numbers<[2], [1], [1], [2], [0, 0, 0, 1, 1, 2], [0], [0]>} : vector<2x8x8xbf16>, vector<2x8x64xbf16>, vector<2x8x64xf32> -> vector<2x8x64xf32>
    "tpu.trace_stop"() : () -> ()
    %93 = vector.broadcast %91 : vector<2x8x1xf32> to vector<2x8x64xf32>
    %94 = arith.mulf %92, %93 : vector<2x8x64xf32>
    %95 = arith.truncf %94 : vector<2x8x64xf32> to vector<2x8x64xbf16>
    %96 = tpu.concatenate %75, %95 in 2 : vector<2x8x64xbf16>, vector<2x8x64xbf16> -> vector<2x8x128xbf16>
    %c0_25 = arith.constant 0 : index
    %c0_26 = arith.constant 0 : index
    %c128 = arith.constant 128 : index
    %97 = vector.load %arg7[%c0_25, %c0_26, %c128] : memref<2x8x384xbf16, #tpu.memory_space<vmem>>, vector<2x8x128xbf16>
    tpu.vector_store %arg7[%c0_25, %c0_26, %c128], %96 {strides = array<i32>} : memref<2x8x384xbf16, #tpu.memory_space<vmem>>, vector<2x8x128xbf16>,
    %98 = vector.extract_strided_slice %6 {offsets = [0, 0, 256], sizes = [2, 8, 128], strides = [1, 1, 1]} : vector<2x8x1152xbf16> to vector<2x8x128xbf16>
    %99 = vector.extract_strided_slice %6 {offsets = [0, 0, 640], sizes = [2, 8, 128], strides = [1, 1, 1]} : vector<2x8x1152xbf16> to vector<2x8x128xbf16>
    %100 = vector.extract_strided_slice %6 {offsets = [0, 0, 1024], sizes = [2, 8, 128], strides = [1, 1, 1]} : vector<2x8x1152xbf16> to vector<2x8x128xbf16>
    %101 = vector.extract_strided_slice %98 {offsets = [0, 0, 0], sizes = [2, 8, 64], strides = [1, 1, 1]} : vector<2x8x128xbf16> to vector<2x8x64xbf16>
    %102 = vector.extract_strided_slice %99 {offsets = [0, 0, 0], sizes = [2, 8, 64], strides = [1, 1, 1]} : vector<2x8x128xbf16> to vector<2x8x64xbf16>
    %103 = vector.extract_strided_slice %100 {offsets = [0, 0, 0], sizes = [2, 8, 64], strides = [1, 1, 1]} : vector<2x8x128xbf16> to vector<2x8x64xbf16>
    "tpu.trace_start"() <{level = 10 : i32, message = "bqd,bkd->bqk"}> : () -> ()
    %cst_27 = arith.constant dense<0.000000e+00> : vector<2x8x8xf32>
    %104 = tpu.matmul %101, %102, %cst_27 {dimension_numbers = #tpu.dot_dimension_numbers<[2], [2], [1], [1], [0, 0, 0, 1, 1, 1], [0], [0]>} : vector<2x8x64xbf16>, vector<2x8x64xbf16>, vector<2x8x8xf32> -> vector<2x8x8xf32>
    "tpu.trace_stop"() : () -> ()
    %105 = vector.shape_cast %7 : vector<8x8xf32> to vector<1x8x8xf32>
    %106 = vector.broadcast %105 : vector<1x8x8xf32> to vector<2x8x8xf32>
    %107 = arith.addf %104, %106 : vector<2x8x8xf32>
    %cst_28 = arith.constant dense<0xFF800000> : vector<2x8xf32>
    %108 = vector.multi_reduction <maximumf>, %107, %cst_28 [2] : vector<2x8x8xf32> to vector<2x8xf32>
    %109 = vector.shape_cast %108 : vector<2x8xf32> to vector<2x8x1xf32>
    %110 = vector.broadcast %109 : vector<2x8x1xf32> to vector<2x8x8xf32>
    %111 = arith.subf %107, %110 : vector<2x8x8xf32>
    %112 = math.exp %111 : vector<2x8x8xf32>
    %cst_29 = arith.constant dense<0.000000e+00> : vector<2x8xf32>
    %113 = vector.multi_reduction <add>, %112, %cst_29 [2] : vector<2x8x8xf32> to vector<2x8xf32>
    %114 = vector.shape_cast %113 : vector<2x8xf32> to vector<2x8x1xf32>
    %115 = arith.truncf %112 : vector<2x8x8xf32> to vector<2x8x8xbf16>
    %116 = tpu.reciprocal %114 {approx = true} : vector<2x8x1xf32> -> vector<2x8x1xf32>
    "tpu.trace_start"() <{level = 10 : i32, message = "bqk,bkd->bqd"}> : () -> ()
    %cst_30 = arith.constant dense<0.000000e+00> : vector<2x8x64xf32>
    %117 = tpu.matmul %115, %103, %cst_30 {dimension_numbers = #tpu.dot_dimension_numbers<[2], [1], [1], [2], [0, 0, 0, 1, 1, 2], [0], [0]>} : vector<2x8x8xbf16>, vector<2x8x64xbf16>, vector<2x8x64xf32> -> vector<2x8x64xf32>
    "tpu.trace_stop"() : () -> ()
    %118 = vector.broadcast %116 : vector<2x8x1xf32> to vector<2x8x64xf32>
    %119 = arith.mulf %117, %118 : vector<2x8x64xf32>
    %120 = arith.truncf %119 : vector<2x8x64xf32> to vector<2x8x64xbf16>
    %121 = vector.extract_strided_slice %98 {offsets = [0, 0, 64], sizes = [2, 8, 64], strides = [1, 1, 1]} : vector<2x8x128xbf16> to vector<2x8x64xbf16>
    %122 = vector.extract_strided_slice %99 {offsets = [0, 0, 64], sizes = [2, 8, 64], strides = [1, 1, 1]} : vector<2x8x128xbf16> to vector<2x8x64xbf16>
    %123 = vector.extract_strided_slice %100 {offsets = [0, 0, 64], sizes = [2, 8, 64], strides = [1, 1, 1]} : vector<2x8x128xbf16> to vector<2x8x64xbf16>
    "tpu.trace_start"() <{level = 10 : i32, message = "bqd,bkd->bqk"}> : () -> ()
    %cst_31 = arith.constant dense<0.000000e+00> : vector<2x8x8xf32>
    %124 = tpu.matmul %121, %122, %cst_31 {dimension_numbers = #tpu.dot_dimension_numbers<[2], [2], [1], [1], [0, 0, 0, 1, 1, 1], [0], [0]>} : vector<2x8x64xbf16>, vector<2x8x64xbf16>, vector<2x8x8xf32> -> vector<2x8x8xf32>
    "tpu.trace_stop"() : () -> ()
    %125 = vector.shape_cast %7 : vector<8x8xf32> to vector<1x8x8xf32>
    %126 = vector.broadcast %125 : vector<1x8x8xf32> to vector<2x8x8xf32>
    %127 = arith.addf %124, %126 : vector<2x8x8xf32>
    %cst_32 = arith.constant dense<0xFF800000> : vector<2x8xf32>
    %128 = vector.multi_reduction <maximumf>, %127, %cst_32 [2] : vector<2x8x8xf32> to vector<2x8xf32>
    %129 = vector.shape_cast %128 : vector<2x8xf32> to vector<2x8x1xf32>
    %130 = vector.broadcast %129 : vector<2x8x1xf32> to vector<2x8x8xf32>
    %131 = arith.subf %127, %130 : vector<2x8x8xf32>
    %132 = math.exp %131 : vector<2x8x8xf32>
    %cst_33 = arith.constant dense<0.000000e+00> : vector<2x8xf32>
    %133 = vector.multi_reduction <add>, %132, %cst_33 [2] : vector<2x8x8xf32> to vector<2x8xf32>
    %134 = vector.shape_cast %133 : vector<2x8xf32> to vector<2x8x1xf32>
    %135 = arith.truncf %132 : vector<2x8x8xf32> to vector<2x8x8xbf16>
    %136 = tpu.reciprocal %134 {approx = true} : vector<2x8x1xf32> -> vector<2x8x1xf32>
    "tpu.trace_start"() <{level = 10 : i32, message = "bqk,bkd->bqd"}> : () -> ()
    %cst_34 = arith.constant dense<0.000000e+00> : vector<2x8x64xf32>
    %137 = tpu.matmul %135, %123, %cst_34 {dimension_numbers = #tpu.dot_dimension_numbers<[2], [1], [1], [2], [0, 0, 0, 1, 1, 2], [0], [0]>} : vector<2x8x8xbf16>, vector<2x8x64xbf16>, vector<2x8x64xf32> -> vector<2x8x64xf32>
    "tpu.trace_stop"() : () -> ()
    %138 = vector.broadcast %136 : vector<2x8x1xf32> to vector<2x8x64xf32>
    %139 = arith.mulf %137, %138 : vector<2x8x64xf32>
    %140 = arith.truncf %139 : vector<2x8x64xf32> to vector<2x8x64xbf16>
    %141 = tpu.concatenate %120, %140 in 2 : vector<2x8x64xbf16>, vector<2x8x64xbf16> -> vector<2x8x128xbf16>
    %c0_35 = arith.constant 0 : index
    %c0_36 = arith.constant 0 : index
    %c256 = arith.constant 256 : index
    %142 = vector.load %arg7[%c0_35, %c0_36, %c256] : memref<2x8x384xbf16, #tpu.memory_space<vmem>>, vector<2x8x128xbf16>
    tpu.vector_store %arg7[%c0_35, %c0_36, %c256], %141 {strides = array<i32>} : memref<2x8x384xbf16, #tpu.memory_space<vmem>>, vector<2x8x128xbf16>,
    %c0_37 = arith.constant 0 : index
    %c0_38 = arith.constant 0 : index
    %c0_39 = arith.constant 0 : index
    %143 = vector.load %arg7[%c0_37, %c0_38, %c0_39] : memref<2x8x384xbf16, #tpu.memory_space<vmem>>, vector<2x8x384xbf16>
    %144 = vector.shape_cast %143 : vector<2x8x384xbf16> to vector<16x384xbf16>
    %c0_40 = arith.constant 0 : index
    %c0_41 = arith.constant 0 : index
    %145 = vector.load %arg3[%c0_40, %c0_41] : memref<384x384xbf16, #tpu.memory_space<vmem>>, vector<384x384xbf16>
    %cst_42 = arith.constant dense<0.000000e+00> : vector<16x384xf32>
    %146 = tpu.matmul %144, %145, %cst_42 {dimension_numbers = #tpu.dot_dimension_numbers<[1], [0], [0], [1], [0, 0, 1, 1], [], []>} : vector<16x384xbf16>, vector<384x384xbf16>, vector<16x384xf32> -> vector<16x384xf32>
    %c0_43 = arith.constant 0 : index
    %c0_44 = arith.constant 0 : index
    %147 = vector.load %arg4[%c0_43, %c0_44] : memref<1x384xf32, #tpu.memory_space<vmem>>, vector<1x384xf32>
    %148 = vector.broadcast %147 : vector<1x384xf32> to vector<16x384xf32>
    %149 = arith.addf %146, %148 : vector<16x384xf32>
    %150 = vector.shape_cast %149 : vector<16x384xf32> to vector<2x8x384xf32>
    %c0_45 = arith.constant 0 : index
    %c0_46 = arith.constant 0 : index
    %c0_47 = arith.constant 0 : index
    %151 = vector.load %arg6[%c0_45, %c0_46, %c0_47] : memref<2x8x384xf32, #tpu.memory_space<vmem>>, vector<2x8x384xf32>
    tpu.vector_store %arg6[%c0_45, %c0_46, %c0_47], %150 {strides = array<i32>} : memref<2x8x384xf32, #tpu.memory_space<vmem>>, vector<2x8x384xf32>,
    return
  }
  func.func @transform_0(%arg0: i32) -> (i32, i32, i32) {
    %c0_i32 = arith.constant 0 : i32
    %c0_i32_0 = arith.constant 0 : i32
    %c0_i32_1 = arith.constant 0 : i32
    return %arg0, %c0_i32, %c0_i32_0 : i32, i32, i32
  }
  func.func @transform_1(%arg0: i32) -> (i32, i32) {
    %c0_i32 = arith.constant 0 : i32
    %c0_i32_0 = arith.constant 0 : i32
    %c0_i32_1 = arith.constant 0 : i32
    return %c0_i32, %c0_i32_0 : i32, i32
  }
  func.func @transform_2(%arg0: i32) -> (i32, i32) {
    %c0_i32 = arith.constant 0 : i32
    %c0_i32_0 = arith.constant 0 : i32
    %c0_i32_1 = arith.constant 0 : i32
    return %c0_i32, %c0_i32_0 : i32, i32
  }
  func.func @transform_3(%arg0: i32) -> (i32, i32) {
    %c0_i32 = arith.constant 0 : i32
    %c0_i32_0 = arith.constant 0 : i32
    %c0_i32_1 = arith.constant 0 : i32
    return %c0_i32, %c0_i32_0 : i32, i32
  }
  func.func @transform_4(%arg0: i32) -> (i32, i32) {
    %c0_i32 = arith.constant 0 : i32
    %c0_i32_0 = arith.constant 0 : i32
    %c0_i32_1 = arith.constant 0 : i32
    return %c0_i32, %c0_i32_0 : i32, i32
  }
  func.func @transform_5(%arg0: i32) -> (i32, i32, i32) {
    %c0_i32 = arith.constant 0 : i32
    %c0_i32_0 = arith.constant 0 : i32
    %c0_i32_1 = arith.constant 0 : i32
    return %arg0, %c0_i32, %c0_i32_0 : i32, i32, i32
  }
}

</mosaic_0001>

<llo_original>
// kernel: tpu_custom_call.1
$region0: #{tpu_custom_call.1}
  #allocation0 [shape = 'u32[]', space=smem, size = 0x4, offset = 0x4, fixed_abs, tag = 'smem constant byte address 0x4 - core index']
  #allocation1 [shape = 'u32[144,128]{1,0:T(1,128)}', space=vmem, size = 0x12000, scoped, tag = 'internal scratch']
  #allocation2 [shape = 'bf16[2,8,384]{2,1,0:T(8,128)(2,1)}', space=vmem, size = 0x3000, scoped, tag = 'scratch operand']
  %s0 = inlined_call_operand.hbm [shape: f32[2,8,384], index: 0, kind: input, shape index: {}]
  %s1 = inlined_call_operand.hbm [shape: bf16[384,1152], index: 1, kind: input, shape index: {}]
  %s2 = inlined_call_operand.hbm [shape: bf16[384,384], index: 2, kind: input, shape index: {}]
  %s3 = inlined_call_operand.vmem [shape: f32[1,384], index: 3, kind: input, shape index: {}]
  %s4 = inlined_call_operand.hbm [shape: f32[8,8], index: 4, kind: input, shape index: {}]
  %s5 = inlined_call_operand.hbm [shape: f32[2,8,384], index: 5, kind: output, shape index: {}]
  %s6 = sld [smem:[#allocation0]]
  $region46: #{tpu_custom_call.1} parent=0
    _
  %s8 = ssub.s32 1, %s6
  %s9 = scalar_select 0, %s8, %s6
  $region1: #{tpu_custom_call.1} parent=0
    #allocation3 [shape = 'u8[24576]{0}', space=vmem, size = 0x6000, scoped, tag = 'input window, operand 0, single buffered']
    #allocation4 [shape = 's32[1]{0}', space=sflag, size = 0x4, scoped, tag = 'scoped memory for tpu_custom_call.1']
    #allocation5 [shape = 's32[1]{0}', space=sflag, size = 0x4, scoped, tag = 'scoped memory for tpu_custom_call.1']
    #allocation6 [shape = 'u8[884736]{0}', space=vmem, size = 0xd8000, scoped, tag = 'input window, operand 1, single buffered']
    #allocation7 [shape = 's32[1]{0}', space=sflag, size = 0x4, scoped, tag = 'scoped memory for tpu_custom_call.1']
    #allocation8 [shape = 'u8[294912]{0}', space=vmem, size = 0x48000, scoped, tag = 'input window, operand 2, single buffered']
    #allocation9 [shape = 'u8[4096]{0}', space=vmem, size = 0x1000, scoped, tag = 'input window, operand 4, single buffered']
    #allocation10 [shape = 's32[1]{0}', space=sflag, size = 0x4, scoped, tag = 'scoped memory for tpu_custom_call.1']
    #allocation11 [shape = 'u8[24576]{0}', space=vmem, size = 0x6000, scoped, tag = 'output window, operand 0, single buffered']
    %10 = vsyncpa [#allocation4], 0
    %11 = vsyncpa [#allocation7], 0
    %12 = vsyncpa [#allocation10], 0
    %13 = vsyncpa [#allocation5], 0
    // Predicated region
    $region2: #{tpu_custom_call.1} parent=1 // pred_check
      _
    $region3: #{tpu_custom_call.1} parent=1 // pred_check_branch
      %15 = sbr.rel (0) target = $region5
    $region4: #{tpu_custom_call.1} parent=1 // pred_region
      %s17 = ssub.s32 768, 768
      %18 = vsyncadd [#allocation4], %s17
      %s19 = sshll.u32 [#allocation3], 4
      %s20 = int_to_ptr.vmem [resolvable:$true] %s19
      %25 = dma.hbm_to_vmem [thread:$0]  %s0, 768, %s20, [#allocation4], 384, 384, 24
    $region5: #{tpu_custom_call.1} parent=1 // pred_fallthru
      _
    // Predicated region
    $region6: #{tpu_custom_call.1} parent=1 // pred_check
      _
    $region7: #{tpu_custom_call.1} parent=1 // pred_check_branch
      %27 = sbr.rel (0) target = $region9
    $region8: #{tpu_custom_call.1} parent=1 // pred_region
      %s29 = ssub.s32 27648, 27648
      %30 = vsyncadd [#allocation7], %s29
      %s31 = sshll.u32 [#allocation6], 4
      %s32 = int_to_ptr.vmem [resolvable:$true] %s31
      %37 = dma.hbm_to_vmem [thread:$0]  %s1, 27648, %s32, [#allocation7], 576, 576, 36
    $region9: #{tpu_custom_call.1} parent=1 // pred_fallthru
      _
    // Predicated region
    $region10: #{tpu_custom_call.1} parent=1 // pred_check
      _
    $region11: #{tpu_custom_call.1} parent=1 // pred_check_branch
      %39 = sbr.rel (0) target = $region13
    $region12: #{tpu_custom_call.1} parent=1 // pred_region
      %s41 = ssub.s32 9216, 9216
      %42 = vsyncadd [#allocation7], %s41
      %s43 = sshll.u32 [#allocation8], 4
      %s44 = int_to_ptr.vmem [resolvable:$true] %s43
      %49 = dma.hbm_to_vmem [thread:$0]  %s2, 9216, %s44, [#allocation7], 192, 192, 12
    $region13: #{tpu_custom_call.1} parent=1 // pred_fallthru
      _
    // Predicated region
    $region14: #{tpu_custom_call.1} parent=1 // pred_check
      _
    $region15: #{tpu_custom_call.1} parent=1 // pred_check_branch
      %51 = sbr.rel (0) target = $region17
    $region16: #{tpu_custom_call.1} parent=1 // pred_region
      _
    $region17: #{tpu_custom_call.1} parent=1 // pred_fallthru
      _
    // Predicated region
    $region18: #{tpu_custom_call.1} parent=1 // pred_check
      _
    $region19: #{tpu_custom_call.1} parent=1 // pred_check_branch
      %53 = sbr.rel (0) target = $region21
    $region20: #{tpu_custom_call.1} parent=1 // pred_region
      %s55 = ssub.s32 128, 128
      %56 = vsyncadd [#allocation10], %s55
      %s58 = sshll.u32 [#allocation9], 4
      %s59 = int_to_ptr.vmem [resolvable:$true] %s58
      %61 = dma.hbm_to_vmem [thread:$0]  %s4, 128, %s59, [#allocation10]
    $region21: #{tpu_custom_call.1} parent=1 // pred_fallthru
      _
    // Predicated region
    $region22: #{tpu_custom_call.1} parent=1 // pred_check
      _
    $region23: #{tpu_custom_call.1} parent=1 // pred_check_branch
      %63 = sbr.rel (0) target = $region25
    $region24: #{tpu_custom_call.1} parent=1 // pred_region
      %64 = dma.done [#allocation4], 768
    $region25: #{tpu_custom_call.1} parent=1 // pred_fallthru
      _
    // Predicated region
    $region26: #{tpu_custom_call.1} parent=1 // pred_check
      _
    $region27: #{tpu_custom_call.1} parent=1 // pred_check_branch
      %66 = sbr.rel (0) target = $region29
    $region28: #{tpu_custom_call.1} parent=1 // pred_region
      %67 = dma.done [#allocation7], 27648
    $region29: #{tpu_custom_call.1} parent=1 // pred_fallthru
      _
    // Predicated region
    $region30: #{tpu_custom_call.1} parent=1 // pred_check
      _
    $region31: #{tpu_custom_call.1} parent=1 // pred_check_branch
      %69 = sbr.rel (0) target = $region33
    $region32: #{tpu_custom_call.1} parent=1 // pred_region
      %70 = dma.done [#allocation7], 9216
    $region33: #{tpu_custom_call.1} parent=1 // pred_fallthru
      _
    // Predicated region
    $region34: #{tpu_custom_call.1} parent=1 // pred_check
      _
    $region35: #{tpu_custom_call.1} parent=1 // pred_check_branch
      %72 = sbr.rel (0) target = $region37
    $region36: #{tpu_custom_call.1} parent=1 // pred_region
      %73 = dma.done [#allocation10], 128
    $region37: #{tpu_custom_call.1} parent=1 // pred_fallthru
      _
    %v75 = vld [vmem:[#allocation3] sm:$0xff]
    %v76 = vld [vmem:[#allocation3 + $0x8] sm:$0xff]
    %v77 = vld [vmem:[#allocation3 + $0x10] sm:$0xff]
    %v78 = vld [vmem:[#allocation3 + $0x18] sm:$0xff]
    %v79 = vld [vmem:[#allocation3 + $0x20] sm:$0xff]
    %v80 = vld [vmem:[#allocation3 + $0x28] sm:$0xff]
    %v81 = vpack.c.bf16 %v78, %v75
    %v82 = vpack.c.bf16 %v79, %v76
    %v83 = vpack.c.bf16 %v80, %v77
    %v84 = vld [vmem:[#allocation6] sm:$0xff]
    %v85 = vld [vmem:[#allocation6 + $0x8] sm:$0xff]
    %v86 = vld [vmem:[#allocation6 + $0x10] sm:$0xff]
    %v87 = vld [vmem:[#allocation6 + $0x18] sm:$0xff]
    %v88 = vld [vmem:[#allocation6 + $0x20] sm:$0xf]
    %v89 = vld [vmem:[#allocation6 + $0x24] sm:$0xff]
    %v90 = vld [vmem:[#allocation6 + $0x2c] sm:$0xff]
    %v91 = vld [vmem:[#allocation6 + $0x34] sm:$0xff]
    %v92 = vld [vmem:[#allocation6 + $0x3c] sm:$0xff]
    %v93 = vld [vmem:[#allocation6 + $0x44] sm:$0xf]
    %v94 = vld [vmem:[#allocation6 + $0x48] sm:$0xff]
    %v95 = vld [vmem:[#allocation6 + $0x50] sm:$0xff]
    %v96 = vld [vmem:[#allocation6 + $0x58] sm:$0xff]
    %v97 = vld [vmem:[#allocation6 + $0x60] sm:$0xff]
    %v98 = vld [vmem:[#allocation6 + $0x68] sm:$0xf]
    %v99 = vld [vmem:[#allocation6 + $0x6c] sm:$0xff]
    %v100 = vld [vmem:[#allocation6 + $0x74] sm:$0xff]
    %v101 = vld [vmem:[#allocation6 + $0x7c] sm:$0xff]
    %v102 = vld [vmem:[#allocation6 + $0x84] sm:$0xff]
    %v103 = vld [vmem:[#allocation6 + $0x8c] sm:$0xf]
    %v104 = vld [vmem:[#allocation6 + $0x90] sm:$0xff]
    %v105 = vld [vmem:[#allocation6 + $0x98] sm:$0xff]
    %v106 = vld [vmem:[#allocation6 + $0xa0] sm:$0xff]
    %v107 = vld [vmem:[#allocation6 + $0xa8] sm:$0xff]
    %v108 = vld [vmem:[#allocation6 + $0xb0] sm:$0xf]
    %v109 = vld [vmem:[#allocation6 + $0xb4] sm:$0xff]
    %v110 = vld [vmem:[#allocation6 + $0xbc] sm:$0xff]
    %v111 = vld [vmem:[#allocation6 + $0xc4] sm:$0xff]
    %v112 = vld [vmem:[#allocation6 + $0xcc] sm:$0xff]
    %v113 = vld [vmem:[#allocation6 + $0xd4] sm:$0xf]
    %v114 = vld [vmem:[#allocation6 + $0xd8] sm:$0xff]
    %v115 = vld [vmem:[#allocation6 + $0xe0] sm:$0xff]
    %v116 = vld [vmem:[#allocation6 + $0xe8] sm:$0xff]
    %v117 = vld [vmem:[#allocation6 + $0xf0] sm:$0xff]
    %v118 = vld [vmem:[#allocation6 + $0xf8] sm:$0xf]
    %v119 = vld [vmem:[#allocation6 + $0xfc] sm:$0xff]
    %v120 = vld [vmem:[#allocation6 + $0x104] sm:$0xff]
    %v121 = vld [vmem:[#allocation6 + $0x10c] sm:$0xff]
    %v122 = vld [vmem:[#allocation6 + $0x114] sm:$0xff]
    %v123 = vld [vmem:[#allocation6 + $0x11c] sm:$0xf]
    %v124 = vld [vmem:[#allocation6 + $0x120] sm:$0xff]
    %v125 = vld [vmem:[#allocation6 + $0x128] sm:$0xff]
    %v126 = vld [vmem:[#allocation6 + $0x130] sm:$0xff]
    %v127 = vld [vmem:[#allocation6 + $0x138] sm:$0xff]
    %v128 = vld [vmem:[#allocation6 + $0x140] sm:$0xf]
    %v129 = vld [vmem:[#allocation6 + $0x144] sm:$0xff]
    %v130 = vld [vmem:[#allocation6 + $0x14c] sm:$0xff]
    %v131 = vld [vmem:[#allocation6 + $0x154] sm:$0xff]
    %v132 = vld [vmem:[#allocation6 + $0x15c] sm:$0xff]
    %v133 = vld [vmem:[#allocation6 + $0x164] sm:$0xf]
    %v134 = vld [vmem:[#allocation6 + $0x168] sm:$0xff]
    %v135 = vld [vmem:[#allocation6 + $0x170] sm:$0xff]
    %v136 = vld [vmem:[#allocation6 + $0x178] sm:$0xff]
    %v137 = vld [vmem:[#allocation6 + $0x180] sm:$0xff]
    %v138 = vld [vmem:[#allocation6 + $0x188] sm:$0xf]
    %v139 = vld [vmem:[#allocation6 + $0x18c] sm:$0xff]
    %v140 = vld [vmem:[#allocation6 + $0x194] sm:$0xff]
    %v141 = vld [vmem:[#allocation6 + $0x19c] sm:$0xff]
    %v142 = vld [vmem:[#allocation6 + $0x1a4] sm:$0xff]
    %v143 = vld [vmem:[#allocation6 + $0x1ac] sm:$0xf]
    %v144 = vld [vmem:[#allocation6 + $0x1b0] sm:$0xff]
    %v145 = vld [vmem:[#allocation6 + $0x1b8] sm:$0xff]
    %v146 = vld [vmem:[#allocation6 + $0x1c0] sm:$0xff]
    %v147 = vld [vmem:[#allocation6 + $0x1c8] sm:$0xff]
    %v148 = vld [vmem:[#allocation6 + $0x1d0] sm:$0xf]
    %v149 = vld [vmem:[#allocation6 + $0x1d4] sm:$0xff]
    %v150 = vld [vmem:[#allocation6 + $0x1dc] sm:$0xff]
    %v151 = vld [vmem:[#allocation6 + $0x1e4] sm:$0xff]
    %v152 = vld [vmem:[#allocation6 + $0x1ec] sm:$0xff]
    %v153 = vld [vmem:[#allocation6 + $0x1f4] sm:$0xf]
    %v154 = vld [vmem:[#allocation6 + $0x1f8] sm:$0xff]
    %v155 = vld [vmem:[#allocation6 + $0x200] sm:$0xff]
    %v156 = vld [vmem:[#allocation6 + $0x208] sm:$0xff]
    %v157 = vld [vmem:[#allocation6 + $0x210] sm:$0xff]
    %v158 = vld [vmem:[#allocation6 + $0x218] sm:$0xf]
    %v159 = vld [vmem:[#allocation6 + $0x21c] sm:$0xff]
    %v160 = vld [vmem:[#allocation6 + $0x224] sm:$0xff]
    %v161 = vld [vmem:[#allocation6 + $0x22c] sm:$0xff]
    %v162 = vld [vmem:[#allocation6 + $0x234] sm:$0xff]
    %v163 = vld [vmem:[#allocation6 + $0x23c] sm:$0xf]
    %v164 = vld [vmem:[#allocation6 + $0x240] sm:$0xff]
    %v165 = vld [vmem:[#allocation6 + $0x248] sm:$0xff]
    %v166 = vld [vmem:[#allocation6 + $0x250] sm:$0xff]
    %v167 = vld [vmem:[#allocation6 + $0x258] sm:$0xff]
    %v168 = vld [vmem:[#allocation6 + $0x260] sm:$0xf]
    %v169 = vld [vmem:[#allocation6 + $0x264] sm:$0xff]
    %v170 = vld [vmem:[#allocation6 + $0x26c] sm:$0xff]
    %v171 = vld [vmem:[#allocation6 + $0x274] sm:$0xff]
    %v172 = vld [vmem:[#allocation6 + $0x27c] sm:$0xff]
    %v173 = vld [vmem:[#allocation6 + $0x284] sm:$0xf]
    %v174 = vld [vmem:[#allocation6 + $0x288] sm:$0xff]
    %v175 = vld [vmem:[#allocation6 + $0x290] sm:$0xff]
    %v176 = vld [vmem:[#allocation6 + $0x298] sm:$0xff]
    %v177 = vld [vmem:[#allocation6 + $0x2a0] sm:$0xff]
    %v178 = vld [vmem:[#allocation6 + $0x2a8] sm:$0xf]
    %v179 = vld [vmem:[#allocation6 + $0x2ac] sm:$0xff]
    %v180 = vld [vmem:[#allocation6 + $0x2b4] sm:$0xff]
    %v181 = vld [vmem:[#allocation6 + $0x2bc] sm:$0xff]
    %v182 = vld [vmem:[#allocation6 + $0x2c4] sm:$0xff]
    %v183 = vld [vmem:[#allocation6 + $0x2cc] sm:$0xf]
    %v184 = vld [vmem:[#allocation6 + $0x2d0] sm:$0xff]
    %v185 = vld [vmem:[#allocation6 + $0x2d8] sm:$0xff]
    %v186 = vld [vmem:[#allocation6 + $0x2e0] sm:$0xff]
    %v187 = vld [vmem:[#allocation6 + $0x2e8] sm:$0xff]
    %v188 = vld [vmem:[#allocation6 + $0x2f0] sm:$0xf]
    %v189 = vld [vmem:[#allocation6 + $0x2f4] sm:$0xff]
    %v190 = vld [vmem:[#allocation6 + $0x2fc] sm:$0xff]
    %v191 = vld [vmem:[#allocation6 + $0x304] sm:$0xff]
    %v192 = vld [vmem:[#allocation6 + $0x30c] sm:$0xff]
    %v193 = vld [vmem:[#allocation6 + $0x314] sm:$0xf]
    %v194 = vld [vmem:[#allocation6 + $0x318] sm:$0xff]
    %v195 = vld [vmem:[#allocation6 + $0x320] sm:$0xff]
    %v196 = vld [vmem:[#allocation6 + $0x328] sm:$0xff]
    %v197 = vld [vmem:[#allocation6 + $0x330] sm:$0xff]
    %v198 = vld [vmem:[#allocation6 + $0x338] sm:$0xf]
    %v199 = vld [vmem:[#allocation6 + $0x33c] sm:$0xff]
    %v200 = vld [vmem:[#allocation6 + $0x344] sm:$0xff]
    %v201 = vld [vmem:[#allocation6 + $0x34c] sm:$0xff]
    %v202 = vld [vmem:[#allocation6 + $0x354] sm:$0xff]
    %v203 = vld [vmem:[#allocation6 + $0x35c] sm:$0xf]
    %v204 = vld [vmem:[#allocation6 + $0x360] sm:$0xff]
    %v205 = vld [vmem:[#allocation6 + $0x368] sm:$0xff]
    %v206 = vld [vmem:[#allocation6 + $0x370] sm:$0xff]
    %v207 = vld [vmem:[#allocation6 + $0x378] sm:$0xff]
    %v208 = vld [vmem:[#allocation6 + $0x380] sm:$0xf]
    %v209 = vld [vmem:[#allocation6 + $0x384] sm:$0xff]
    %v210 = vld [vmem:[#allocation6 + $0x38c] sm:$0xff]
    %v211 = vld [vmem:[#allocation6 + $0x394] sm:$0xff]
    %v212 = vld [vmem:[#allocation6 + $0x39c] sm:$0xff]
    %v213 = vld [vmem:[#allocation6 + $0x3a4] sm:$0xf]
    %v214 = vld [vmem:[#allocation6 + $0x3a8] sm:$0xff]
    %v215 = vld [vmem:[#allocation6 + $0x3b0] sm:$0xff]
    %v216 = vld [vmem:[#allocation6 + $0x3b8] sm:$0xff]
    %v217 = vld [vmem:[#allocation6 + $0x3c0] sm:$0xff]
    %v218 = vld [vmem:[#allocation6 + $0x3c8] sm:$0xf]
    %v219 = vld [vmem:[#allocation6 + $0x3cc] sm:$0xff]
    %v220 = vld [vmem:[#allocation6 + $0x3d4] sm:$0xff]
    %v221 = vld [vmem:[#allocation6 + $0x3dc] sm:$0xff]
    %v222 = vld [vmem:[#allocation6 + $0x3e4] sm:$0xff]
    %v223 = vld [vmem:[#allocation6 + $0x3ec] sm:$0xf]
    %v224 = vld [vmem:[#allocation6 + $0x3f0] sm:$0xff]
    %v225 = vld [vmem:[#allocation6 + $0x3f8] sm:$0xff]
    %v226 = vld [vmem:[#allocation6 + $0x400] sm:$0xff]
    %v227 = vld [vmem:[#allocation6 + $0x408] sm:$0xff]
    %v228 = vld [vmem:[#allocation6 + $0x410] sm:$0xf]
    %v229 = vld [vmem:[#allocation6 + $0x414] sm:$0xff]
    %v230 = vld [vmem:[#allocation6 + $0x41c] sm:$0xff]
    %v231 = vld [vmem:[#allocation6 + $0x424] sm:$0xff]
    %v232 = vld [vmem:[#allocation6 + $0x42c] sm:$0xff]
    %v233 = vld [vmem:[#allocation6 + $0x434] sm:$0xf]
    %v234 = vld [vmem:[#allocation6 + $0x438] sm:$0xff]
    %v235 = vld [vmem:[#allocation6 + $0x440] sm:$0xff]
    %v236 = vld [vmem:[#allocation6 + $0x448] sm:$0xff]
    %v237 = vld [vmem:[#allocation6 + $0x450] sm:$0xff]
    %v238 = vld [vmem:[#allocation6 + $0x458] sm:$0xf]
    %v239 = vld [vmem:[#allocation6 + $0x45c] sm:$0xff]
    %v240 = vld [vmem:[#allocation6 + $0x464] sm:$0xff]
    %v241 = vld [vmem:[#allocation6 + $0x46c] sm:$0xff]
    %v242 = vld [vmem:[#allocation6 + $0x474] sm:$0xff]
    %v243 = vld [vmem:[#allocation6 + $0x47c] sm:$0xf]
    %v244 = vld [vmem:[#allocation6 + $0x480] sm:$0xff]
    %v245 = vld [vmem:[#allocation6 + $0x488] sm:$0xff]
    %v246 = vld [vmem:[#allocation6 + $0x490] sm:$0xff]
    %v247 = vld [vmem:[#allocation6 + $0x498] sm:$0xff]
    %v248 = vld [vmem:[#allocation6 + $0x4a0] sm:$0xf]
    %v249 = vld [vmem:[#allocation6 + $0x4a4] sm:$0xff]
    %v250 = vld [vmem:[#allocation6 + $0x4ac] sm:$0xff]
    %v251 = vld [vmem:[#allocation6 + $0x4b4] sm:$0xff]
    %v252 = vld [vmem:[#allocation6 + $0x4bc] sm:$0xff]
    %v253 = vld [vmem:[#allocation6 + $0x4c4] sm:$0xf]
    %v254 = vld [vmem:[#allocation6 + $0x4c8] sm:$0xff]
    %v255 = vld [vmem:[#allocation6 + $0x4d0] sm:$0xff]
    %v256 = vld [vmem:[#allocation6 + $0x4d8] sm:$0xff]
    %v257 = vld [vmem:[#allocation6 + $0x4e0] sm:$0xff]
    %v258 = vld [vmem:[#allocation6 + $0x4e8] sm:$0xf]
    %v259 = vld [vmem:[#allocation6 + $0x4ec] sm:$0xff]
    %v260 = vld [vmem:[#allocation6 + $0x4f4] sm:$0xff]
    %v261 = vld [vmem:[#allocation6 + $0x4fc] sm:$0xff]
    %v262 = vld [vmem:[#allocation6 + $0x504] sm:$0xff]
    %v263 = vld [vmem:[#allocation6 + $0x50c] sm:$0xf]
    %v264 = vld [vmem:[#allocation6 + $0x510] sm:$0xff]
    %v265 = vld [vmem:[#allocation6 + $0x518] sm:$0xff]
    %v266 = vld [vmem:[#allocation6 + $0x520] sm:$0xff]
    %v267 = vld [vmem:[#allocation6 + $0x528] sm:$0xff]
    %v268 = vld [vmem:[#allocation6 + $0x530] sm:$0xf]
    %v269 = vld [vmem:[#allocation6 + $0x534] sm:$0xff]
    %v270 = vld [vmem:[#allocation6 + $0x53c] sm:$0xff]
    %v271 = vld [vmem:[#allocation6 + $0x544] sm:$0xff]
    %v272 = vld [vmem:[#allocation6 + $0x54c] sm:$0xff]
    %v273 = vld [vmem:[#allocation6 + $0x554] sm:$0xf]
    %v274 = vld [vmem:[#allocation6 + $0x558] sm:$0xff]
    %v275 = vld [vmem:[#allocation6 + $0x560] sm:$0xff]
    %v276 = vld [vmem:[#allocation6 + $0x568] sm:$0xff]
    %v277 = vld [vmem:[#allocation6 + $0x570] sm:$0xff]
    %v278 = vld [vmem:[#allocation6 + $0x578] sm:$0xf]
    %v279 = vld [vmem:[#allocation6 + $0x57c] sm:$0xff]
    %v280 = vld [vmem:[#allocation6 + $0x584] sm:$0xff]
    %v281 = vld [vmem:[#allocation6 + $0x58c] sm:$0xff]
    %v282 = vld [vmem:[#allocation6 + $0x594] sm:$0xff]
    %v283 = vld [vmem:[#allocation6 + $0x59c] sm:$0xf]
    %v284 = vld [vmem:[#allocation6 + $0x5a0] sm:$0xff]
    %v285 = vld [vmem:[#allocation6 + $0x5a8] sm:$0xff]
    %v286 = vld [vmem:[#allocation6 + $0x5b0] sm:$0xff]
    %v287 = vld [vmem:[#allocation6 + $0x5b8] sm:$0xff]
    %v288 = vld [vmem:[#allocation6 + $0x5c0] sm:$0xf]
    %v289 = vld [vmem:[#allocation6 + $0x5c4] sm:$0xff]
    %v290 = vld [vmem:[#allocation6 + $0x5cc] sm:$0xff]
    %v291 = vld [vmem:[#allocation6 + $0x5d4] sm:$0xff]
    %v292 = vld [vmem:[#allocation6 + $0x5dc] sm:$0xff]
    %v293 = vld [vmem:[#allocation6 + $0x5e4] sm:$0xf]
    %v294 = vld [vmem:[#allocation6 + $0x5e8] sm:$0xff]
    %v295 = vld [vmem:[#allocation6 + $0x5f0] sm:$0xff]
    %v296 = vld [vmem:[#allocation6 + $0x5f8] sm:$0xff]
    %v297 = vld [vmem:[#allocation6 + $0x600] sm:$0xff]
    %v298 = vld [vmem:[#allocation6 + $0x608] sm:$0xf]
    %v299 = vld [vmem:[#allocation6 + $0x60c] sm:$0xff]
    %v300 = vld [vmem:[#allocation6 + $0x614] sm:$0xff]
    %v301 = vld [vmem:[#allocation6 + $0x61c] sm:$0xff]
    %v302 = vld [vmem:[#allocation6 + $0x624] sm:$0xff]
    %v303 = vld [vmem:[#allocation6 + $0x62c] sm:$0xf]
    %v304 = vld [vmem:[#allocation6 + $0x630] sm:$0xff]
    %v305 = vld [vmem:[#allocation6 + $0x638] sm:$0xff]
    %v306 = vld [vmem:[#allocation6 + $0x640] sm:$0xff]
    %v307 = vld [vmem:[#allocation6 + $0x648] sm:$0xff]
    %v308 = vld [vmem:[#allocation6 + $0x650] sm:$0xf]
    %v309 = vld [vmem:[#allocation6 + $0x654] sm:$0xff]
    %v310 = vld [vmem:[#allocation6 + $0x65c] sm:$0xff]
    %v311 = vld [vmem:[#allocation6 + $0x664] sm:$0xff]
    %v312 = vld [vmem:[#allocation6 + $0x66c] sm:$0xff]
    %v313 = vld [vmem:[#allocation6 + $0x674] sm:$0xf]
    %v314 = vld [vmem:[#allocation6 + $0x678] sm:$0xff]
    %v315 = vld [vmem:[#allocation6 + $0x680] sm:$0xff]
    %v316 = vld [vmem:[#allocation6 + $0x688] sm:$0xff]
    %v317 = vld [vmem:[#allocation6 + $0x690] sm:$0xff]
    %v318 = vld [vmem:[#allocation6 + $0x698] sm:$0xf]
    %v319 = vld [vmem:[#allocation6 + $0x69c] sm:$0xff]
    %v320 = vld [vmem:[#allocation6 + $0x6a4] sm:$0xff]
    %v321 = vld [vmem:[#allocation6 + $0x6ac] sm:$0xff]
    %v322 = vld [vmem:[#allocation6 + $0x6b4] sm:$0xff]
    %v323 = vld [vmem:[#allocation6 + $0x6bc] sm:$0xf]
    %v564 = vunpack.c.l.b16 %v84
    %v565 = vunpack.c.h.b16 %v84
    %v566 = vunpack.c.l.b16 %v85
    %v567 = vunpack.c.h.b16 %v85
    %v568 = vunpack.c.l.b16 %v86
    %v569 = vunpack.c.h.b16 %v86
    %v570 = vunpack.c.l.b16 %v87
    %v571 = vunpack.c.h.b16 %v87
    %v572 = vunpack.c.l.b16 %v88
    %v573 = vunpack.c.l.b16 %v89
    %v574 = vunpack.c.h.b16 %v89
    %v575 = vunpack.c.l.b16 %v90
    %v576 = vunpack.c.h.b16 %v90
    %v577 = vunpack.c.l.b16 %v91
    %v578 = vunpack.c.h.b16 %v91
    %v579 = vunpack.c.l.b16 %v92
    %v580 = vunpack.c.h.b16 %v92
    %v581 = vunpack.c.l.b16 %v93
    %v582 = vunpack.c.l.b16 %v94
    %v583 = vunpack.c.h.b16 %v94
    %v584 = vunpack.c.l.b16 %v95
    %v585 = vunpack.c.h.b16 %v95
    %v586 = vunpack.c.l.b16 %v96
    %v587 = vunpack.c.h.b16 %v96
    %v588 = vunpack.c.l.b16 %v97
    %v589 = vunpack.c.h.b16 %v97
    %v590 = vunpack.c.l.b16 %v98
    %v591 = vunpack.c.l.b16 %v99
    %v592 = vunpack.c.h.b16 %v99
    %v593 = vunpack.c.l.b16 %v100
    %v594 = vunpack.c.h.b16 %v100
    %v595 = vunpack.c.l.b16 %v101
    %v596 = vunpack.c.h.b16 %v101
    %v597 = vunpack.c.l.b16 %v102
    %v598 = vunpack.c.h.b16 %v102
    %v599 = vunpack.c.l.b16 %v103
    %v600 = vunpack.c.l.b16 %v104
    %v601 = vunpack.c.h.b16 %v104
    %v602 = vunpack.c.l.b16 %v105
    %v603 = vunpack.c.h.b16 %v105
    %v604 = vunpack.c.l.b16 %v106
    %v605 = vunpack.c.h.b16 %v106
    %v606 = vunpack.c.l.b16 %v107
    %v607 = vunpack.c.h.b16 %v107
    %v608 = vunpack.c.l.b16 %v108
    %v609 = vunpack.c.l.b16 %v109
    %v610 = vunpack.c.h.b16 %v109
    %v611 = vunpack.c.l.b16 %v110
    %v612 = vunpack.c.h.b16 %v110
    %v613 = vunpack.c.l.b16 %v111
    %v614 = vunpack.c.h.b16 %v111
    %v615 = vunpack.c.l.b16 %v112
    %v616 = vunpack.c.h.b16 %v112
    %v617 = vunpack.c.l.b16 %v113
    %v618 = vunpack.c.l.b16 %v114
    %v619 = vunpack.c.h.b16 %v114
    %v620 = vunpack.c.l.b16 %v115
    %v621 = vunpack.c.h.b16 %v115
    %v622 = vunpack.c.l.b16 %v116
    %v623 = vunpack.c.h.b16 %v116
    %v624 = vunpack.c.l.b16 %v117
    %v625 = vunpack.c.h.b16 %v117
    %v626 = vunpack.c.l.b16 %v118
    %v627 = vunpack.c.l.b16 %v119
    %v628 = vunpack.c.h.b16 %v119
    %v629 = vunpack.c.l.b16 %v120
    %v630 = vunpack.c.h.b16 %v120
    %v631 = vunpack.c.l.b16 %v121
    %v632 = vunpack.c.h.b16 %v121
    %v633 = vunpack.c.l.b16 %v122
    %v634 = vunpack.c.h.b16 %v122
    %v635 = vunpack.c.l.b16 %v123
    %v636 = vunpack.c.l.b16 %v124
    %v637 = vunpack.c.h.b16 %v124
    %v638 = vunpack.c.l.b16 %v125
    %v639 = vunpack.c.h.b16 %v125
    %v640 = vunpack.c.l.b16 %v126
    %v641 = vunpack.c.h.b16 %v126
    %v642 = vunpack.c.l.b16 %v127
    %v643 = vunpack.c.h.b16 %v127
    %v644 = vunpack.c.l.b16 %v128
    %v645 = vunpack.c.l.b16 %v129
    %v646 = vunpack.c.h.b16 %v129
    %v647 = vunpack.c.l.b16 %v130
    %v648 = vunpack.c.h.b16 %v130
    %v649 = vunpack.c.l.b16 %v131
    %v650 = vunpack.c.h.b16 %v131
    %v651 = vunpack.c.l.b16 %v132
    %v652 = vunpack.c.h.b16 %v132
    %v653 = vunpack.c.l.b16 %v133
    %v654 = vunpack.c.l.b16 %v134
    %v655 = vunpack.c.h.b16 %v134
    %v656 = vunpack.c.l.b16 %v135
    %v657 = vunpack.c.h.b16 %v135
    %v658 = vunpack.c.l.b16 %v136
    %v659 = vunpack.c.h.b16 %v136
    %v660 = vunpack.c.l.b16 %v137
    %v661 = vunpack.c.h.b16 %v137
    %v662 = vunpack.c.l.b16 %v138
    %v663 = vunpack.c.l.b16 %v139
    %v664 = vunpack.c.h.b16 %v139
    %v665 = vunpack.c.l.b16 %v140
    %v666 = vunpack.c.h.b16 %v140
    %v667 = vunpack.c.l.b16 %v141
    %v668 = vunpack.c.h.b16 %v141
    %v669 = vunpack.c.l.b16 %v142
    %v670 = vunpack.c.h.b16 %v142
    %v671 = vunpack.c.l.b16 %v143
    %v672 = vunpack.c.l.b16 %v144
    %v673 = vunpack.c.h.b16 %v144
    %v674 = vunpack.c.l.b16 %v145
    %v675 = vunpack.c.h.b16 %v145
    %v676 = vunpack.c.l.b16 %v146
    %v677 = vunpack.c.h.b16 %v146
    %v678 = vunpack.c.l.b16 %v147
    %v679 = vunpack.c.h.b16 %v147
    %v680 = vunpack.c.l.b16 %v148
    %v681 = vunpack.c.l.b16 %v149
    %v682 = vunpack.c.h.b16 %v149
    %v683 = vunpack.c.l.b16 %v150
    %v684 = vunpack.c.h.b16 %v150
    %v685 = vunpack.c.l.b16 %v151
    %v686 = vunpack.c.h.b16 %v151
    %v687 = vunpack.c.l.b16 %v152
    %v688 = vunpack.c.h.b16 %v152
    %v689 = vunpack.c.l.b16 %v153
    %v690 = vunpack.c.l.b16 %v154
    %v691 = vunpack.c.h.b16 %v154
    %v692 = vunpack.c.l.b16 %v155
    %v693 = vunpack.c.h.b16 %v155
    %v694 = vunpack.c.l.b16 %v156
    %v695 = vunpack.c.h.b16 %v156
    %v696 = vunpack.c.l.b16 %v157
    %v697 = vunpack.c.h.b16 %v157
    %v698 = vunpack.c.l.b16 %v158
    %v699 = vunpack.c.l.b16 %v159
    %v700 = vunpack.c.h.b16 %v159
    %v701 = vunpack.c.l.b16 %v160
    %v702 = vunpack.c.h.b16 %v160
    %v703 = vunpack.c.l.b16 %v161
    %v704 = vunpack.c.h.b16 %v161
    %v705 = vunpack.c.l.b16 %v162
    %v706 = vunpack.c.h.b16 %v162
    %v707 = vunpack.c.l.b16 %v163
    %v708 = vunpack.c.l.b16 %v164
    %v709 = vunpack.c.h.b16 %v164
    %v710 = vunpack.c.l.b16 %v165
    %v711 = vunpack.c.h.b16 %v165
    %v712 = vunpack.c.l.b16 %v166
    %v713 = vunpack.c.h.b16 %v166
    %v714 = vunpack.c.l.b16 %v167
    %v715 = vunpack.c.h.b16 %v167
    %v716 = vunpack.c.l.b16 %v168
    %v717 = vunpack.c.l.b16 %v169
    %v718 = vunpack.c.h.b16 %v169
    %v719 = vunpack.c.l.b16 %v170
    %v720 = vunpack.c.h.b16 %v170
    %v721 = vunpack.c.l.b16 %v171
    %v722 = vunpack.c.h.b16 %v171
    %v723 = vunpack.c.l.b16 %v172
    %v724 = vunpack.c.h.b16 %v172
    %v725 = vunpack.c.l.b16 %v173
    %v726 = vunpack.c.l.b16 %v174
    %v727 = vunpack.c.h.b16 %v174
    %v728 = vunpack.c.l.b16 %v175
    %v729 = vunpack.c.h.b16 %v175
    %v730 = vunpack.c.l.b16 %v176
    %v731 = vunpack.c.h.b16 %v176
    %v732 = vunpack.c.l.b16 %v177
    %v733 = vunpack.c.h.b16 %v177
    %v734 = vunpack.c.l.b16 %v178
    %v735 = vunpack.c.l.b16 %v179
    %v736 = vunpack.c.h.b16 %v179
    %v737 = vunpack.c.l.b16 %v180
    %v738 = vunpack.c.h.b16 %v180
    %v739 = vunpack.c.l.b16 %v181
    %v740 = vunpack.c.h.b16 %v181
    %v741 = vunpack.c.l.b16 %v182
    %v742 = vunpack.c.h.b16 %v182
    %v743 = vunpack.c.l.b16 %v183
    %v744 = vunpack.c.l.b16 %v184
    %v745 = vunpack.c.h.b16 %v184
    %v746 = vunpack.c.l.b16 %v185
    %v747 = vunpack.c.h.b16 %v185
    %v748 = vunpack.c.l.b16 %v186
    %v749 = vunpack.c.h.b16 %v186
    %v750 = vunpack.c.l.b16 %v187
    %v751 = vunpack.c.h.b16 %v187
    %v752 = vunpack.c.l.b16 %v188
    %v753 = vunpack.c.l.b16 %v189
    %v754 = vunpack.c.h.b16 %v189
    %v755 = vunpack.c.l.b16 %v190
    %v756 = vunpack.c.h.b16 %v190
    %v757 = vunpack.c.l.b16 %v191
    %v758 = vunpack.c.h.b16 %v191
    %v759 = vunpack.c.l.b16 %v192
    %v760 = vunpack.c.h.b16 %v192
    %v761 = vunpack.c.l.b16 %v193
    %v762 = vunpack.c.l.b16 %v194
    %v763 = vunpack.c.h.b16 %v194
    %v764 = vunpack.c.l.b16 %v195
    %v765 = vunpack.c.h.b16 %v195
    %v766 = vunpack.c.l.b16 %v196
    %v767 = vunpack.c.h.b16 %v196
    %v768 = vunpack.c.l.b16 %v197
    %v769 = vunpack.c.h.b16 %v197
    %v770 = vunpack.c.l.b16 %v198
    %v771 = vunpack.c.l.b16 %v199
    %v772 = vunpack.c.h.b16 %v199
    %v773 = vunpack.c.l.b16 %v200
    %v774 = vunpack.c.h.b16 %v200
    %v775 = vunpack.c.l.b16 %v201
    %v776 = vunpack.c.h.b16 %v201
    %v777 = vunpack.c.l.b16 %v202
    %v778 = vunpack.c.h.b16 %v202
    %v779 = vunpack.c.l.b16 %v203
    %v780 = vunpack.c.l.b16 %v204
    %v781 = vunpack.c.h.b16 %v204
    %v782 = vunpack.c.l.b16 %v205
    %v783 = vunpack.c.h.b16 %v205
    %v784 = vunpack.c.l.b16 %v206
    %v785 = vunpack.c.h.b16 %v206
    %v786 = vunpack.c.l.b16 %v207
    %v787 = vunpack.c.h.b16 %v207
    %v788 = vunpack.c.l.b16 %v208
    %v789 = vunpack.c.l.b16 %v209
    %v790 = vunpack.c.h.b16 %v209
    %v791 = vunpack.c.l.b16 %v210
    %v792 = vunpack.c.h.b16 %v210
    %v793 = vunpack.c.l.b16 %v211
    %v794 = vunpack.c.h.b16 %v211
    %v795 = vunpack.c.l.b16 %v212
    %v796 = vunpack.c.h.b16 %v212
    %v797 = vunpack.c.l.b16 %v213
    %v798 = vunpack.c.l.b16 %v214
    %v799 = vunpack.c.h.b16 %v214
    %v800 = vunpack.c.l.b16 %v215
    %v801 = vunpack.c.h.b16 %v215
    %v802 = vunpack.c.l.b16 %v216
    %v803 = vunpack.c.h.b16 %v216
    %v804 = vunpack.c.l.b16 %v217
    %v805 = vunpack.c.h.b16 %v217
    %v806 = vunpack.c.l.b16 %v218
    %v807 = vunpack.c.l.b16 %v219
    %v808 = vunpack.c.h.b16 %v219
    %v809 = vunpack.c.l.b16 %v220
    %v810 = vunpack.c.h.b16 %v220
    %v811 = vunpack.c.l.b16 %v221
    %v812 = vunpack.c.h.b16 %v221
    %v813 = vunpack.c.l.b16 %v222
    %v814 = vunpack.c.h.b16 %v222
    %v815 = vunpack.c.l.b16 %v223
    %v816 = vunpack.c.l.b16 %v224
    %v817 = vunpack.c.h.b16 %v224
    %v818 = vunpack.c.l.b16 %v225
    %v819 = vunpack.c.h.b16 %v225
    %v820 = vunpack.c.l.b16 %v226
    %v821 = vunpack.c.h.b16 %v226
    %v822 = vunpack.c.l.b16 %v227
    %v823 = vunpack.c.h.b16 %v227
    %v824 = vunpack.c.l.b16 %v228
    %v825 = vunpack.c.l.b16 %v229
    %v826 = vunpack.c.h.b16 %v229
    %v827 = vunpack.c.l.b16 %v230
    %v828 = vunpack.c.h.b16 %v230
    %v829 = vunpack.c.l.b16 %v231
    %v830 = vunpack.c.h.b16 %v231
    %v831 = vunpack.c.l.b16 %v232
    %v832 = vunpack.c.h.b16 %v232
    %v833 = vunpack.c.l.b16 %v233
    %v834 = vunpack.c.l.b16 %v234
    %v835 = vunpack.c.h.b16 %v234
    %v836 = vunpack.c.l.b16 %v235
    %v837 = vunpack.c.h.b16 %v235
    %v838 = vunpack.c.l.b16 %v236
    %v839 = vunpack.c.h.b16 %v236
    %v840 = vunpack.c.l.b16 %v237
    %v841 = vunpack.c.h.b16 %v237
    %v842 = vunpack.c.l.b16 %v238
    %v843 = vunpack.c.l.b16 %v239
    %v844 = vunpack.c.h.b16 %v239
    %v845 = vunpack.c.l.b16 %v240
    %v846 = vunpack.c.h.b16 %v240
    %v847 = vunpack.c.l.b16 %v241
    %v848 = vunpack.c.h.b16 %v241
    %v849 = vunpack.c.l.b16 %v242
    %v850 = vunpack.c.h.b16 %v242
    %v851 = vunpack.c.l.b16 %v243
    %v852 = vunpack.c.l.b16 %v244
    %v853 = vunpack.c.h.b16 %v244
    %v854 = vunpack.c.l.b16 %v245
    %v855 = vunpack.c.h.b16 %v245
    %v856 = vunpack.c.l.b16 %v246
    %v857 = vunpack.c.h.b16 %v246
    %v858 = vunpack.c.l.b16 %v247
    %v859 = vunpack.c.h.b16 %v247
    %v860 = vunpack.c.l.b16 %v248
    %v861 = vunpack.c.l.b16 %v249
    %v862 = vunpack.c.h.b16 %v249
    %v863 = vunpack.c.l.b16 %v250
    %v864 = vunpack.c.h.b16 %v250
    %v865 = vunpack.c.l.b16 %v251
    %v866 = vunpack.c.h.b16 %v251
    %v867 = vunpack.c.l.b16 %v252
    %v868 = vunpack.c.h.b16 %v252
    %v869 = vunpack.c.l.b16 %v253
    %v870 = vunpack.c.l.b16 %v254
    %v871 = vunpack.c.h.b16 %v254
    %v872 = vunpack.c.l.b16 %v255
    %v873 = vunpack.c.h.b16 %v255
    %v874 = vunpack.c.l.b16 %v256
    %v875 = vunpack.c.h.b16 %v256
    %v876 = vunpack.c.l.b16 %v257
    %v877 = vunpack.c.h.b16 %v257
    %v878 = vunpack.c.l.b16 %v258
    %v879 = vunpack.c.l.b16 %v259
    %v880 = vunpack.c.h.b16 %v259
    %v881 = vunpack.c.l.b16 %v260
    %v882 = vunpack.c.h.b16 %v260
    %v883 = vunpack.c.l.b16 %v261
    %v884 = vunpack.c.h.b16 %v261
    %v885 = vunpack.c.l.b16 %v262
    %v886 = vunpack.c.h.b16 %v262
    %v887 = vunpack.c.l.b16 %v263
    %v888 = vunpack.c.l.b16 %v264
    %v889 = vunpack.c.h.b16 %v264
    %v890 = vunpack.c.l.b16 %v265
    %v891 = vunpack.c.h.b16 %v265
    %v892 = vunpack.c.l.b16 %v266
    %v893 = vunpack.c.h.b16 %v266
    %v894 = vunpack.c.l.b16 %v267
    %v895 = vunpack.c.h.b16 %v267
    %v896 = vunpack.c.l.b16 %v268
    %v897 = vunpack.c.l.b16 %v269
    %v898 = vunpack.c.h.b16 %v269
    %v899 = vunpack.c.l.b16 %v270
    %v900 = vunpack.c.h.b16 %v270
    %v901 = vunpack.c.l.b16 %v271
    %v902 = vunpack.c.h.b16 %v271
    %v903 = vunpack.c.l.b16 %v272
    %v904 = vunpack.c.h.b16 %v272
    %v905 = vunpack.c.l.b16 %v273
    %v906 = vunpack.c.l.b16 %v274
    %v907 = vunpack.c.h.b16 %v274
    %v908 = vunpack.c.l.b16 %v275
    %v909 = vunpack.c.h.b16 %v275
    %v910 = vunpack.c.l.b16 %v276
    %v911 = vunpack.c.h.b16 %v276
    %v912 = vunpack.c.l.b16 %v277
    %v913 = vunpack.c.h.b16 %v277
    %v914 = vunpack.c.l.b16 %v278
    %v915 = vunpack.c.l.b16 %v279
    %v916 = vunpack.c.h.b16 %v279
    %v917 = vunpack.c.l.b16 %v280
    %v918 = vunpack.c.h.b16 %v280
    %v919 = vunpack.c.l.b16 %v281
    %v920 = vunpack.c.h.b16 %v281
    %v921 = vunpack.c.l.b16 %v282
    %v922 = vunpack.c.h.b16 %v282
    %v923 = vunpack.c.l.b16 %v283
    %v924 = vunpack.c.l.b16 %v284
    %v925 = vunpack.c.h.b16 %v284
    %v926 = vunpack.c.l.b16 %v285
    %v927 = vunpack.c.h.b16 %v285
    %v928 = vunpack.c.l.b16 %v286
    %v929 = vunpack.c.h.b16 %v286
    %v930 = vunpack.c.l.b16 %v287
    %v931 = vunpack.c.h.b16 %v287
    %v932 = vunpack.c.l.b16 %v288
    %v933 = vunpack.c.l.b16 %v289
    %v934 = vunpack.c.h.b16 %v289
    %v935 = vunpack.c.l.b16 %v290
    %v936 = vunpack.c.h.b16 %v290
    %v937 = vunpack.c.l.b16 %v291
    %v938 = vunpack.c.h.b16 %v291
    %v939 = vunpack.c.l.b16 %v292
    %v940 = vunpack.c.h.b16 %v292
    %v941 = vunpack.c.l.b16 %v293
    %v942 = vunpack.c.l.b16 %v294
    %v943 = vunpack.c.h.b16 %v294
    %v944 = vunpack.c.l.b16 %v295
    %v945 = vunpack.c.h.b16 %v295
    %v946 = vunpack.c.l.b16 %v296
    %v947 = vunpack.c.h.b16 %v296
    %v948 = vunpack.c.l.b16 %v297
    %v949 = vunpack.c.h.b16 %v297
    %v950 = vunpack.c.l.b16 %v298
    %v951 = vunpack.c.l.b16 %v299
    %v952 = vunpack.c.h.b16 %v299
    %v953 = vunpack.c.l.b16 %v300
    %v954 = vunpack.c.h.b16 %v300
    %v955 = vunpack.c.l.b16 %v301
    %v956 = vunpack.c.h.b16 %v301
    %v957 = vunpack.c.l.b16 %v302
    %v958 = vunpack.c.h.b16 %v302
    %v959 = vunpack.c.l.b16 %v303
    %v960 = vunpack.c.l.b16 %v304
    %v961 = vunpack.c.h.b16 %v304
    %v962 = vunpack.c.l.b16 %v305
    %v963 = vunpack.c.h.b16 %v305
    %v964 = vunpack.c.l.b16 %v306
    %v965 = vunpack.c.h.b16 %v306
    %v966 = vunpack.c.l.b16 %v307
    %v967 = vunpack.c.h.b16 %v307
    %v968 = vunpack.c.l.b16 %v308
    %v969 = vunpack.c.l.b16 %v309
    %v970 = vunpack.c.h.b16 %v309
    %v971 = vunpack.c.l.b16 %v310
    %v972 = vunpack.c.h.b16 %v310
    %v973 = vunpack.c.l.b16 %v311
    %v974 = vunpack.c.h.b16 %v311
    %v975 = vunpack.c.l.b16 %v312
    %v976 = vunpack.c.h.b16 %v312
    %v977 = vunpack.c.l.b16 %v313
    %v978 = vunpack.c.l.b16 %v314
    %v979 = vunpack.c.h.b16 %v314
    %v980 = vunpack.c.l.b16 %v315
    %v981 = vunpack.c.h.b16 %v315
    %v982 = vunpack.c.l.b16 %v316
    %v983 = vunpack.c.h.b16 %v316
    %v984 = vunpack.c.l.b16 %v317
    %v985 = vunpack.c.h.b16 %v317
    %v986 = vunpack.c.l.b16 %v318
    %v987 = vunpack.c.l.b16 %v319
    %v988 = vunpack.c.h.b16 %v319
    %v989 = vunpack.c.l.b16 %v320
    %v990 = vunpack.c.h.b16 %v320
    %v991 = vunpack.c.l.b16 %v321
    %v992 = vunpack.c.h.b16 %v321
    %v993 = vunpack.c.l.b16 %v322
    %v994 = vunpack.c.h.b16 %v322
    %v995 = vunpack.c.l.b16 %v323
    %v996 = vpack.c.b16 %v573, %v564
    %v997 = vpack.c.b16 %v574, %v565
    %v998 = vpack.c.b16 %v575, %v566
    %v999 = vpack.c.b16 %v576, %v567
    %v1000 = vpack.c.b16 %v577, %v568
    %v1001 = vpack.c.b16 %v578, %v569
    %v1002 = vpack.c.b16 %v579, %v570
    %v1003 = vpack.c.b16 %v580, %v571
    %v1004 = vpack.c.b16 %v581, %v572
    %v1005 = vpack.c.b16 %v591, %v582
    %v1006 = vpack.c.b16 %v592, %v583
    %v1007 = vpack.c.b16 %v593, %v584
    %v1008 = vpack.c.b16 %v594, %v585
    %v1009 = vpack.c.b16 %v595, %v586
    %v1010 = vpack.c.b16 %v596, %v587
    %v1011 = vpack.c.b16 %v597, %v588
    %v1012 = vpack.c.b16 %v598, %v589
    %v1013 = vpack.c.b16 %v599, %v590
    %v1014 = vpack.c.b16 %v609, %v600
    %v1015 = vpack.c.b16 %v610, %v601
    %v1016 = vpack.c.b16 %v611, %v602
    %v1017 = vpack.c.b16 %v612, %v603
    %v1018 = vpack.c.b16 %v613, %v604
    %v1019 = vpack.c.b16 %v614, %v605
    %v1020 = vpack.c.b16 %v615, %v606
    %v1021 = vpack.c.b16 %v616, %v607
    %v1022 = vpack.c.b16 %v617, %v608
    %v1023 = vpack.c.b16 %v627, %v618
    %v1024 = vpack.c.b16 %v628, %v619
    %v1025 = vpack.c.b16 %v629, %v620
    %v1026 = vpack.c.b16 %v630, %v621
    %v1027 = vpack.c.b16 %v631, %v622
    %v1028 = vpack.c.b16 %v632, %v623
    %v1029 = vpack.c.b16 %v633, %v624
    %v1030 = vpack.c.b16 %v634, %v625
    %v1031 = vpack.c.b16 %v635, %v626
    %v1032 = vpack.c.b16 %v645, %v636
    %v1033 = vpack.c.b16 %v646, %v637
    %v1034 = vpack.c.b16 %v647, %v638
    %v1035 = vpack.c.b16 %v648, %v639
    %v1036 = vpack.c.b16 %v649, %v640
    %v1037 = vpack.c.b16 %v650, %v641
    %v1038 = vpack.c.b16 %v651, %v642
    %v1039 = vpack.c.b16 %v652, %v643
    %v1040 = vpack.c.b16 %v653, %v644
    %v1041 = vpack.c.b16 %v663, %v654
    %v1042 = vpack.c.b16 %v664, %v655
    %v1043 = vpack.c.b16 %v665, %v656
    %v1044 = vpack.c.b16 %v666, %v657
    %v1045 = vpack.c.b16 %v667, %v658
    %v1046 = vpack.c.b16 %v668, %v659
    %v1047 = vpack.c.b16 %v669, %v660
    %v1048 = vpack.c.b16 %v670, %v661
    %v1049 = vpack.c.b16 %v671, %v662
    %v1050 = vpack.c.b16 %v681, %v672
    %v1051 = vpack.c.b16 %v682, %v673
    %v1052 = vpack.c.b16 %v683, %v674
    %v1053 = vpack.c.b16 %v684, %v675
    %v1054 = vpack.c.b16 %v685, %v676
    %v1055 = vpack.c.b16 %v686, %v677
    %v1056 = vpack.c.b16 %v687, %v678
    %v1057 = vpack.c.b16 %v688, %v679
    %v1058 = vpack.c.b16 %v689, %v680
    %v1059 = vpack.c.b16 %v699, %v690
    %v1060 = vpack.c.b16 %v700, %v691
    %v1061 = vpack.c.b16 %v701, %v692
    %v1062 = vpack.c.b16 %v702, %v693
    %v1063 = vpack.c.b16 %v703, %v694
    %v1064 = vpack.c.b16 %v704, %v695
    %v1065 = vpack.c.b16 %v705, %v696
    %v1066 = vpack.c.b16 %v706, %v697
    %v1067 = vpack.c.b16 %v707, %v698
    %v1068 = vpack.c.b16 %v717, %v708
    %v1069 = vpack.c.b16 %v718, %v709
    %v1070 = vpack.c.b16 %v719, %v710
    %v1071 = vpack.c.b16 %v720, %v711
    %v1072 = vpack.c.b16 %v721, %v712
    %v1073 = vpack.c.b16 %v722, %v713
    %v1074 = vpack.c.b16 %v723, %v714
    %v1075 = vpack.c.b16 %v724, %v715
    %v1076 = vpack.c.b16 %v725, %v716
    %v1077 = vpack.c.b16 %v735, %v726
    %v1078 = vpack.c.b16 %v736, %v727
    %v1079 = vpack.c.b16 %v737, %v728
    %v1080 = vpack.c.b16 %v738, %v729
    %v1081 = vpack.c.b16 %v739, %v730
    %v1082 = vpack.c.b16 %v740, %v731
    %v1083 = vpack.c.b16 %v741, %v732
    %v1084 = vpack.c.b16 %v742, %v733
    %v1085 = vpack.c.b16 %v743, %v734
    %v1086 = vpack.c.b16 %v753, %v744
    %v1087 = vpack.c.b16 %v754, %v745
    %v1088 = vpack.c.b16 %v755, %v746
    %v1089 = vpack.c.b16 %v756, %v747
    %v1090 = vpack.c.b16 %v757, %v748
    %v1091 = vpack.c.b16 %v758, %v749
    %v1092 = vpack.c.b16 %v759, %v750
    %v1093 = vpack.c.b16 %v760, %v751
    %v1094 = vpack.c.b16 %v761, %v752
    %v1095 = vpack.c.b16 %v771, %v762
    %v1096 = vpack.c.b16 %v772, %v763
    %v1097 = vpack.c.b16 %v773, %v764
    %v1098 = vpack.c.b16 %v774, %v765
    %v1099 = vpack.c.b16 %v775, %v766
    %v1100 = vpack.c.b16 %v776, %v767
    %v1101 = vpack.c.b16 %v777, %v768
    %v1102 = vpack.c.b16 %v778, %v769
    %v1103 = vpack.c.b16 %v779, %v770
    %v1104 = vpack.c.b16 %v789, %v780
    %v1105 = vpack.c.b16 %v790, %v781
    %v1106 = vpack.c.b16 %v791, %v782
    %v1107 = vpack.c.b16 %v792, %v783
    %v1108 = vpack.c.b16 %v793, %v784
    %v1109 = vpack.c.b16 %v794, %v785
    %v1110 = vpack.c.b16 %v795, %v786
    %v1111 = vpack.c.b16 %v796, %v787
    %v1112 = vpack.c.b16 %v797, %v788
    %v1113 = vpack.c.b16 %v807, %v798
    %v1114 = vpack.c.b16 %v808, %v799
    %v1115 = vpack.c.b16 %v809, %v800
    %v1116 = vpack.c.b16 %v810, %v801
    %v1117 = vpack.c.b16 %v811, %v802
    %v1118 = vpack.c.b16 %v812, %v803
    %v1119 = vpack.c.b16 %v813, %v804
    %v1120 = vpack.c.b16 %v814, %v805
    %v1121 = vpack.c.b16 %v815, %v806
    %v1122 = vpack.c.b16 %v825, %v816
    %v1123 = vpack.c.b16 %v826, %v817
    %v1124 = vpack.c.b16 %v827, %v818
    %v1125 = vpack.c.b16 %v828, %v819
    %v1126 = vpack.c.b16 %v829, %v820
    %v1127 = vpack.c.b16 %v830, %v821
    %v1128 = vpack.c.b16 %v831, %v822
    %v1129 = vpack.c.b16 %v832, %v823
    %v1130 = vpack.c.b16 %v833, %v824
    %v1131 = vpack.c.b16 %v843, %v834
    %v1132 = vpack.c.b16 %v844, %v835
    %v1133 = vpack.c.b16 %v845, %v836
    %v1134 = vpack.c.b16 %v846, %v837
    %v1135 = vpack.c.b16 %v847, %v838
    %v1136 = vpack.c.b16 %v848, %v839
    %v1137 = vpack.c.b16 %v849, %v840
    %v1138 = vpack.c.b16 %v850, %v841
    %v1139 = vpack.c.b16 %v851, %v842
    %v1140 = vpack.c.b16 %v861, %v852
    %v1141 = vpack.c.b16 %v862, %v853
    %v1142 = vpack.c.b16 %v863, %v854
    %v1143 = vpack.c.b16 %v864, %v855
    %v1144 = vpack.c.b16 %v865, %v856
    %v1145 = vpack.c.b16 %v866, %v857
    %v1146 = vpack.c.b16 %v867, %v858
    %v1147 = vpack.c.b16 %v868, %v859
    %v1148 = vpack.c.b16 %v869, %v860
    %v1149 = vpack.c.b16 %v879, %v870
    %v1150 = vpack.c.b16 %v880, %v871
    %v1151 = vpack.c.b16 %v881, %v872
    %v1152 = vpack.c.b16 %v882, %v873
    %v1153 = vpack.c.b16 %v883, %v874
    %v1154 = vpack.c.b16 %v884, %v875
    %v1155 = vpack.c.b16 %v885, %v876
    %v1156 = vpack.c.b16 %v886, %v877
    %v1157 = vpack.c.b16 %v887, %v878
    %v1158 = vpack.c.b16 %v897, %v888
    %v1159 = vpack.c.b16 %v898, %v889
    %v1160 = vpack.c.b16 %v899, %v890
    %v1161 = vpack.c.b16 %v900, %v891
    %v1162 = vpack.c.b16 %v901, %v892
    %v1163 = vpack.c.b16 %v902, %v893
    %v1164 = vpack.c.b16 %v903, %v894
    %v1165 = vpack.c.b16 %v904, %v895
    %v1166 = vpack.c.b16 %v905, %v896
    %v1167 = vpack.c.b16 %v915, %v906
    %v1168 = vpack.c.b16 %v916, %v907
    %v1169 = vpack.c.b16 %v917, %v908
    %v1170 = vpack.c.b16 %v918, %v909
    %v1171 = vpack.c.b16 %v919, %v910
    %v1172 = vpack.c.b16 %v920, %v911
    %v1173 = vpack.c.b16 %v921, %v912
    %v1174 = vpack.c.b16 %v922, %v913
    %v1175 = vpack.c.b16 %v923, %v914
    %v1176 = vpack.c.b16 %v933, %v924
    %v1177 = vpack.c.b16 %v934, %v925
    %v1178 = vpack.c.b16 %v935, %v926
    %v1179 = vpack.c.b16 %v936, %v927
    %v1180 = vpack.c.b16 %v937, %v928
    %v1181 = vpack.c.b16 %v938, %v929
    %v1182 = vpack.c.b16 %v939, %v930
    %v1183 = vpack.c.b16 %v940, %v931
    %v1184 = vpack.c.b16 %v941, %v932
    %v1185 = vpack.c.b16 %v951, %v942
    %v1186 = vpack.c.b16 %v952, %v943
    %v1187 = vpack.c.b16 %v953, %v944
    %v1188 = vpack.c.b16 %v954, %v945
    %v1189 = vpack.c.b16 %v955, %v946
    %v1190 = vpack.c.b16 %v956, %v947
    %v1191 = vpack.c.b16 %v957, %v948
    %v1192 = vpack.c.b16 %v958, %v949
    %v1193 = vpack.c.b16 %v959, %v950
    %v1194 = vpack.c.b16 %v969, %v960
    %v1195 = vpack.c.b16 %v970, %v961
    %v1196 = vpack.c.b16 %v971, %v962
    %v1197 = vpack.c.b16 %v972, %v963
    %v1198 = vpack.c.b16 %v973, %v964
    %v1199 = vpack.c.b16 %v974, %v965
    %v1200 = vpack.c.b16 %v975, %v966
    %v1201 = vpack.c.b16 %v976, %v967
    %v1202 = vpack.c.b16 %v977, %v968
    %v1203 = vpack.c.b16 %v987, %v978
    %v1204 = vpack.c.b16 %v988, %v979
    %v1205 = vpack.c.b16 %v989, %v980
    %v1206 = vpack.c.b16 %v990, %v981
    %v1207 = vpack.c.b16 %v991, %v982
    %v1208 = vpack.c.b16 %v992, %v983
    %v1209 = vpack.c.b16 %v993, %v984
    %v1210 = vpack.c.b16 %v994, %v985
    %v1211 = vpack.c.b16 %v995, %v986
    %1428 = vmatprep.subr.bf16.mxu0 %v1060
    %1429 = vmatpush1.bf16.msra.mxu0 %v1059
    %1430 = vmatprep.subr.bf16.mxu0 %v1051
    %1431 = vmatpush1.bf16.msra.mxu0 %v1050
    %1432 = vmatprep.subr.bf16.mxu0 %v1042
    %1433 = vmatpush1.bf16.msra.mxu0 %v1041
    %1434 = vmatprep.subr.bf16.mxu0 %v1033
    %1435 = vmatpush1.bf16.msra.mxu0 %v1032
    %1436 = vmatprep.subr.bf16.mxu0 %v1024
    %1437 = vmatpush1.bf16.msra.mxu0 %v1023
    %1438 = vmatprep.subr.bf16.mxu0 %v1015
    %1439 = vmatpush1.bf16.msra.mxu0 %v1014
    %1440 = vmatprep.subr.bf16.mxu0 %v1006
    %1441 = vmatpush1.bf16.msra.mxu0 %v1005
    %1442 = vmatprep.subr.bf16.mxu0 %v997
    %1443 = vmatpush1.bf16.msra.mxu0 %v996
    %1444 = vmatprep.subr.bf16.mxu0 %v1132
    %1445 = vmatpush2.bf16.msra.mxu0 %v1131
    %1446 = vmatprep.subr.bf16.mxu0 %v1123
    %1447 = vmatpush2.bf16.msra.mxu0 %v1122
    %1448 = vmatprep.subr.bf16.mxu0 %v1114
    %1449 = vmatpush2.bf16.msra.mxu0 %v1113
    %1450 = vmatprep.subr.bf16.mxu0 %v1105
    %1451 = vmatpush2.bf16.msra.mxu0 %v1104
    %1452 = vmatprep.subr.bf16.mxu0 %v1096
    %1453 = vmatpush2.bf16.msra.mxu0 %v1095
    %1454 = vmatprep.subr.bf16.mxu0 %v1087
    %1455 = vmatpush2.bf16.msra.mxu0 %v1086
    %1456 = vmatprep.subr.bf16.mxu0 %v1078
    %1457 = vmatpush2.bf16.msra.mxu0 %v1077
    %1458 = vmatprep.subr.bf16.mxu0 %v1069
    %1459 = vmatpush2.bf16.msra.mxu0 %v1068
    %1460 = vmatprep.mubr.bf16.mxu0 %v82
    %1461 = vmatmul.mubr.bf16.gmra.mxu0 %v81
    %v1462 = vpop.f32.mrf.mxu0
    %v1463 = vadd.f32 0.0, %v1462
    %v1464 = vpop.f32.mrf.mxu0
    %v1465 = vadd.f32 0.0, %v1464
    %v1466 = vpop.f32.mrf.mxu0
    %v1467 = vadd.f32 0.0, %v1466
    %v1468 = vpop.f32.mrf.mxu0
    %v1469 = vadd.f32 0.0, %v1468
    %1470 = vdwg.mxu0
    %1471 = vmatprep.subr.bf16.mxu0 %v1204
    %1472 = vmatpush1.bf16.msra.mxu0 %v1203
    %1473 = vmatprep.subr.bf16.mxu0 %v1195
    %1474 = vmatpush1.bf16.msra.mxu0 %v1194
    %1475 = vmatprep.subr.bf16.mxu0 %v1186
    %1476 = vmatpush1.bf16.msra.mxu0 %v1185
    %1477 = vmatprep.subr.bf16.mxu0 %v1177
    %1478 = vmatpush1.bf16.msra.mxu0 %v1176
    %1479 = vmatprep.subr.bf16.mxu0 %v1168
    %1480 = vmatpush1.bf16.msra.mxu0 %v1167
    %1481 = vmatprep.subr.bf16.mxu0 %v1159
    %1482 = vmatpush1.bf16.msra.mxu0 %v1158
    %1483 = vmatprep.subr.bf16.mxu0 %v1150
    %1484 = vmatpush1.bf16.msra.mxu0 %v1149
    %1485 = vmatprep.subr.bf16.mxu0 %v1141
    %1486 = vmatpush1.bf16.msra.mxu0 %v1140
    %1487 = vmatprep.subr.bf16.mxu0 0
    %1488 = vmatpush2.bf16.msra.mxu0 0
    %1489 = vmatprep.subr.bf16.mxu0 0
    %1490 = vmatpush2.bf16.msra.mxu0 0
    %1491 = vmatprep.subr.bf16.mxu0 0
    %1492 = vmatpush2.bf16.msra.mxu0 0
    %1493 = vmatprep.subr.bf16.mxu0 0
    %1494 = vmatpush2.bf16.msra.mxu0 0
    %1495 = vmatprep.subr.bf16.mxu0 0
    %1496 = vmatpush2.bf16.msra.mxu0 0
    %1497 = vmatprep.subr.bf16.mxu0 0
    %1498 = vmatpush2.bf16.msra.mxu0 0
    %1499 = vmatprep.subr.bf16.mxu0 0
    %1500 = vmatpush2.bf16.msra.mxu0 0
    %1501 = vmatprep.subr.bf16.mxu0 0
    %1502 = vmatpush2.bf16.msra.mxu0 0
    %1503 = vmatprep.mubr.bf16.mxu0 0
    %1504 = vmatmul.mubr.bf16.gmra.mxu0 %v83
    %v1505 = vpop.f32.mrf.mxu0
    %v1506 = vadd.f32 %v1463, %v1505
    %v1507 = vpop.f32.mrf.mxu0
    %v1508 = vadd.f32 %v1465, %v1507
    %v1509 = vpop.f32.mrf.mxu0
    %v1510 = vadd.f32 %v1467, %v1509
    %v1511 = vpop.f32.mrf.mxu0
    %v1512 = vadd.f32 %v1469, %v1511
    %1513 = vdwg.mxu0
    %1514 = vmatprep.subr.bf16.mxu0 %v1062
    %1515 = vmatpush1.bf16.msra.mxu0 %v1061
    %1516 = vmatprep.subr.bf16.mxu0 %v1053
    %1517 = vmatpush1.bf16.msra.mxu0 %v1052
    %1518 = vmatprep.subr.bf16.mxu0 %v1044
    %1519 = vmatpush1.bf16.msra.mxu0 %v1043
    %1520 = vmatprep.subr.bf16.mxu0 %v1035
    %1521 = vmatpush1.bf16.msra.mxu0 %v1034
    %1522 = vmatprep.subr.bf16.mxu0 %v1026
    %1523 = vmatpush1.bf16.msra.mxu0 %v1025
    %1524 = vmatprep.subr.bf16.mxu0 %v1017
    %1525 = vmatpush1.bf16.msra.mxu0 %v1016
    %1526 = vmatprep.subr.bf16.mxu0 %v1008
    %1527 = vmatpush1.bf16.msra.mxu0 %v1007
    %1528 = vmatprep.subr.bf16.mxu0 %v999
    %1529 = vmatpush1.bf16.msra.mxu0 %v998
    %1530 = vmatprep.subr.bf16.mxu0 %v1134
    %1531 = vmatpush2.bf16.msra.mxu0 %v1133
    %1532 = vmatprep.subr.bf16.mxu0 %v1125
    %1533 = vmatpush2.bf16.msra.mxu0 %v1124
    %1534 = vmatprep.subr.bf16.mxu0 %v1116
    %1535 = vmatpush2.bf16.msra.mxu0 %v1115
    %1536 = vmatprep.subr.bf16.mxu0 %v1107
    %1537 = vmatpush2.bf16.msra.mxu0 %v1106
    %1538 = vmatprep.subr.bf16.mxu0 %v1098
    %1539 = vmatpush2.bf16.msra.mxu0 %v1097
    %1540 = vmatprep.subr.bf16.mxu0 %v1089
    %1541 = vmatpush2.bf16.msra.mxu0 %v1088
    %1542 = vmatprep.subr.bf16.mxu0 %v1080
    %1543 = vmatpush2.bf16.msra.mxu0 %v1079
    %1544 = vmatprep.subr.bf16.mxu0 %v1071
    %1545 = vmatpush2.bf16.msra.mxu0 %v1070
    %1546 = vmatprep.mubr.bf16.mxu0 %v82
    %1547 = vmatmul.mubr.bf16.gmra.mxu0 %v81
    %v1548 = vpop.f32.mrf.mxu0
    %v1549 = vadd.f32 0.0, %v1548
    %v1550 = vpop.f32.mrf.mxu0
    %v1551 = vadd.f32 0.0, %v1550
    %v1552 = vpop.f32.mrf.mxu0
    %v1553 = vadd.f32 0.0, %v1552
    %v1554 = vpop.f32.mrf.mxu0
    %v1555 = vadd.f32 0.0, %v1554
    %1556 = vdwg.mxu0
    %1557 = vmatprep.subr.bf16.mxu0 %v1206
    %1558 = vmatpush1.bf16.msra.mxu0 %v1205
    %1559 = vmatprep.subr.bf16.mxu0 %v1197
    %1560 = vmatpush1.bf16.msra.mxu0 %v1196
    %1561 = vmatprep.subr.bf16.mxu0 %v1188
    %1562 = vmatpush1.bf16.msra.mxu0 %v1187
    %1563 = vmatprep.subr.bf16.mxu0 %v1179
    %1564 = vmatpush1.bf16.msra.mxu0 %v1178
    %1565 = vmatprep.subr.bf16.mxu0 %v1170
    %1566 = vmatpush1.bf16.msra.mxu0 %v1169
    %1567 = vmatprep.subr.bf16.mxu0 %v1161
    %1568 = vmatpush1.bf16.msra.mxu0 %v1160
    %1569 = vmatprep.subr.bf16.mxu0 %v1152
    %1570 = vmatpush1.bf16.msra.mxu0 %v1151
    %1571 = vmatprep.subr.bf16.mxu0 %v1143
    %1572 = vmatpush1.bf16.msra.mxu0 %v1142
    %1573 = vmatprep.subr.bf16.mxu0 0
    %1574 = vmatpush2.bf16.msra.mxu0 0
    %1575 = vmatprep.subr.bf16.mxu0 0
    %1576 = vmatpush2.bf16.msra.mxu0 0
    %1577 = vmatprep.subr.bf16.mxu0 0
    %1578 = vmatpush2.bf16.msra.mxu0 0
    %1579 = vmatprep.subr.bf16.mxu0 0
    %1580 = vmatpush2.bf16.msra.mxu0 0
    %1581 = vmatprep.subr.bf16.mxu0 0
    %1582 = vmatpush2.bf16.msra.mxu0 0
    %1583 = vmatprep.subr.bf16.mxu0 0
    %1584 = vmatpush2.bf16.msra.mxu0 0
    %1585 = vmatprep.subr.bf16.mxu0 0
    %1586 = vmatpush2.bf16.msra.mxu0 0
    %1587 = vmatprep.subr.bf16.mxu0 0
    %1588 = vmatpush2.bf16.msra.mxu0 0
    %1589 = vmatprep.mubr.bf16.mxu0 0
    %1590 = vmatmul.mubr.bf16.gmra.mxu0 %v83
    %v1591 = vpop.f32.mrf.mxu0
    %v1592 = vadd.f32 %v1549, %v1591
    %v1593 = vpop.f32.mrf.mxu0
    %v1594 = vadd.f32 %v1551, %v1593
    %v1595 = vpop.f32.mrf.mxu0
    %v1596 = vadd.f32 %v1553, %v1595
    %v1597 = vpop.f32.mrf.mxu0
    %v1598 = vadd.f32 %v1555, %v1597
    %1599 = vdwg.mxu0
    %1600 = vmatprep.subr.bf16.mxu0 %v1064
    %1601 = vmatpush1.bf16.msra.mxu0 %v1063
    %1602 = vmatprep.subr.bf16.mxu0 %v1055
    %1603 = vmatpush1.bf16.msra.mxu0 %v1054
    %1604 = vmatprep.subr.bf16.mxu0 %v1046
    %1605 = vmatpush1.bf16.msra.mxu0 %v1045
    %1606 = vmatprep.subr.bf16.mxu0 %v1037
    %1607 = vmatpush1.bf16.msra.mxu0 %v1036
    %1608 = vmatprep.subr.bf16.mxu0 %v1028
    %1609 = vmatpush1.bf16.msra.mxu0 %v1027
    %1610 = vmatprep.subr.bf16.mxu0 %v1019
    %1611 = vmatpush1.bf16.msra.mxu0 %v1018
    %1612 = vmatprep.subr.bf16.mxu0 %v1010
    %1613 = vmatpush1.bf16.msra.mxu0 %v1009
    %1614 = vmatprep.subr.bf16.mxu0 %v1001
    %1615 = vmatpush1.bf16.msra.mxu0 %v1000
    %1616 = vmatprep.subr.bf16.mxu0 %v1136
    %1617 = vmatpush2.bf16.msra.mxu0 %v1135
    %1618 = vmatprep.subr.bf16.mxu0 %v1127
    %1619 = vmatpush2.bf16.msra.mxu0 %v1126
    %1620 = vmatprep.subr.bf16.mxu0 %v1118
    %1621 = vmatpush2.bf16.msra.mxu0 %v1117
    %1622 = vmatprep.subr.bf16.mxu0 %v1109
    %1623 = vmatpush2.bf16.msra.mxu0 %v1108
    %1624 = vmatprep.subr.bf16.mxu0 %v1100
    %1625 = vmatpush2.bf16.msra.mxu0 %v1099
    %1626 = vmatprep.subr.bf16.mxu0 %v1091
    %1627 = vmatpush2.bf16.msra.mxu0 %v1090
    %1628 = vmatprep.subr.bf16.mxu0 %v1082
    %1629 = vmatpush2.bf16.msra.mxu0 %v1081
    %1630 = vmatprep.subr.bf16.mxu0 %v1073
    %1631 = vmatpush2.bf16.msra.mxu0 %v1072
    %1632 = vmatprep.mubr.bf16.mxu0 %v82
    %1633 = vmatmul.mubr.bf16.gmra.mxu0 %v81
    %v1634 = vpop.f32.mrf.mxu0
    %v1635 = vadd.f32 0.0, %v1634
    %v1636 = vpop.f32.mrf.mxu0
    %v1637 = vadd.f32 0.0, %v1636
    %v1638 = vpop.f32.mrf.mxu0
    %v1639 = vadd.f32 0.0, %v1638
    %v1640 = vpop.f32.mrf.mxu0
    %v1641 = vadd.f32 0.0, %v1640
    %1642 = vdwg.mxu0
    %1643 = vmatprep.subr.bf16.mxu0 %v1208
    %1644 = vmatpush1.bf16.msra.mxu0 %v1207
    %1645 = vmatprep.subr.bf16.mxu0 %v1199
    %1646 = vmatpush1.bf16.msra.mxu0 %v1198
    %1647 = vmatprep.subr.bf16.mxu0 %v1190
    %1648 = vmatpush1.bf16.msra.mxu0 %v1189
    %1649 = vmatprep.subr.bf16.mxu0 %v1181
    %1650 = vmatpush1.bf16.msra.mxu0 %v1180
    %1651 = vmatprep.subr.bf16.mxu0 %v1172
    %1652 = vmatpush1.bf16.msra.mxu0 %v1171
    %1653 = vmatprep.subr.bf16.mxu0 %v1163
    %1654 = vmatpush1.bf16.msra.mxu0 %v1162
    %1655 = vmatprep.subr.bf16.mxu0 %v1154
    %1656 = vmatpush1.bf16.msra.mxu0 %v1153
    %1657 = vmatprep.subr.bf16.mxu0 %v1145
    %1658 = vmatpush1.bf16.msra.mxu0 %v1144
    %1659 = vmatprep.subr.bf16.mxu0 0
    %1660 = vmatpush2.bf16.msra.mxu0 0
    %1661 = vmatprep.subr.bf16.mxu0 0
    %1662 = vmatpush2.bf16.msra.mxu0 0
    %1663 = vmatprep.subr.bf16.mxu0 0
    %1664 = vmatpush2.bf16.msra.mxu0 0
    %1665 = vmatprep.subr.bf16.mxu0 0
    %1666 = vmatpush2.bf16.msra.mxu0 0
    %1667 = vmatprep.subr.bf16.mxu0 0
    %1668 = vmatpush2.bf16.msra.mxu0 0
    %1669 = vmatprep.subr.bf16.mxu0 0
    %1670 = vmatpush2.bf16.msra.mxu0 0
    %1671 = vmatprep.subr.bf16.mxu0 0
    %1672 = vmatpush2.bf16.msra.mxu0 0
    %1673 = vmatprep.subr.bf16.mxu0 0
    %1674 = vmatpush2.bf16.msra.mxu0 0
    %1675 = vmatprep.mubr.bf16.mxu0 0
    %1676 = vmatmul.mubr.bf16.gmra.mxu0 %v83
    %v1677 = vpop.f32.mrf.mxu0
    %v1678 = vadd.f32 %v1635, %v1677
    %v1679 = vpop.f32.mrf.mxu0
    %v1680 = vadd.f32 %v1637, %v1679
    %v1681 = vpop.f32.mrf.mxu0
    %v1682 = vadd.f32 %v1639, %v1681
    %v1683 = vpop.f32.mrf.mxu0
    %v1684 = vadd.f32 %v1641, %v1683
    %1685 = vdwg.mxu0
    %1686 = vmatprep.subr.bf16.mxu0 %v1066
    %1687 = vmatpush1.bf16.msra.mxu0 %v1065
    %1688 = vmatprep.subr.bf16.mxu0 %v1057
    %1689 = vmatpush1.bf16.msra.mxu0 %v1056
    %1690 = vmatprep.subr.bf16.mxu0 %v1048
    %1691 = vmatpush1.bf16.msra.mxu0 %v1047
    %1692 = vmatprep.subr.bf16.mxu0 %v1039
    %1693 = vmatpush1.bf16.msra.mxu0 %v1038
    %1694 = vmatprep.subr.bf16.mxu0 %v1030
    %1695 = vmatpush1.bf16.msra.mxu0 %v1029
    %1696 = vmatprep.subr.bf16.mxu0 %v1021
    %1697 = vmatpush1.bf16.msra.mxu0 %v1020
    %1698 = vmatprep.subr.bf16.mxu0 %v1012
    %1699 = vmatpush1.bf16.msra.mxu0 %v1011
    %1700 = vmatprep.subr.bf16.mxu0 %v1003
    %1701 = vmatpush1.bf16.msra.mxu0 %v1002
    %1702 = vmatprep.subr.bf16.mxu0 %v1138
    %1703 = vmatpush2.bf16.msra.mxu0 %v1137
    %1704 = vmatprep.subr.bf16.mxu0 %v1129
    %1705 = vmatpush2.bf16.msra.mxu0 %v1128
    %1706 = vmatprep.subr.bf16.mxu0 %v1120
    %1707 = vmatpush2.bf16.msra.mxu0 %v1119
    %1708 = vmatprep.subr.bf16.mxu0 %v1111
    %1709 = vmatpush2.bf16.msra.mxu0 %v1110
    %1710 = vmatprep.subr.bf16.mxu0 %v1102
    %1711 = vmatpush2.bf16.msra.mxu0 %v1101
    %1712 = vmatprep.subr.bf16.mxu0 %v1093
    %1713 = vmatpush2.bf16.msra.mxu0 %v1092
    %1714 = vmatprep.subr.bf16.mxu0 %v1084
    %1715 = vmatpush2.bf16.msra.mxu0 %v1083
    %1716 = vmatprep.subr.bf16.mxu0 %v1075
    %1717 = vmatpush2.bf16.msra.mxu0 %v1074
    %1718 = vmatprep.mubr.bf16.mxu0 %v82
    %1719 = vmatmul.mubr.bf16.gmra.mxu0 %v81
    %v1720 = vpop.f32.mrf.mxu0
    %v1721 = vadd.f32 0.0, %v1720
    %v1722 = vpop.f32.mrf.mxu0
    %v1723 = vadd.f32 0.0, %v1722
    %v1724 = vpop.f32.mrf.mxu0
    %v1725 = vadd.f32 0.0, %v1724
    %v1726 = vpop.f32.mrf.mxu0
    %v1727 = vadd.f32 0.0, %v1726
    %1728 = vdwg.mxu0
    %1729 = vmatprep.subr.bf16.mxu0 %v1210
    %1730 = vmatpush1.bf16.msra.mxu0 %v1209
    %1731 = vmatprep.subr.bf16.mxu0 %v1201
    %1732 = vmatpush1.bf16.msra.mxu0 %v1200
    %1733 = vmatprep.subr.bf16.mxu0 %v1192
    %1734 = vmatpush1.bf16.msra.mxu0 %v1191
    %1735 = vmatprep.subr.bf16.mxu0 %v1183
    %1736 = vmatpush1.bf16.msra.mxu0 %v1182
    %1737 = vmatprep.subr.bf16.mxu0 %v1174
    %1738 = vmatpush1.bf16.msra.mxu0 %v1173
    %1739 = vmatprep.subr.bf16.mxu0 %v1165
    %1740 = vmatpush1.bf16.msra.mxu0 %v1164
    %1741 = vmatprep.subr.bf16.mxu0 %v1156
    %1742 = vmatpush1.bf16.msra.mxu0 %v1155
    %1743 = vmatprep.subr.bf16.mxu0 %v1147
    %1744 = vmatpush1.bf16.msra.mxu0 %v1146
    %1745 = vmatprep.subr.bf16.mxu0 0
    %1746 = vmatpush2.bf16.msra.mxu0 0
    %1747 = vmatprep.subr.bf16.mxu0 0
    %1748 = vmatpush2.bf16.msra.mxu0 0
    %1749 = vmatprep.subr.bf16.mxu0 0
    %1750 = vmatpush2.bf16.msra.mxu0 0
    %1751 = vmatprep.subr.bf16.mxu0 0
    %1752 = vmatpush2.bf16.msra.mxu0 0
    %1753 = vmatprep.subr.bf16.mxu0 0
    %1754 = vmatpush2.bf16.msra.mxu0 0
    %1755 = vmatprep.subr.bf16.mxu0 0
    %1756 = vmatpush2.bf16.msra.mxu0 0
    %1757 = vmatprep.subr.bf16.mxu0 0
    %1758 = vmatpush2.bf16.msra.mxu0 0
    %1759 = vmatprep.subr.bf16.mxu0 0
    %1760 = vmatpush2.bf16.msra.mxu0 0
    %1761 = vmatprep.mubr.bf16.mxu0 0
    %1762 = vmatmul.mubr.bf16.gmra.mxu0 %v83
    %v1763 = vpop.f32.mrf.mxu0
    %v1764 = vadd.f32 %v1721, %v1763
    %v1765 = vpop.f32.mrf.mxu0
    %v1766 = vadd.f32 %v1723, %v1765
    %v1767 = vpop.f32.mrf.mxu0
    %v1768 = vadd.f32 %v1725, %v1767
    %v1769 = vpop.f32.mrf.mxu0
    %v1770 = vadd.f32 %v1727, %v1769
    %1771 = vdwg.mxu0
    %1772 = vmatprep.subr.bf16.mxu0 0
    %1773 = vmatpush1.bf16.msra.mxu0 %v1067
    %1774 = vmatprep.subr.bf16.mxu0 0
    %1775 = vmatpush1.bf16.msra.mxu0 %v1058
    %1776 = vmatprep.subr.bf16.mxu0 0
    %1777 = vmatpush1.bf16.msra.mxu0 %v1049
    %1778 = vmatprep.subr.bf16.mxu0 0
    %1779 = vmatpush1.bf16.msra.mxu0 %v1040
    %1780 = vmatprep.subr.bf16.mxu0 0
    %1781 = vmatpush1.bf16.msra.mxu0 %v1031
    %1782 = vmatprep.subr.bf16.mxu0 0
    %1783 = vmatpush1.bf16.msra.mxu0 %v1022
    %1784 = vmatprep.subr.bf16.mxu0 0
    %1785 = vmatpush1.bf16.msra.mxu0 %v1013
    %1786 = vmatprep.subr.bf16.mxu0 0
    %1787 = vmatpush1.bf16.msra.mxu0 %v1004
    %1788 = vmatprep.subr.bf16.mxu0 0
    %1789 = vmatpush2.bf16.msra.mxu0 %v1139
    %1790 = vmatprep.subr.bf16.mxu0 0
    %1791 = vmatpush2.bf16.msra.mxu0 %v1130
    %1792 = vmatprep.subr.bf16.mxu0 0
    %1793 = vmatpush2.bf16.msra.mxu0 %v1121
    %1794 = vmatprep.subr.bf16.mxu0 0
    %1795 = vmatpush2.bf16.msra.mxu0 %v1112
    %1796 = vmatprep.subr.bf16.mxu0 0
    %1797 = vmatpush2.bf16.msra.mxu0 %v1103
    %1798 = vmatprep.subr.bf16.mxu0 0
    %1799 = vmatpush2.bf16.msra.mxu0 %v1094
    %1800 = vmatprep.subr.bf16.mxu0 0
    %1801 = vmatpush2.bf16.msra.mxu0 %v1085
    %1802 = vmatprep.subr.bf16.mxu0 0
    %1803 = vmatpush2.bf16.msra.mxu0 %v1076
    %1804 = vmatprep.mubr.bf16.mxu0 %v82
    %1805 = vmatmul.mubr.bf16.gmra.mxu0 %v81
    %v1806 = vpop.f32.mrf.mxu0
    %v1807 = vadd.f32 0.0, %v1806
    %v1808 = vpop.f32.mrf.mxu0
    %v1809 = vpop.f32.mrf.mxu0
    %v1810 = vadd.f32 0.0, %v1809
    %v1811 = vpop.f32.mrf.mxu0
    %1812 = vdwg.mxu0
    %1813 = vmatprep.subr.bf16.mxu0 0
    %1814 = vmatpush1.bf16.msra.mxu0 %v1211
    %1815 = vmatprep.subr.bf16.mxu0 0
    %1816 = vmatpush1.bf16.msra.mxu0 %v1202
    %1817 = vmatprep.subr.bf16.mxu0 0
    %1818 = vmatpush1.bf16.msra.mxu0 %v1193
    %1819 = vmatprep.subr.bf16.mxu0 0
    %1820 = vmatpush1.bf16.msra.mxu0 %v1184
    %1821 = vmatprep.subr.bf16.mxu0 0
    %1822 = vmatpush1.bf16.msra.mxu0 %v1175
    %1823 = vmatprep.subr.bf16.mxu0 0
    %1824 = vmatpush1.bf16.msra.mxu0 %v1166
    %1825 = vmatprep.subr.bf16.mxu0 0
    %1826 = vmatpush1.bf16.msra.mxu0 %v1157
    %1827 = vmatprep.subr.bf16.mxu0 0
    %1828 = vmatpush1.bf16.msra.mxu0 %v1148
    %1829 = vmatprep.subr.bf16.mxu0 0
    %1830 = vmatpush2.bf16.msra.mxu0 0
    %1831 = vmatprep.subr.bf16.mxu0 0
    %1832 = vmatpush2.bf16.msra.mxu0 0
    %1833 = vmatprep.subr.bf16.mxu0 0
    %1834 = vmatpush2.bf16.msra.mxu0 0
    %1835 = vmatprep.subr.bf16.mxu0 0
    %1836 = vmatpush2.bf16.msra.mxu0 0
    %1837 = vmatprep.subr.bf16.mxu0 0
    %1838 = vmatpush2.bf16.msra.mxu0 0
    %1839 = vmatprep.subr.bf16.mxu0 0
    %1840 = vmatpush2.bf16.msra.mxu0 0
    %1841 = vmatprep.subr.bf16.mxu0 0
    %1842 = vmatpush2.bf16.msra.mxu0 0
    %1843 = vmatprep.subr.bf16.mxu0 0
    %1844 = vmatpush2.bf16.msra.mxu0 0
    %1845 = vmatprep.mubr.bf16.mxu0 0
    %1846 = vmatmul.mubr.bf16.gmra.mxu0 %v83
    %v1847 = vpop.f32.mrf.mxu0
    %v1848 = vadd.f32 %v1807, %v1847
    %v1849 = vpop.f32.mrf.mxu0
    %v1850 = vpop.f32.mrf.mxu0
    %v1851 = vadd.f32 %v1810, %v1850
    %v1852 = vpop.f32.mrf.mxu0
    %1853 = vdwg.mxu0
    %v1854 = vpack.c.bf16 %v1510, %v1506
    %v1855 = vpack.c.bf16 %v1512, %v1508
    %v1856 = vpack.c.bf16 %v1596, %v1592
    %v1857 = vpack.c.bf16 %v1598, %v1594
    %v1858 = vpack.c.bf16 %v1682, %v1678
    %v1859 = vpack.c.bf16 %v1684, %v1680
    %v1860 = vpack.c.bf16 %v1768, %v1764
    %v1861 = vpack.c.bf16 %v1770, %v1766
    %v1862 = vpack.c.bf16 %v1851, %v1848
    %v1872 = vunpack.c.l.b16 %v1854
    %v1873 = vunpack.c.l.b16 %v1855
    %v1874 = vunpack.c.l.b16 %v1856
    %v1875 = vunpack.c.l.b16 %v1857
    %v1876 = vunpack.c.l.b16 %v1858
    %v1877 = vunpack.c.l.b16 %v1859
    %v1878 = vunpack.c.l.b16 %v1860
    %v1879 = vunpack.c.l.b16 %v1861
    %v1880 = vunpack.c.l.b16 %v1862
    %v1881 = vunpack.c.h.b16 %v1854
    %v1882 = vunpack.c.h.b16 %v1855
    %v1883 = vunpack.c.h.b16 %v1856
    %v1884 = vunpack.c.h.b16 %v1857
    %v1885 = vunpack.c.h.b16 %v1858
    %v1886 = vunpack.c.h.b16 %v1859
    %v1887 = vunpack.c.h.b16 %v1860
    %v1888 = vunpack.c.h.b16 %v1861
    %v1889 = vunpack.c.h.b16 %v1862
    %v1890 = vpack.c.b16 %v1873, %v1872
    %v1891 = vpack.c.b16 %v1875, %v1874
    %v1892 = vpack.c.b16 %v1877, %v1876
    %v1893 = vpack.c.b16 %v1879, %v1878
    %v1894 = vpack.c.b16 %v1880, %v1880
    %v1895 = vpack.c.b16 %v1882, %v1881
    %v1896 = vpack.c.b16 %v1884, %v1883
    %v1897 = vpack.c.b16 %v1886, %v1885
    %v1898 = vpack.c.b16 %v1888, %v1887
    %v1899 = vpack.c.b16 %v1889, %v1889
    %v1900 = vld [vmem:[#allocation9] sm:$0xff]
    %v1901 = vrot.slane %v1891, 4
    %vm1902 = vcmask 523264
    %v1904 = vsel %vm1902, %v1890, 0
    %v1907 = vsel %vm1902, %v1901, 0
    %1909 = vmatprep.subr.bf16.mxu0 0
    %1910 = vmatpush1.bf16.xpose.msra.mxu0 0
    %1911 = vmatprep.subr.bf16.mxu0 0
    %1912 = vmatpush1.bf16.xpose.msra.mxu0 0
    %1913 = vmatprep.subr.bf16.mxu0 0
    %1914 = vmatpush1.bf16.xpose.msra.mxu0 0
    %1915 = vmatprep.subr.bf16.mxu0 0
    %1916 = vmatpush1.bf16.xpose.msra.mxu0 0
    %1917 = vmatprep.subr.bf16.mxu0 0
    %1918 = vmatpush1.bf16.xpose.msra.mxu0 0
    %1919 = vmatprep.subr.bf16.mxu0 0
    %1920 = vmatpush1.bf16.xpose.msra.mxu0 0
    %1921 = vmatprep.subr.bf16.mxu0 0
    %1922 = vmatpush1.bf16.xpose.msra.mxu0 0
    %1923 = vmatprep.subr.bf16.mxu0 0
    %1924 = vmatpush1.bf16.xpose.msra.mxu0 %v1907
    %1925 = vmatprep.subr.bf16.mxu0 0
    %1926 = vmatpush2.bf16.xpose.msra.mxu0 0
    %1927 = vmatprep.subr.bf16.mxu0 0
    %1928 = vmatpush2.bf16.xpose.msra.mxu0 0
    %1929 = vmatprep.subr.bf16.mxu0 0
    %1930 = vmatpush2.bf16.xpose.msra.mxu0 0
    %1931 = vmatprep.subr.bf16.mxu0 0
    %1932 = vmatpush2.bf16.xpose.msra.mxu0 0
    %1933 = vmatprep.subr.bf16.mxu0 0
    %1934 = vmatpush2.bf16.xpose.msra.mxu0 0
    %1935 = vmatprep.subr.bf16.mxu0 0
    %1936 = vmatpush2.bf16.xpose.msra.mxu0 0
    %1937 = vmatprep.subr.bf16.mxu0 0
    %1938 = vmatpush2.bf16.xpose.msra.mxu0 0
    %1939 = vmatprep.subr.bf16.mxu0 0
    %1940 = vmatpush2.bf16.xpose.msra.mxu0 0
    %1941 = vmatprep.mubr.bf16.mxu0 0
    %1942 = vmatmul.mubr.bf16.gmra.mxu0 %v1904
    %v1943 = vpop.f32.mrf.mxu0
    %v1944 = vadd.f32 %v1900, %v1943
    %v1945 = vpop.f32.mrf.mxu0
    %v1946 = vpop.f32.mrf.mxu0
    %v1947 = vpop.f32.mrf.mxu0
    %1948 = vdwg.mxu0
    %v1949 = vrot.slane %v1896, 4
    %v1951 = vsel %vm1902, %v1895, 0
    %v1954 = vsel %vm1902, %v1949, 0
    %1956 = vmatprep.subr.bf16.mxu0 0
    %1957 = vmatpush1.bf16.xpose.msra.mxu0 0
    %1958 = vmatprep.subr.bf16.mxu0 0
    %1959 = vmatpush1.bf16.xpose.msra.mxu0 0
    %1960 = vmatprep.subr.bf16.mxu0 0
    %1961 = vmatpush1.bf16.xpose.msra.mxu0 0
    %1962 = vmatprep.subr.bf16.mxu0 0
    %1963 = vmatpush1.bf16.xpose.msra.mxu0 0
    %1964 = vmatprep.subr.bf16.mxu0 0
    %1965 = vmatpush1.bf16.xpose.msra.mxu0 0
    %1966 = vmatprep.subr.bf16.mxu0 0
    %1967 = vmatpush1.bf16.xpose.msra.mxu0 0
    %1968 = vmatprep.subr.bf16.mxu0 0
    %1969 = vmatpush1.bf16.xpose.msra.mxu0 0
    %1970 = vmatprep.subr.bf16.mxu0 0
    %1971 = vmatpush1.bf16.xpose.msra.mxu0 %v1954
    %1972 = vmatprep.subr.bf16.mxu0 0
    %1973 = vmatpush2.bf16.xpose.msra.mxu0 0
    %1974 = vmatprep.subr.bf16.mxu0 0
    %1975 = vmatpush2.bf16.xpose.msra.mxu0 0
    %1976 = vmatprep.subr.bf16.mxu0 0
    %1977 = vmatpush2.bf16.xpose.msra.mxu0 0
    %1978 = vmatprep.subr.bf16.mxu0 0
    %1979 = vmatpush2.bf16.xpose.msra.mxu0 0
    %1980 = vmatprep.subr.bf16.mxu0 0
    %1981 = vmatpush2.bf16.xpose.msra.mxu0 0
    %1982 = vmatprep.subr.bf16.mxu0 0
    %1983 = vmatpush2.bf16.xpose.msra.mxu0 0
    %1984 = vmatprep.subr.bf16.mxu0 0
    %1985 = vmatpush2.bf16.xpose.msra.mxu0 0
    %1986 = vmatprep.subr.bf16.mxu0 0
    %1987 = vmatpush2.bf16.xpose.msra.mxu0 0
    %1988 = vmatprep.mubr.bf16.mxu0 0
    %1989 = vmatmul.mubr.bf16.gmra.mxu0 %v1951
    %v1990 = vpop.f32.mrf.mxu0
    %v1991 = vadd.f32 %v1900, %v1990
    %v1992 = vpop.f32.mrf.mxu0
    %v1993 = vpop.f32.mrf.mxu0
    %v1994 = vpop.f32.mrf.mxu0
    %1995 = vdwg.mxu0
    %vm1996 = vcmask 64512
    %v1997 = vsel %vm1996, %v1944, -inf
    %1998 = vmax.xlane.f32.xlu0 %v1997
    %v1999 = vpop.xlane.xlu0 %1998
    %v2000 = vsel %vm1996, %v1991, -inf
    %2001 = vmax.xlane.f32.xlu0 %v2000
    %v2002 = vpop.xlane.xlu0 %2001
    %v2003 = vsub.f32 %v1944, %v1999
    %v2004 = vsub.f32 %v1991, %v2002
    %v2005 = vmul.f32 %v2003, 1.442695
    %v2006 = vpow.pop %v2005
    %v2007 = vmul.f32 %v2004, 1.442695
    %v2008 = vpow.pop %v2007
    %v2009 = vsel %vm1996, %v2006, 0.0
    %2010 = vadd.xlane.f32.xlu0 %v2009
    %v2011 = vpop.xlane.xlu0 %2010
    %v2012 = vsel %vm1996, %v2008, 0.0
    %2013 = vadd.xlane.f32.xlu0 %v2012
    %v2014 = vpop.xlane.xlu0 %2013
    %v2015 = vpack.c.bf16 %v2006, %v2006
    %v2016 = vpack.c.bf16 %v2008, %v2008
    %v2017 = vrcp.pop %v2011
    %v2018 = vrcp.pop %v2014
    %v2020 = vsel %vm1996, %v2015, 0
    %vm2022 = vcmask 1043456
    %v2024 = vsel %vm2022, %v1893, 0
    %2026 = vmatprep.subr.bf16.mxu0 0
    %2027 = vmatpush1.bf16.msra.mxu0 0
    %2028 = vmatprep.subr.bf16.mxu0 0
    %2029 = vmatpush1.bf16.msra.mxu0 0
    %2030 = vmatprep.subr.bf16.mxu0 0
    %2031 = vmatpush1.bf16.msra.mxu0 0
    %2032 = vmatprep.subr.bf16.mxu0 0
    %2033 = vmatpush1.bf16.msra.mxu0 0
    %2034 = vmatprep.subr.bf16.mxu0 0
    %2035 = vmatpush1.bf16.msra.mxu0 0
    %2036 = vmatprep.subr.bf16.mxu0 0
    %2037 = vmatpush1.bf16.msra.mxu0 0
    %2038 = vmatprep.subr.bf16.mxu0 0
    %2039 = vmatpush1.bf16.msra.mxu0 0
    %2040 = vmatprep.subr.bf16.mxu0 0
    %2041 = vmatpush1.bf16.msra.mxu0 %v2024
    %2042 = vmatprep.subr.bf16.mxu0 0
    %2043 = vmatpush2.bf16.msra.mxu0 0
    %2044 = vmatprep.subr.bf16.mxu0 0
    %2045 = vmatpush2.bf16.msra.mxu0 0
    %2046 = vmatprep.subr.bf16.mxu0 0
    %2047 = vmatpush2.bf16.msra.mxu0 0
    %2048 = vmatprep.subr.bf16.mxu0 0
    %2049 = vmatpush2.bf16.msra.mxu0 0
    %2050 = vmatprep.subr.bf16.mxu0 0
    %2051 = vmatpush2.bf16.msra.mxu0 0
    %2052 = vmatprep.subr.bf16.mxu0 0
    %2053 = vmatpush2.bf16.msra.mxu0 0
    %2054 = vmatprep.subr.bf16.mxu0 0
    %2055 = vmatpush2.bf16.msra.mxu0 0
    %2056 = vmatprep.subr.bf16.mxu0 0
    %2057 = vmatpush2.bf16.msra.mxu0 0
    %2058 = vmatprep.mubr.bf16.mxu0 0
    %2059 = vmatmul.mubr.bf16.gmra.mxu0 %v2020
    %v2060 = vpop.f32.mrf.mxu0
    %v2061 = vadd.f32 0.0, %v2060
    %v2062 = vpop.f32.mrf.mxu0
    %v2063 = vpop.f32.mrf.mxu0
    %v2064 = vpop.f32.mrf.mxu0
    %2065 = vdwg.mxu0
    %v2067 = vsel %vm1996, %v2016, 0
    %v2070 = vsel %vm2022, %v1898, 0
    %2072 = vmatprep.subr.bf16.mxu0 0
    %2073 = vmatpush1.bf16.msra.mxu0 0
    %2074 = vmatprep.subr.bf16.mxu0 0
    %2075 = vmatpush1.bf16.msra.mxu0 0
    %2076 = vmatprep.subr.bf16.mxu0 0
    %2077 = vmatpush1.bf16.msra.mxu0 0
    %2078 = vmatprep.subr.bf16.mxu0 0
    %2079 = vmatpush1.bf16.msra.mxu0 0
    %2080 = vmatprep.subr.bf16.mxu0 0
    %2081 = vmatpush1.bf16.msra.mxu0 0
    %2082 = vmatprep.subr.bf16.mxu0 0
    %2083 = vmatpush1.bf16.msra.mxu0 0
    %2084 = vmatprep.subr.bf16.mxu0 0
    %2085 = vmatpush1.bf16.msra.mxu0 0
    %2086 = vmatprep.subr.bf16.mxu0 0
    %2087 = vmatpush1.bf16.msra.mxu0 %v2070
    %2088 = vmatprep.subr.bf16.mxu0 0
    %2089 = vmatpush2.bf16.msra.mxu0 0
    %2090 = vmatprep.subr.bf16.mxu0 0
    %2091 = vmatpush2.bf16.msra.mxu0 0
    %2092 = vmatprep.subr.bf16.mxu0 0
    %2093 = vmatpush2.bf16.msra.mxu0 0
    %2094 = vmatprep.subr.bf16.mxu0 0
    %2095 = vmatpush2.bf16.msra.mxu0 0
    %2096 = vmatprep.subr.bf16.mxu0 0
    %2097 = vmatpush2.bf16.msra.mxu0 0
    %2098 = vmatprep.subr.bf16.mxu0 0
    %2099 = vmatpush2.bf16.msra.mxu0 0
    %2100 = vmatprep.subr.bf16.mxu0 0
    %2101 = vmatpush2.bf16.msra.mxu0 0
    %2102 = vmatprep.subr.bf16.mxu0 0
    %2103 = vmatpush2.bf16.msra.mxu0 0
    %2104 = vmatprep.mubr.bf16.mxu0 0
    %2105 = vmatmul.mubr.bf16.gmra.mxu0 %v2067
    %v2106 = vpop.f32.mrf.mxu0
    %v2107 = vadd.f32 0.0, %v2106
    %v2108 = vpop.f32.mrf.mxu0
    %v2109 = vpop.f32.mrf.mxu0
    %v2110 = vpop.f32.mrf.mxu0
    %2111 = vdwg.mxu0
    %v2112 = vmul.f32 %v2061, %v2017
    %v2113 = vmul.f32 %v2107, %v2018
    %v2114 = vpack.c.bf16 %v2112, %v2112
    %v2115 = vpack.c.bf16 %v2113, %v2113
    %2116 = vrot.lane.b32.xlu0 %v1891, 64
    %v2117 = vpop.permute.xlu0 %2116
    %v2118 = vrot.slane %v2117, 4
    %v2119 = vpack.c.b16 %v1872, %v1872
    %2120 = vrot.lane.b32.xlu0 %v2119, 64
    %v2121 = vpop.permute.xlu0 %2120
    %v2123 = vsel %vm1902, %v2121, 0
    %v2126 = vsel %vm1902, %v2118, 0
    %2128 = vmatprep.subr.bf16.mxu0 0
    %2129 = vmatpush1.bf16.xpose.msra.mxu0 0
    %2130 = vmatprep.subr.bf16.mxu0 0
    %2131 = vmatpush1.bf16.xpose.msra.mxu0 0
    %2132 = vmatprep.subr.bf16.mxu0 0
    %2133 = vmatpush1.bf16.xpose.msra.mxu0 0
    %2134 = vmatprep.subr.bf16.mxu0 0
    %2135 = vmatpush1.bf16.xpose.msra.mxu0 0
    %2136 = vmatprep.subr.bf16.mxu0 0
    %2137 = vmatpush1.bf16.xpose.msra.mxu0 0
    %2138 = vmatprep.subr.bf16.mxu0 0
    %2139 = vmatpush1.bf16.xpose.msra.mxu0 0
    %2140 = vmatprep.subr.bf16.mxu0 0
    %2141 = vmatpush1.bf16.xpose.msra.mxu0 0
    %2142 = vmatprep.subr.bf16.mxu0 0
    %2143 = vmatpush1.bf16.xpose.msra.mxu0 %v2126
    %2144 = vmatprep.subr.bf16.mxu0 0
    %2145 = vmatpush2.bf16.xpose.msra.mxu0 0
    %2146 = vmatprep.subr.bf16.mxu0 0
    %2147 = vmatpush2.bf16.xpose.msra.mxu0 0
    %2148 = vmatprep.subr.bf16.mxu0 0
    %2149 = vmatpush2.bf16.xpose.msra.mxu0 0
    %2150 = vmatprep.subr.bf16.mxu0 0
    %2151 = vmatpush2.bf16.xpose.msra.mxu0 0
    %2152 = vmatprep.subr.bf16.mxu0 0
    %2153 = vmatpush2.bf16.xpose.msra.mxu0 0
    %2154 = vmatprep.subr.bf16.mxu0 0
    %2155 = vmatpush2.bf16.xpose.msra.mxu0 0
    %2156 = vmatprep.subr.bf16.mxu0 0
    %2157 = vmatpush2.bf16.xpose.msra.mxu0 0
    %2158 = vmatprep.subr.bf16.mxu0 0
    %2159 = vmatpush2.bf16.xpose.msra.mxu0 0
    %2160 = vmatprep.mubr.bf16.mxu0 0
    %2161 = vmatmul.mubr.bf16.gmra.mxu0 %v2123
    %v2162 = vpop.f32.mrf.mxu0
    %v2163 = vadd.f32 %v1900, %v2162
    %v2164 = vpop.f32.mrf.mxu0
    %v2165 = vpop.f32.mrf.mxu0
    %v2166 = vpop.f32.mrf.mxu0
    %2167 = vdwg.mxu0
    %2168 = vrot.lane.b32.xlu0 %v1896, 64
    %v2169 = vpop.permute.xlu0 %2168
    %v2170 = vrot.slane %v2169, 4
    %v2171 = vpack.c.b16 %v1881, %v1881
    %2172 = vrot.lane.b32.xlu0 %v2171, 64
    %v2173 = vpop.permute.xlu0 %2172
    %v2175 = vsel %vm1902, %v2173, 0
    %v2178 = vsel %vm1902, %v2170, 0
    %2180 = vmatprep.subr.bf16.mxu0 0
    %2181 = vmatpush1.bf16.xpose.msra.mxu0 0
    %2182 = vmatprep.subr.bf16.mxu0 0
    %2183 = vmatpush1.bf16.xpose.msra.mxu0 0
    %2184 = vmatprep.subr.bf16.mxu0 0
    %2185 = vmatpush1.bf16.xpose.msra.mxu0 0
    %2186 = vmatprep.subr.bf16.mxu0 0
    %2187 = vmatpush1.bf16.xpose.msra.mxu0 0
    %2188 = vmatprep.subr.bf16.mxu0 0
    %2189 = vmatpush1.bf16.xpose.msra.mxu0 0
    %2190 = vmatprep.subr.bf16.mxu0 0
    %2191 = vmatpush1.bf16.xpose.msra.mxu0 0
    %2192 = vmatprep.subr.bf16.mxu0 0
    %2193 = vmatpush1.bf16.xpose.msra.mxu0 0
    %2194 = vmatprep.subr.bf16.mxu0 0
    %2195 = vmatpush1.bf16.xpose.msra.mxu0 %v2178
    %2196 = vmatprep.subr.bf16.mxu0 0
    %2197 = vmatpush2.bf16.xpose.msra.mxu0 0
    %2198 = vmatprep.subr.bf16.mxu0 0
    %2199 = vmatpush2.bf16.xpose.msra.mxu0 0
    %2200 = vmatprep.subr.bf16.mxu0 0
    %2201 = vmatpush2.bf16.xpose.msra.mxu0 0
    %2202 = vmatprep.subr.bf16.mxu0 0
    %2203 = vmatpush2.bf16.xpose.msra.mxu0 0
    %2204 = vmatprep.subr.bf16.mxu0 0
    %2205 = vmatpush2.bf16.xpose.msra.mxu0 0
    %2206 = vmatprep.subr.bf16.mxu0 0
    %2207 = vmatpush2.bf16.xpose.msra.mxu0 0
    %2208 = vmatprep.subr.bf16.mxu0 0
    %2209 = vmatpush2.bf16.xpose.msra.mxu0 0
    %2210 = vmatprep.subr.bf16.mxu0 0
    %2211 = vmatpush2.bf16.xpose.msra.mxu0 0
    %2212 = vmatprep.mubr.bf16.mxu0 0
    %2213 = vmatmul.mubr.bf16.gmra.mxu0 %v2175
    %v2214 = vpop.f32.mrf.mxu0
    %v2215 = vadd.f32 %v1900, %v2214
    %v2216 = vpop.f32.mrf.mxu0
    %v2217 = vpop.f32.mrf.mxu0
    %v2218 = vpop.f32.mrf.mxu0
    %2219 = vdwg.mxu0
    %v2220 = vsel %vm1996, %v2163, -inf
    %2221 = vmax.xlane.f32.xlu0 %v2220
    %v2222 = vpop.xlane.xlu0 %2221
    %v2223 = vsel %vm1996, %v2215, -inf
    %2224 = vmax.xlane.f32.xlu0 %v2223
    %v2225 = vpop.xlane.xlu0 %2224
    %v2226 = vsub.f32 %v2163, %v2222
    %v2227 = vsub.f32 %v2215, %v2225
    %v2228 = vmul.f32 %v2226, 1.442695
    %v2229 = vpow.pop %v2228
    %v2230 = vmul.f32 %v2227, 1.442695
    %v2231 = vpow.pop %v2230
    %v2232 = vsel %vm1996, %v2229, 0.0
    %2233 = vadd.xlane.f32.xlu0 %v2232
    %v2234 = vpop.xlane.xlu0 %2233
    %v2235 = vsel %vm1996, %v2231, 0.0
    %2236 = vadd.xlane.f32.xlu0 %v2235
    %v2237 = vpop.xlane.xlu0 %2236
    %v2238 = vpack.c.bf16 %v2229, %v2229
    %v2239 = vpack.c.bf16 %v2231, %v2231
    %v2240 = vrcp.pop %v2234
    %v2241 = vrcp.pop %v2237
    %v2242 = vpack.c.b16 %v1878, %v1878
    %2243 = vrot.lane.b32.xlu0 %v2242, 64
    %v2244 = vpop.permute.xlu0 %2243
    %v2246 = vsel %vm1996, %v2238, 0
    %v2249 = vsel %vm2022, %v2244, 0
    %2251 = vmatprep.subr.bf16.mxu0 0
    %2252 = vmatpush1.bf16.msra.mxu0 0
    %2253 = vmatprep.subr.bf16.mxu0 0
    %2254 = vmatpush1.bf16.msra.mxu0 0
    %2255 = vmatprep.subr.bf16.mxu0 0
    %2256 = vmatpush1.bf16.msra.mxu0 0
    %2257 = vmatprep.subr.bf16.mxu0 0
    %2258 = vmatpush1.bf16.msra.mxu0 0
    %2259 = vmatprep.subr.bf16.mxu0 0
    %2260 = vmatpush1.bf16.msra.mxu0 0
    %2261 = vmatprep.subr.bf16.mxu0 0
    %2262 = vmatpush1.bf16.msra.mxu0 0
    %2263 = vmatprep.subr.bf16.mxu0 0
    %2264 = vmatpush1.bf16.msra.mxu0 0
    %2265 = vmatprep.subr.bf16.mxu0 0
    %2266 = vmatpush1.bf16.msra.mxu0 %v2249
    %2267 = vmatprep.subr.bf16.mxu0 0
    %2268 = vmatpush2.bf16.msra.mxu0 0
    %2269 = vmatprep.subr.bf16.mxu0 0
    %2270 = vmatpush2.bf16.msra.mxu0 0
    %2271 = vmatprep.subr.bf16.mxu0 0
    %2272 = vmatpush2.bf16.msra.mxu0 0
    %2273 = vmatprep.subr.bf16.mxu0 0
    %2274 = vmatpush2.bf16.msra.mxu0 0
    %2275 = vmatprep.subr.bf16.mxu0 0
    %2276 = vmatpush2.bf16.msra.mxu0 0
    %2277 = vmatprep.subr.bf16.mxu0 0
    %2278 = vmatpush2.bf16.msra.mxu0 0
    %2279 = vmatprep.subr.bf16.mxu0 0
    %2280 = vmatpush2.bf16.msra.mxu0 0
    %2281 = vmatprep.subr.bf16.mxu0 0
    %2282 = vmatpush2.bf16.msra.mxu0 0
    %2283 = vmatprep.mubr.bf16.mxu0 0
    %2284 = vmatmul.mubr.bf16.gmra.mxu0 %v2246
    %v2285 = vpop.f32.mrf.mxu0
    %v2286 = vadd.f32 0.0, %v2285
    %v2287 = vpop.f32.mrf.mxu0
    %v2288 = vpop.f32.mrf.mxu0
    %v2289 = vpop.f32.mrf.mxu0
    %2290 = vdwg.mxu0
    %v2291 = vpack.c.b16 %v1887, %v1887
    %2292 = vrot.lane.b32.xlu0 %v2291, 64
    %v2293 = vpop.permute.xlu0 %2292
    %v2295 = vsel %vm1996, %v2239, 0
    %v2298 = vsel %vm2022, %v2293, 0
    %2300 = vmatprep.subr.bf16.mxu0 0
    %2301 = vmatpush1.bf16.msra.mxu0 0
    %2302 = vmatprep.subr.bf16.mxu0 0
    %2303 = vmatpush1.bf16.msra.mxu0 0
    %2304 = vmatprep.subr.bf16.mxu0 0
    %2305 = vmatpush1.bf16.msra.mxu0 0
    %2306 = vmatprep.subr.bf16.mxu0 0
    %2307 = vmatpush1.bf16.msra.mxu0 0
    %2308 = vmatprep.subr.bf16.mxu0 0
    %2309 = vmatpush1.bf16.msra.mxu0 0
    %2310 = vmatprep.subr.bf16.mxu0 0
    %2311 = vmatpush1.bf16.msra.mxu0 0
    %2312 = vmatprep.subr.bf16.mxu0 0
    %2313 = vmatpush1.bf16.msra.mxu0 0
    %2314 = vmatprep.subr.bf16.mxu0 0
    %2315 = vmatpush1.bf16.msra.mxu0 %v2298
    %2316 = vmatprep.subr.bf16.mxu0 0
    %2317 = vmatpush2.bf16.msra.mxu0 0
    %2318 = vmatprep.subr.bf16.mxu0 0
    %2319 = vmatpush2.bf16.msra.mxu0 0
    %2320 = vmatprep.subr.bf16.mxu0 0
    %2321 = vmatpush2.bf16.msra.mxu0 0
    %2322 = vmatprep.subr.bf16.mxu0 0
    %2323 = vmatpush2.bf16.msra.mxu0 0
    %2324 = vmatprep.subr.bf16.mxu0 0
    %2325 = vmatpush2.bf16.msra.mxu0 0
    %2326 = vmatprep.subr.bf16.mxu0 0
    %2327 = vmatpush2.bf16.msra.mxu0 0
    %2328 = vmatprep.subr.bf16.mxu0 0
    %2329 = vmatpush2.bf16.msra.mxu0 0
    %2330 = vmatprep.subr.bf16.mxu0 0
    %2331 = vmatpush2.bf16.msra.mxu0 0
    %2332 = vmatprep.mubr.bf16.mxu0 0
    %2333 = vmatmul.mubr.bf16.gmra.mxu0 %v2295
    %v2334 = vpop.f32.mrf.mxu0
    %v2335 = vadd.f32 0.0, %v2334
    %v2336 = vpop.f32.mrf.mxu0
    %v2337 = vpop.f32.mrf.mxu0
    %v2338 = vpop.f32.mrf.mxu0
    %2339 = vdwg.mxu0
    %v2340 = vmul.f32 %v2286, %v2240
    %v2341 = vmul.f32 %v2335, %v2241
    %v2342 = vpack.c.bf16 %v2340, %v2340
    %v2343 = vpack.c.bf16 %v2341, %v2341
    %2346 = vrot.lane.b32.xlu0 %v2342, 64
    %v2347 = vpop.permute.xlu0 %2346
    %2348 = vrot.lane.b32.xlu0 %v2343, 64
    %v2349 = vpop.permute.xlu0 %2348
    %v2352 = vsel %vm1902, %v2114, %v2347
    %v2356 = vsel %vm1902, %v2115, %v2349
    %2358 = vst [vmem:[#allocation2] sm:$0xf] %v2352
    %2359 = vst [vmem:[#allocation2 + $0xc] sm:$0xf] %v2356
    %v2360 = vrot.slane %v1890, 4
    %v2362 = vsel %vm1902, %v2360, 0
    %v2365 = vsel %vm1902, %v1892, 0
    %2367 = vmatprep.subr.bf16.mxu0 0
    %2368 = vmatpush1.bf16.xpose.msra.mxu0 0
    %2369 = vmatprep.subr.bf16.mxu0 0
    %2370 = vmatpush1.bf16.xpose.msra.mxu0 0
    %2371 = vmatprep.subr.bf16.mxu0 0
    %2372 = vmatpush1.bf16.xpose.msra.mxu0 0
    %2373 = vmatprep.subr.bf16.mxu0 0
    %2374 = vmatpush1.bf16.xpose.msra.mxu0 0
    %2375 = vmatprep.subr.bf16.mxu0 0
    %2376 = vmatpush1.bf16.xpose.msra.mxu0 0
    %2377 = vmatprep.subr.bf16.mxu0 0
    %2378 = vmatpush1.bf16.xpose.msra.mxu0 0
    %2379 = vmatprep.subr.bf16.mxu0 0
    %2380 = vmatpush1.bf16.xpose.msra.mxu0 0
    %2381 = vmatprep.subr.bf16.mxu0 0
    %2382 = vmatpush1.bf16.xpose.msra.mxu0 %v2365
    %2383 = vmatprep.subr.bf16.mxu0 0
    %2384 = vmatpush2.bf16.xpose.msra.mxu0 0
    %2385 = vmatprep.subr.bf16.mxu0 0
    %2386 = vmatpush2.bf16.xpose.msra.mxu0 0
    %2387 = vmatprep.subr.bf16.mxu0 0
    %2388 = vmatpush2.bf16.xpose.msra.mxu0 0
    %2389 = vmatprep.subr.bf16.mxu0 0
    %2390 = vmatpush2.bf16.xpose.msra.mxu0 0
    %2391 = vmatprep.subr.bf16.mxu0 0
    %2392 = vmatpush2.bf16.xpose.msra.mxu0 0
    %2393 = vmatprep.subr.bf16.mxu0 0
    %2394 = vmatpush2.bf16.xpose.msra.mxu0 0
    %2395 = vmatprep.subr.bf16.mxu0 0
    %2396 = vmatpush2.bf16.xpose.msra.mxu0 0
    %2397 = vmatprep.subr.bf16.mxu0 0
    %2398 = vmatpush2.bf16.xpose.msra.mxu0 0
    %2399 = vmatprep.mubr.bf16.mxu0 0
    %2400 = vmatmul.mubr.bf16.gmra.mxu0 %v2362
    %v2401 = vpop.f32.mrf.mxu0
    %v2402 = vadd.f32 %v1900, %v2401
    %v2403 = vpop.f32.mrf.mxu0
    %v2404 = vpop.f32.mrf.mxu0
    %v2405 = vpop.f32.mrf.mxu0
    %2406 = vdwg.mxu0
    %v2407 = vrot.slane %v1895, 4
    %v2409 = vsel %vm1902, %v2407, 0
    %v2412 = vsel %vm1902, %v1897, 0
    %2414 = vmatprep.subr.bf16.mxu0 0
    %2415 = vmatpush1.bf16.xpose.msra.mxu0 0
    %2416 = vmatprep.subr.bf16.mxu0 0
    %2417 = vmatpush1.bf16.xpose.msra.mxu0 0
    %2418 = vmatprep.subr.bf16.mxu0 0
    %2419 = vmatpush1.bf16.xpose.msra.mxu0 0
    %2420 = vmatprep.subr.bf16.mxu0 0
    %2421 = vmatpush1.bf16.xpose.msra.mxu0 0
    %2422 = vmatprep.subr.bf16.mxu0 0
    %2423 = vmatpush1.bf16.xpose.msra.mxu0 0
    %2424 = vmatprep.subr.bf16.mxu0 0
    %2425 = vmatpush1.bf16.xpose.msra.mxu0 0
    %2426 = vmatprep.subr.bf16.mxu0 0
    %2427 = vmatpush1.bf16.xpose.msra.mxu0 0
    %2428 = vmatprep.subr.bf16.mxu0 0
    %2429 = vmatpush1.bf16.xpose.msra.mxu0 %v2412
    %2430 = vmatprep.subr.bf16.mxu0 0
    %2431 = vmatpush2.bf16.xpose.msra.mxu0 0
    %2432 = vmatprep.subr.bf16.mxu0 0
    %2433 = vmatpush2.bf16.xpose.msra.mxu0 0
    %2434 = vmatprep.subr.bf16.mxu0 0
    %2435 = vmatpush2.bf16.xpose.msra.mxu0 0
    %2436 = vmatprep.subr.bf16.mxu0 0
    %2437 = vmatpush2.bf16.xpose.msra.mxu0 0
    %2438 = vmatprep.subr.bf16.mxu0 0
    %2439 = vmatpush2.bf16.xpose.msra.mxu0 0
    %2440 = vmatprep.subr.bf16.mxu0 0
    %2441 = vmatpush2.bf16.xpose.msra.mxu0 0
    %2442 = vmatprep.subr.bf16.mxu0 0
    %2443 = vmatpush2.bf16.xpose.msra.mxu0 0
    %2444 = vmatprep.subr.bf16.mxu0 0
    %2445 = vmatpush2.bf16.xpose.msra.mxu0 0
    %2446 = vmatprep.mubr.bf16.mxu0 0
    %2447 = vmatmul.mubr.bf16.gmra.mxu0 %v2409
    %v2448 = vpop.f32.mrf.mxu0
    %v2449 = vadd.f32 %v1900, %v2448
    %v2450 = vpop.f32.mrf.mxu0
    %v2451 = vpop.f32.mrf.mxu0
    %v2452 = vpop.f32.mrf.mxu0
    %2453 = vdwg.mxu0
    %v2454 = vsel %vm1996, %v2402, -inf
    %2455 = vmax.xlane.f32.xlu0 %v2454
    %v2456 = vpop.xlane.xlu0 %2455
    %v2457 = vsel %vm1996, %v2449, -inf
    %2458 = vmax.xlane.f32.xlu0 %v2457
    %v2459 = vpop.xlane.xlu0 %2458
    %v2460 = vsub.f32 %v2402, %v2456
    %v2461 = vsub.f32 %v2449, %v2459
    %v2462 = vmul.f32 %v2460, 1.442695
    %v2463 = vpow.pop %v2462
    %v2464 = vmul.f32 %v2461, 1.442695
    %v2465 = vpow.pop %v2464
    %v2466 = vsel %vm1996, %v2463, 0.0
    %2467 = vadd.xlane.f32.xlu0 %v2466
    %v2468 = vpop.xlane.xlu0 %2467
    %v2469 = vsel %vm1996, %v2465, 0.0
    %2470 = vadd.xlane.f32.xlu0 %v2469
    %v2471 = vpop.xlane.xlu0 %2470
    %v2472 = vpack.c.bf16 %v2463, %v2463
    %v2473 = vpack.c.bf16 %v2465, %v2465
    %v2474 = vrcp.pop %v2468
    %v2475 = vrcp.pop %v2471
    %v2476 = vrot.slane %v1893, 4
    %v2478 = vsel %vm1996, %v2472, 0
    %v2481 = vsel %vm2022, %v2476, 0
    %2483 = vmatprep.subr.bf16.mxu0 0
    %2484 = vmatpush1.bf16.msra.mxu0 0
    %2485 = vmatprep.subr.bf16.mxu0 0
    %2486 = vmatpush1.bf16.msra.mxu0 0
    %2487 = vmatprep.subr.bf16.mxu0 0
    %2488 = vmatpush1.bf16.msra.mxu0 0
    %2489 = vmatprep.subr.bf16.mxu0 0
    %2490 = vmatpush1.bf16.msra.mxu0 0
    %2491 = vmatprep.subr.bf16.mxu0 0
    %2492 = vmatpush1.bf16.msra.mxu0 0
    %2493 = vmatprep.subr.bf16.mxu0 0
    %2494 = vmatpush1.bf16.msra.mxu0 0
    %2495 = vmatprep.subr.bf16.mxu0 0
    %2496 = vmatpush1.bf16.msra.mxu0 0
    %2497 = vmatprep.subr.bf16.mxu0 0
    %2498 = vmatpush1.bf16.msra.mxu0 %v2481
    %2499 = vmatprep.subr.bf16.mxu0 0
    %2500 = vmatpush2.bf16.msra.mxu0 0
    %2501 = vmatprep.subr.bf16.mxu0 0
    %2502 = vmatpush2.bf16.msra.mxu0 0
    %2503 = vmatprep.subr.bf16.mxu0 0
    %2504 = vmatpush2.bf16.msra.mxu0 0
    %2505 = vmatprep.subr.bf16.mxu0 0
    %2506 = vmatpush2.bf16.msra.mxu0 0
    %2507 = vmatprep.subr.bf16.mxu0 0
    %2508 = vmatpush2.bf16.msra.mxu0 0
    %2509 = vmatprep.subr.bf16.mxu0 0
    %2510 = vmatpush2.bf16.msra.mxu0 0
    %2511 = vmatprep.subr.bf16.mxu0 0
    %2512 = vmatpush2.bf16.msra.mxu0 0
    %2513 = vmatprep.subr.bf16.mxu0 0
    %2514 = vmatpush2.bf16.msra.mxu0 0
    %2515 = vmatprep.mubr.bf16.mxu0 0
    %2516 = vmatmul.mubr.bf16.gmra.mxu0 %v2478
    %v2517 = vpop.f32.mrf.mxu0
    %v2518 = vadd.f32 0.0, %v2517
    %v2519 = vpop.f32.mrf.mxu0
    %v2520 = vpop.f32.mrf.mxu0
    %v2521 = vpop.f32.mrf.mxu0
    %2522 = vdwg.mxu0
    %v2523 = vrot.slane %v1898, 4
    %v2525 = vsel %vm1996, %v2473, 0
    %v2528 = vsel %vm2022, %v2523, 0
    %2530 = vmatprep.subr.bf16.mxu0 0
    %2531 = vmatpush1.bf16.msra.mxu0 0
    %2532 = vmatprep.subr.bf16.mxu0 0
    %2533 = vmatpush1.bf16.msra.mxu0 0
    %2534 = vmatprep.subr.bf16.mxu0 0
    %2535 = vmatpush1.bf16.msra.mxu0 0
    %2536 = vmatprep.subr.bf16.mxu0 0
    %2537 = vmatpush1.bf16.msra.mxu0 0
    %2538 = vmatprep.subr.bf16.mxu0 0
    %2539 = vmatpush1.bf16.msra.mxu0 0
    %2540 = vmatprep.subr.bf16.mxu0 0
    %2541 = vmatpush1.bf16.msra.mxu0 0
    %2542 = vmatprep.subr.bf16.mxu0 0
    %2543 = vmatpush1.bf16.msra.mxu0 0
    %2544 = vmatprep.subr.bf16.mxu0 0
    %2545 = vmatpush1.bf16.msra.mxu0 %v2528
    %2546 = vmatprep.subr.bf16.mxu0 0
    %2547 = vmatpush2.bf16.msra.mxu0 0
    %2548 = vmatprep.subr.bf16.mxu0 0
    %2549 = vmatpush2.bf16.msra.mxu0 0
    %2550 = vmatprep.subr.bf16.mxu0 0
    %2551 = vmatpush2.bf16.msra.mxu0 0
    %2552 = vmatprep.subr.bf16.mxu0 0
    %2553 = vmatpush2.bf16.msra.mxu0 0
    %2554 = vmatprep.subr.bf16.mxu0 0
    %2555 = vmatpush2.bf16.msra.mxu0 0
    %2556 = vmatprep.subr.bf16.mxu0 0
    %2557 = vmatpush2.bf16.msra.mxu0 0
    %2558 = vmatprep.subr.bf16.mxu0 0
    %2559 = vmatpush2.bf16.msra.mxu0 0
    %2560 = vmatprep.subr.bf16.mxu0 0
    %2561 = vmatpush2.bf16.msra.mxu0 0
    %2562 = vmatprep.mubr.bf16.mxu0 0
    %2563 = vmatmul.mubr.bf16.gmra.mxu0 %v2525
    %v2564 = vpop.f32.mrf.mxu0
    %v2565 = vadd.f32 0.0, %v2564
    %v2566 = vpop.f32.mrf.mxu0
    %v2567 = vpop.f32.mrf.mxu0
    %v2568 = vpop.f32.mrf.mxu0
    %2569 = vdwg.mxu0
    %v2570 = vmul.f32 %v2518, %v2474
    %v2571 = vmul.f32 %v2565, %v2475
    %v2572 = vpack.c.bf16 %v2570, %v2570
    %v2573 = vpack.c.bf16 %v2571, %v2571
    %2574 = vrot.lane.b32.xlu0 %v1890, 64
    %v2575 = vpop.permute.xlu0 %2574
    %v2576 = vrot.slane %v2575, 4
    %v2577 = vpack.c.b16 %v1876, %v1876
    %2578 = vrot.lane.b32.xlu0 %v2577, 64
    %v2579 = vpop.permute.xlu0 %2578
    %v2581 = vsel %vm1902, %v2576, 0
    %v2584 = vsel %vm1902, %v2579, 0
    %2586 = vmatprep.subr.bf16.mxu0 0
    %2587 = vmatpush1.bf16.xpose.msra.mxu0 0
    %2588 = vmatprep.subr.bf16.mxu0 0
    %2589 = vmatpush1.bf16.xpose.msra.mxu0 0
    %2590 = vmatprep.subr.bf16.mxu0 0
    %2591 = vmatpush1.bf16.xpose.msra.mxu0 0
    %2592 = vmatprep.subr.bf16.mxu0 0
    %2593 = vmatpush1.bf16.xpose.msra.mxu0 0
    %2594 = vmatprep.subr.bf16.mxu0 0
    %2595 = vmatpush1.bf16.xpose.msra.mxu0 0
    %2596 = vmatprep.subr.bf16.mxu0 0
    %2597 = vmatpush1.bf16.xpose.msra.mxu0 0
    %2598 = vmatprep.subr.bf16.mxu0 0
    %2599 = vmatpush1.bf16.xpose.msra.mxu0 0
    %2600 = vmatprep.subr.bf16.mxu0 0
    %2601 = vmatpush1.bf16.xpose.msra.mxu0 %v2584
    %2602 = vmatprep.subr.bf16.mxu0 0
    %2603 = vmatpush2.bf16.xpose.msra.mxu0 0
    %2604 = vmatprep.subr.bf16.mxu0 0
    %2605 = vmatpush2.bf16.xpose.msra.mxu0 0
    %2606 = vmatprep.subr.bf16.mxu0 0
    %2607 = vmatpush2.bf16.xpose.msra.mxu0 0
    %2608 = vmatprep.subr.bf16.mxu0 0
    %2609 = vmatpush2.bf16.xpose.msra.mxu0 0
    %2610 = vmatprep.subr.bf16.mxu0 0
    %2611 = vmatpush2.bf16.xpose.msra.mxu0 0
    %2612 = vmatprep.subr.bf16.mxu0 0
    %2613 = vmatpush2.bf16.xpose.msra.mxu0 0
    %2614 = vmatprep.subr.bf16.mxu0 0
    %2615 = vmatpush2.bf16.xpose.msra.mxu0 0
    %2616 = vmatprep.subr.bf16.mxu0 0
    %2617 = vmatpush2.bf16.xpose.msra.mxu0 0
    %2618 = vmatprep.mubr.bf16.mxu0 0
    %2619 = vmatmul.mubr.bf16.gmra.mxu0 %v2581
    %v2620 = vpop.f32.mrf.mxu0
    %v2621 = vadd.f32 %v1900, %v2620
    %v2622 = vpop.f32.mrf.mxu0
    %v2623 = vpop.f32.mrf.mxu0
    %v2624 = vpop.f32.mrf.mxu0
    %2625 = vdwg.mxu0
    %2626 = vrot.lane.b32.xlu0 %v1895, 64
    %v2627 = vpop.permute.xlu0 %2626
    %v2628 = vrot.slane %v2627, 4
    %v2629 = vpack.c.b16 %v1885, %v1885
    %2630 = vrot.lane.b32.xlu0 %v2629, 64
    %v2631 = vpop.permute.xlu0 %2630
    %v2633 = vsel %vm1902, %v2628, 0
    %v2636 = vsel %vm1902, %v2631, 0
    %2638 = vmatprep.subr.bf16.mxu0 0
    %2639 = vmatpush1.bf16.xpose.msra.mxu0 0
    %2640 = vmatprep.subr.bf16.mxu0 0
    %2641 = vmatpush1.bf16.xpose.msra.mxu0 0
    %2642 = vmatprep.subr.bf16.mxu0 0
    %2643 = vmatpush1.bf16.xpose.msra.mxu0 0
    %2644 = vmatprep.subr.bf16.mxu0 0
    %2645 = vmatpush1.bf16.xpose.msra.mxu0 0
    %2646 = vmatprep.subr.bf16.mxu0 0
    %2647 = vmatpush1.bf16.xpose.msra.mxu0 0
    %2648 = vmatprep.subr.bf16.mxu0 0
    %2649 = vmatpush1.bf16.xpose.msra.mxu0 0
    %2650 = vmatprep.subr.bf16.mxu0 0
    %2651 = vmatpush1.bf16.xpose.msra.mxu0 0
    %2652 = vmatprep.subr.bf16.mxu0 0
    %2653 = vmatpush1.bf16.xpose.msra.mxu0 %v2636
    %2654 = vmatprep.subr.bf16.mxu0 0
    %2655 = vmatpush2.bf16.xpose.msra.mxu0 0
    %2656 = vmatprep.subr.bf16.mxu0 0
    %2657 = vmatpush2.bf16.xpose.msra.mxu0 0
    %2658 = vmatprep.subr.bf16.mxu0 0
    %2659 = vmatpush2.bf16.xpose.msra.mxu0 0
    %2660 = vmatprep.subr.bf16.mxu0 0
    %2661 = vmatpush2.bf16.xpose.msra.mxu0 0
    %2662 = vmatprep.subr.bf16.mxu0 0
    %2663 = vmatpush2.bf16.xpose.msra.mxu0 0
    %2664 = vmatprep.subr.bf16.mxu0 0
    %2665 = vmatpush2.bf16.xpose.msra.mxu0 0
    %2666 = vmatprep.subr.bf16.mxu0 0
    %2667 = vmatpush2.bf16.xpose.msra.mxu0 0
    %2668 = vmatprep.subr.bf16.mxu0 0
    %2669 = vmatpush2.bf16.xpose.msra.mxu0 0
    %2670 = vmatprep.mubr.bf16.mxu0 0
    %2671 = vmatmul.mubr.bf16.gmra.mxu0 %v2633
    %v2672 = vpop.f32.mrf.mxu0
    %v2673 = vadd.f32 %v1900, %v2672
    %v2674 = vpop.f32.mrf.mxu0
    %v2675 = vpop.f32.mrf.mxu0
    %v2676 = vpop.f32.mrf.mxu0
    %2677 = vdwg.mxu0
    %v2678 = vsel %vm1996, %v2621, -inf
    %2679 = vmax.xlane.f32.xlu0 %v2678
    %v2680 = vpop.xlane.xlu0 %2679
    %v2681 = vsel %vm1996, %v2673, -inf
    %2682 = vmax.xlane.f32.xlu0 %v2681
    %v2683 = vpop.xlane.xlu0 %2682
    %v2684 = vsub.f32 %v2621, %v2680
    %v2685 = vsub.f32 %v2673, %v2683
    %v2686 = vmul.f32 %v2684, 1.442695
    %v2687 = vpow.pop %v2686
    %v2688 = vmul.f32 %v2685, 1.442695
    %v2689 = vpow.pop %v2688
    %v2690 = vsel %vm1996, %v2687, 0.0
    %2691 = vadd.xlane.f32.xlu0 %v2690
    %v2692 = vpop.xlane.xlu0 %2691
    %v2693 = vsel %vm1996, %v2689, 0.0
    %2694 = vadd.xlane.f32.xlu0 %v2693
    %v2695 = vpop.xlane.xlu0 %2694
    %v2696 = vpack.c.bf16 %v2687, %v2687
    %v2697 = vpack.c.bf16 %v2689, %v2689
    %v2698 = vrcp.pop %v2692
    %v2699 = vrcp.pop %v2695
    %2700 = vrot.lane.b32.xlu0 %v1893, 64
    %v2701 = vpop.permute.xlu0 %2700
    %v2702 = vrot.slane %v2701, 4
    %v2704 = vsel %vm1996, %v2696, 0
    %v2707 = vsel %vm2022, %v2702, 0
    %2709 = vmatprep.subr.bf16.mxu0 0
    %2710 = vmatpush1.bf16.msra.mxu0 0
    %2711 = vmatprep.subr.bf16.mxu0 0
    %2712 = vmatpush1.bf16.msra.mxu0 0
    %2713 = vmatprep.subr.bf16.mxu0 0
    %2714 = vmatpush1.bf16.msra.mxu0 0
    %2715 = vmatprep.subr.bf16.mxu0 0
    %2716 = vmatpush1.bf16.msra.mxu0 0
    %2717 = vmatprep.subr.bf16.mxu0 0
    %2718 = vmatpush1.bf16.msra.mxu0 0
    %2719 = vmatprep.subr.bf16.mxu0 0
    %2720 = vmatpush1.bf16.msra.mxu0 0
    %2721 = vmatprep.subr.bf16.mxu0 0
    %2722 = vmatpush1.bf16.msra.mxu0 0
    %2723 = vmatprep.subr.bf16.mxu0 0
    %2724 = vmatpush1.bf16.msra.mxu0 %v2707
    %2725 = vmatprep.subr.bf16.mxu0 0
    %2726 = vmatpush2.bf16.msra.mxu0 0
    %2727 = vmatprep.subr.bf16.mxu0 0
    %2728 = vmatpush2.bf16.msra.mxu0 0
    %2729 = vmatprep.subr.bf16.mxu0 0
    %2730 = vmatpush2.bf16.msra.mxu0 0
    %2731 = vmatprep.subr.bf16.mxu0 0
    %2732 = vmatpush2.bf16.msra.mxu0 0
    %2733 = vmatprep.subr.bf16.mxu0 0
    %2734 = vmatpush2.bf16.msra.mxu0 0
    %2735 = vmatprep.subr.bf16.mxu0 0
    %2736 = vmatpush2.bf16.msra.mxu0 0
    %2737 = vmatprep.subr.bf16.mxu0 0
    %2738 = vmatpush2.bf16.msra.mxu0 0
    %2739 = vmatprep.subr.bf16.mxu0 0
    %2740 = vmatpush2.bf16.msra.mxu0 0
    %2741 = vmatprep.mubr.bf16.mxu0 0
    %2742 = vmatmul.mubr.bf16.gmra.mxu0 %v2704
    %v2743 = vpop.f32.mrf.mxu0
    %v2744 = vadd.f32 0.0, %v2743
    %v2745 = vpop.f32.mrf.mxu0
    %v2746 = vpop.f32.mrf.mxu0
    %v2747 = vpop.f32.mrf.mxu0
    %2748 = vdwg.mxu0
    %2749 = vrot.lane.b32.xlu0 %v1898, 64
    %v2750 = vpop.permute.xlu0 %2749
    %v2751 = vrot.slane %v2750, 4
    %v2753 = vsel %vm1996, %v2697, 0
    %v2756 = vsel %vm2022, %v2751, 0
    %2758 = vmatprep.subr.bf16.mxu0 0
    %2759 = vmatpush1.bf16.msra.mxu0 0
    %2760 = vmatprep.subr.bf16.mxu0 0
    %2761 = vmatpush1.bf16.msra.mxu0 0
    %2762 = vmatprep.subr.bf16.mxu0 0
    %2763 = vmatpush1.bf16.msra.mxu0 0
    %2764 = vmatprep.subr.bf16.mxu0 0
    %2765 = vmatpush1.bf16.msra.mxu0 0
    %2766 = vmatprep.subr.bf16.mxu0 0
    %2767 = vmatpush1.bf16.msra.mxu0 0
    %2768 = vmatprep.subr.bf16.mxu0 0
    %2769 = vmatpush1.bf16.msra.mxu0 0
    %2770 = vmatprep.subr.bf16.mxu0 0
    %2771 = vmatpush1.bf16.msra.mxu0 0
    %2772 = vmatprep.subr.bf16.mxu0 0
    %2773 = vmatpush1.bf16.msra.mxu0 %v2756
    %2774 = vmatprep.subr.bf16.mxu0 0
    %2775 = vmatpush2.bf16.msra.mxu0 0
    %2776 = vmatprep.subr.bf16.mxu0 0
    %2777 = vmatpush2.bf16.msra.mxu0 0
    %2778 = vmatprep.subr.bf16.mxu0 0
    %2779 = vmatpush2.bf16.msra.mxu0 0
    %2780 = vmatprep.subr.bf16.mxu0 0
    %2781 = vmatpush2.bf16.msra.mxu0 0
    %2782 = vmatprep.subr.bf16.mxu0 0
    %2783 = vmatpush2.bf16.msra.mxu0 0
    %2784 = vmatprep.subr.bf16.mxu0 0
    %2785 = vmatpush2.bf16.msra.mxu0 0
    %2786 = vmatprep.subr.bf16.mxu0 0
    %2787 = vmatpush2.bf16.msra.mxu0 0
    %2788 = vmatprep.subr.bf16.mxu0 0
    %2789 = vmatpush2.bf16.msra.mxu0 0
    %2790 = vmatprep.mubr.bf16.mxu0 0
    %2791 = vmatmul.mubr.bf16.gmra.mxu0 %v2753
    %v2792 = vpop.f32.mrf.mxu0
    %v2793 = vadd.f32 0.0, %v2792
    %v2794 = vpop.f32.mrf.mxu0
    %v2795 = vpop.f32.mrf.mxu0
    %v2796 = vpop.f32.mrf.mxu0
    %2797 = vdwg.mxu0
    %v2798 = vmul.f32 %v2744, %v2698
    %v2799 = vmul.f32 %v2793, %v2699
    %v2800 = vpack.c.bf16 %v2798, %v2798
    %v2801 = vpack.c.bf16 %v2799, %v2799
    %2804 = vrot.lane.b32.xlu0 %v2800, 64
    %v2805 = vpop.permute.xlu0 %2804
    %2806 = vrot.lane.b32.xlu0 %v2801, 64
    %v2807 = vpop.permute.xlu0 %2806
    %v2810 = vsel %vm1902, %v2572, %v2805
    %v2814 = vsel %vm1902, %v2573, %v2807
    %2816 = vst [vmem:[#allocation2 + $0x4] sm:$0xf] %v2810
    %2817 = vst [vmem:[#allocation2 + $0x10] sm:$0xf] %v2814
    %v2818 = vrot.slane %v1892, 4
    %v2820 = vsel %vm1902, %v1891, 0
    %v2823 = vsel %vm1902, %v2818, 0
    %2825 = vmatprep.subr.bf16.mxu0 0
    %2826 = vmatpush1.bf16.xpose.msra.mxu0 0
    %2827 = vmatprep.subr.bf16.mxu0 0
    %2828 = vmatpush1.bf16.xpose.msra.mxu0 0
    %2829 = vmatprep.subr.bf16.mxu0 0
    %2830 = vmatpush1.bf16.xpose.msra.mxu0 0
    %2831 = vmatprep.subr.bf16.mxu0 0
    %2832 = vmatpush1.bf16.xpose.msra.mxu0 0
    %2833 = vmatprep.subr.bf16.mxu0 0
    %2834 = vmatpush1.bf16.xpose.msra.mxu0 0
    %2835 = vmatprep.subr.bf16.mxu0 0
    %2836 = vmatpush1.bf16.xpose.msra.mxu0 0
    %2837 = vmatprep.subr.bf16.mxu0 0
    %2838 = vmatpush1.bf16.xpose.msra.mxu0 0
    %2839 = vmatprep.subr.bf16.mxu0 0
    %2840 = vmatpush1.bf16.xpose.msra.mxu0 %v2823
    %2841 = vmatprep.subr.bf16.mxu0 0
    %2842 = vmatpush2.bf16.xpose.msra.mxu0 0
    %2843 = vmatprep.subr.bf16.mxu0 0
    %2844 = vmatpush2.bf16.xpose.msra.mxu0 0
    %2845 = vmatprep.subr.bf16.mxu0 0
    %2846 = vmatpush2.bf16.xpose.msra.mxu0 0
    %2847 = vmatprep.subr.bf16.mxu0 0
    %2848 = vmatpush2.bf16.xpose.msra.mxu0 0
    %2849 = vmatprep.subr.bf16.mxu0 0
    %2850 = vmatpush2.bf16.xpose.msra.mxu0 0
    %2851 = vmatprep.subr.bf16.mxu0 0
    %2852 = vmatpush2.bf16.xpose.msra.mxu0 0
    %2853 = vmatprep.subr.bf16.mxu0 0
    %2854 = vmatpush2.bf16.xpose.msra.mxu0 0
    %2855 = vmatprep.subr.bf16.mxu0 0
    %2856 = vmatpush2.bf16.xpose.msra.mxu0 0
    %2857 = vmatprep.mubr.bf16.mxu0 0
    %2858 = vmatmul.mubr.bf16.gmra.mxu0 %v2820
    %v2859 = vpop.f32.mrf.mxu0
    %v2860 = vadd.f32 %v1900, %v2859
    %v2861 = vpop.f32.mrf.mxu0
    %v2862 = vpop.f32.mrf.mxu0
    %v2863 = vpop.f32.mrf.mxu0
    %2864 = vdwg.mxu0
    %v2865 = vrot.slane %v1897, 4
    %v2867 = vsel %vm1902, %v1896, 0
    %v2870 = vsel %vm1902, %v2865, 0
    %2872 = vmatprep.subr.bf16.mxu0 0
    %2873 = vmatpush1.bf16.xpose.msra.mxu0 0
    %2874 = vmatprep.subr.bf16.mxu0 0
    %2875 = vmatpush1.bf16.xpose.msra.mxu0 0
    %2876 = vmatprep.subr.bf16.mxu0 0
    %2877 = vmatpush1.bf16.xpose.msra.mxu0 0
    %2878 = vmatprep.subr.bf16.mxu0 0
    %2879 = vmatpush1.bf16.xpose.msra.mxu0 0
    %2880 = vmatprep.subr.bf16.mxu0 0
    %2881 = vmatpush1.bf16.xpose.msra.mxu0 0
    %2882 = vmatprep.subr.bf16.mxu0 0
    %2883 = vmatpush1.bf16.xpose.msra.mxu0 0
    %2884 = vmatprep.subr.bf16.mxu0 0
    %2885 = vmatpush1.bf16.xpose.msra.mxu0 0
    %2886 = vmatprep.subr.bf16.mxu0 0
    %2887 = vmatpush1.bf16.xpose.msra.mxu0 %v2870
    %2888 = vmatprep.subr.bf16.mxu0 0
    %2889 = vmatpush2.bf16.xpose.msra.mxu0 0
    %2890 = vmatprep.subr.bf16.mxu0 0
    %2891 = vmatpush2.bf16.xpose.msra.mxu0 0
    %2892 = vmatprep.subr.bf16.mxu0 0
    %2893 = vmatpush2.bf16.xpose.msra.mxu0 0
    %2894 = vmatprep.subr.bf16.mxu0 0
    %2895 = vmatpush2.bf16.xpose.msra.mxu0 0
    %2896 = vmatprep.subr.bf16.mxu0 0
    %2897 = vmatpush2.bf16.xpose.msra.mxu0 0
    %2898 = vmatprep.subr.bf16.mxu0 0
    %2899 = vmatpush2.bf16.xpose.msra.mxu0 0
    %2900 = vmatprep.subr.bf16.mxu0 0
    %2901 = vmatpush2.bf16.xpose.msra.mxu0 0
    %2902 = vmatprep.subr.bf16.mxu0 0
    %2903 = vmatpush2.bf16.xpose.msra.mxu0 0
    %2904 = vmatprep.mubr.bf16.mxu0 0
    %2905 = vmatmul.mubr.bf16.gmra.mxu0 %v2867
    %v2906 = vpop.f32.mrf.mxu0
    %v2907 = vadd.f32 %v1900, %v2906
    %v2908 = vpop.f32.mrf.mxu0
    %v2909 = vpop.f32.mrf.mxu0
    %v2910 = vpop.f32.mrf.mxu0
    %2911 = vdwg.mxu0
    %v2912 = vsel %vm1996, %v2860, -inf
    %2913 = vmax.xlane.f32.xlu0 %v2912
    %v2914 = vpop.xlane.xlu0 %2913
    %v2915 = vsel %vm1996, %v2907, -inf
    %2916 = vmax.xlane.f32.xlu0 %v2915
    %v2917 = vpop.xlane.xlu0 %2916
    %v2918 = vsub.f32 %v2860, %v2914
    %v2919 = vsub.f32 %v2907, %v2917
    %v2920 = vmul.f32 %v2918, 1.442695
    %v2921 = vpow.pop %v2920
    %v2922 = vmul.f32 %v2919, 1.442695
    %v2923 = vpow.pop %v2922
    %v2924 = vsel %vm1996, %v2921, 0.0
    %2925 = vadd.xlane.f32.xlu0 %v2924
    %v2926 = vpop.xlane.xlu0 %2925
    %v2927 = vsel %vm1996, %v2923, 0.0
    %2928 = vadd.xlane.f32.xlu0 %v2927
    %v2929 = vpop.xlane.xlu0 %2928
    %v2930 = vpack.c.bf16 %v2921, %v2921
    %v2931 = vpack.c.bf16 %v2923, %v2923
    %v2932 = vrcp.pop %v2926
    %v2933 = vrcp.pop %v2929
    %v2935 = vsel %vm1996, %v2930, 0
    %v2938 = vsel %vm2022, %v1894, 0
    %2940 = vmatprep.subr.bf16.mxu0 0
    %2941 = vmatpush1.bf16.msra.mxu0 0
    %2942 = vmatprep.subr.bf16.mxu0 0
    %2943 = vmatpush1.bf16.msra.mxu0 0
    %2944 = vmatprep.subr.bf16.mxu0 0
    %2945 = vmatpush1.bf16.msra.mxu0 0
    %2946 = vmatprep.subr.bf16.mxu0 0
    %2947 = vmatpush1.bf16.msra.mxu0 0
    %2948 = vmatprep.subr.bf16.mxu0 0
    %2949 = vmatpush1.bf16.msra.mxu0 0
    %2950 = vmatprep.subr.bf16.mxu0 0
    %2951 = vmatpush1.bf16.msra.mxu0 0
    %2952 = vmatprep.subr.bf16.mxu0 0
    %2953 = vmatpush1.bf16.msra.mxu0 0
    %2954 = vmatprep.subr.bf16.mxu0 0
    %2955 = vmatpush1.bf16.msra.mxu0 %v2938
    %2956 = vmatprep.subr.bf16.mxu0 0
    %2957 = vmatpush2.bf16.msra.mxu0 0
    %2958 = vmatprep.subr.bf16.mxu0 0
    %2959 = vmatpush2.bf16.msra.mxu0 0
    %2960 = vmatprep.subr.bf16.mxu0 0
    %2961 = vmatpush2.bf16.msra.mxu0 0
    %2962 = vmatprep.subr.bf16.mxu0 0
    %2963 = vmatpush2.bf16.msra.mxu0 0
    %2964 = vmatprep.subr.bf16.mxu0 0
    %2965 = vmatpush2.bf16.msra.mxu0 0
    %2966 = vmatprep.subr.bf16.mxu0 0
    %2967 = vmatpush2.bf16.msra.mxu0 0
    %2968 = vmatprep.subr.bf16.mxu0 0
    %2969 = vmatpush2.bf16.msra.mxu0 0
    %2970 = vmatprep.subr.bf16.mxu0 0
    %2971 = vmatpush2.bf16.msra.mxu0 0
    %2972 = vmatprep.mubr.bf16.mxu0 0
    %2973 = vmatmul.mubr.bf16.gmra.mxu0 %v2935
    %v2974 = vpop.f32.mrf.mxu0
    %v2975 = vadd.f32 0.0, %v2974
    %v2976 = vpop.f32.mrf.mxu0
    %v2977 = vpop.f32.mrf.mxu0
    %v2978 = vpop.f32.mrf.mxu0
    %2979 = vdwg.mxu0
    %v2981 = vsel %vm1996, %v2931, 0
    %v2984 = vsel %vm2022, %v1899, 0
    %2986 = vmatprep.subr.bf16.mxu0 0
    %2987 = vmatpush1.bf16.msra.mxu0 0
    %2988 = vmatprep.subr.bf16.mxu0 0
    %2989 = vmatpush1.bf16.msra.mxu0 0
    %2990 = vmatprep.subr.bf16.mxu0 0
    %2991 = vmatpush1.bf16.msra.mxu0 0
    %2992 = vmatprep.subr.bf16.mxu0 0
    %2993 = vmatpush1.bf16.msra.mxu0 0
    %2994 = vmatprep.subr.bf16.mxu0 0
    %2995 = vmatpush1.bf16.msra.mxu0 0
    %2996 = vmatprep.subr.bf16.mxu0 0
    %2997 = vmatpush1.bf16.msra.mxu0 0
    %2998 = vmatprep.subr.bf16.mxu0 0
    %2999 = vmatpush1.bf16.msra.mxu0 0
    %3000 = vmatprep.subr.bf16.mxu0 0
    %3001 = vmatpush1.bf16.msra.mxu0 %v2984
    %3002 = vmatprep.subr.bf16.mxu0 0
    %3003 = vmatpush2.bf16.msra.mxu0 0
    %3004 = vmatprep.subr.bf16.mxu0 0
    %3005 = vmatpush2.bf16.msra.mxu0 0
    %3006 = vmatprep.subr.bf16.mxu0 0
    %3007 = vmatpush2.bf16.msra.mxu0 0
    %3008 = vmatprep.subr.bf16.mxu0 0
    %3009 = vmatpush2.bf16.msra.mxu0 0
    %3010 = vmatprep.subr.bf16.mxu0 0
    %3011 = vmatpush2.bf16.msra.mxu0 0
    %3012 = vmatprep.subr.bf16.mxu0 0
    %3013 = vmatpush2.bf16.msra.mxu0 0
    %3014 = vmatprep.subr.bf16.mxu0 0
    %3015 = vmatpush2.bf16.msra.mxu0 0
    %3016 = vmatprep.subr.bf16.mxu0 0
    %3017 = vmatpush2.bf16.msra.mxu0 0
    %3018 = vmatprep.mubr.bf16.mxu0 0
    %3019 = vmatmul.mubr.bf16.gmra.mxu0 %v2981
    %v3020 = vpop.f32.mrf.mxu0
    %v3021 = vadd.f32 0.0, %v3020
    %v3022 = vpop.f32.mrf.mxu0
    %v3023 = vpop.f32.mrf.mxu0
    %v3024 = vpop.f32.mrf.mxu0
    %3025 = vdwg.mxu0
    %v3026 = vmul.f32 %v2975, %v2932
    %v3027 = vmul.f32 %v3021, %v2933
    %v3028 = vpack.c.bf16 %v3026, %v3026
    %v3029 = vpack.c.bf16 %v3027, %v3027
    %3030 = vrot.lane.b32.xlu0 %v1892, 64
    %v3031 = vpop.permute.xlu0 %3030
    %v3032 = vrot.slane %v3031, 4
    %v3033 = vpack.c.b16 %v1874, %v1874
    %3034 = vrot.lane.b32.xlu0 %v3033, 64
    %v3035 = vpop.permute.xlu0 %3034
    %v3037 = vsel %vm1902, %v3035, 0
    %v3040 = vsel %vm1902, %v3032, 0
    %3042 = vmatprep.subr.bf16.mxu0 0
    %3043 = vmatpush1.bf16.xpose.msra.mxu0 0
    %3044 = vmatprep.subr.bf16.mxu0 0
    %3045 = vmatpush1.bf16.xpose.msra.mxu0 0
    %3046 = vmatprep.subr.bf16.mxu0 0
    %3047 = vmatpush1.bf16.xpose.msra.mxu0 0
    %3048 = vmatprep.subr.bf16.mxu0 0
    %3049 = vmatpush1.bf16.xpose.msra.mxu0 0
    %3050 = vmatprep.subr.bf16.mxu0 0
    %3051 = vmatpush1.bf16.xpose.msra.mxu0 0
    %3052 = vmatprep.subr.bf16.mxu0 0
    %3053 = vmatpush1.bf16.xpose.msra.mxu0 0
    %3054 = vmatprep.subr.bf16.mxu0 0
    %3055 = vmatpush1.bf16.xpose.msra.mxu0 0
    %3056 = vmatprep.subr.bf16.mxu0 0
    %3057 = vmatpush1.bf16.xpose.msra.mxu0 %v3040
    %3058 = vmatprep.subr.bf16.mxu0 0
    %3059 = vmatpush2.bf16.xpose.msra.mxu0 0
    %3060 = vmatprep.subr.bf16.mxu0 0
    %3061 = vmatpush2.bf16.xpose.msra.mxu0 0
    %3062 = vmatprep.subr.bf16.mxu0 0
    %3063 = vmatpush2.bf16.xpose.msra.mxu0 0
    %3064 = vmatprep.subr.bf16.mxu0 0
    %3065 = vmatpush2.bf16.xpose.msra.mxu0 0
    %3066 = vmatprep.subr.bf16.mxu0 0
    %3067 = vmatpush2.bf16.xpose.msra.mxu0 0
    %3068 = vmatprep.subr.bf16.mxu0 0
    %3069 = vmatpush2.bf16.xpose.msra.mxu0 0
    %3070 = vmatprep.subr.bf16.mxu0 0
    %3071 = vmatpush2.bf16.xpose.msra.mxu0 0
    %3072 = vmatprep.subr.bf16.mxu0 0
    %3073 = vmatpush2.bf16.xpose.msra.mxu0 0
    %3074 = vmatprep.mubr.bf16.mxu0 0
    %3075 = vmatmul.mubr.bf16.gmra.mxu0 %v3037
    %v3076 = vpop.f32.mrf.mxu0
    %v3077 = vadd.f32 %v1900, %v3076
    %v3078 = vpop.f32.mrf.mxu0
    %v3079 = vpop.f32.mrf.mxu0
    %v3080 = vpop.f32.mrf.mxu0
    %3081 = vdwg.mxu0
    %3082 = vrot.lane.b32.xlu0 %v1897, 64
    %v3083 = vpop.permute.xlu0 %3082
    %v3084 = vrot.slane %v3083, 4
    %v3085 = vpack.c.b16 %v1883, %v1883
    %3086 = vrot.lane.b32.xlu0 %v3085, 64
    %v3087 = vpop.permute.xlu0 %3086
    %v3089 = vsel %vm1902, %v3087, 0
    %v3092 = vsel %vm1902, %v3084, 0
    %3094 = vmatprep.subr.bf16.mxu0 0
    %3095 = vmatpush1.bf16.xpose.msra.mxu0 0
    %3096 = vmatprep.subr.bf16.mxu0 0
    %3097 = vmatpush1.bf16.xpose.msra.mxu0 0
    %3098 = vmatprep.subr.bf16.mxu0 0
    %3099 = vmatpush1.bf16.xpose.msra.mxu0 0
    %3100 = vmatprep.subr.bf16.mxu0 0
    %3101 = vmatpush1.bf16.xpose.msra.mxu0 0
    %3102 = vmatprep.subr.bf16.mxu0 0
    %3103 = vmatpush1.bf16.xpose.msra.mxu0 0
    %3104 = vmatprep.subr.bf16.mxu0 0
    %3105 = vmatpush1.bf16.xpose.msra.mxu0 0
    %3106 = vmatprep.subr.bf16.mxu0 0
    %3107 = vmatpush1.bf16.xpose.msra.mxu0 0
    %3108 = vmatprep.subr.bf16.mxu0 0
    %3109 = vmatpush1.bf16.xpose.msra.mxu0 %v3092
    %3110 = vmatprep.subr.bf16.mxu0 0
    %3111 = vmatpush2.bf16.xpose.msra.mxu0 0
    %3112 = vmatprep.subr.bf16.mxu0 0
    %3113 = vmatpush2.bf16.xpose.msra.mxu0 0
    %3114 = vmatprep.subr.bf16.mxu0 0
    %3115 = vmatpush2.bf16.xpose.msra.mxu0 0
    %3116 = vmatprep.subr.bf16.mxu0 0
    %3117 = vmatpush2.bf16.xpose.msra.mxu0 0
    %3118 = vmatprep.subr.bf16.mxu0 0
    %3119 = vmatpush2.bf16.xpose.msra.mxu0 0
    %3120 = vmatprep.subr.bf16.mxu0 0
    %3121 = vmatpush2.bf16.xpose.msra.mxu0 0
    %3122 = vmatprep.subr.bf16.mxu0 0
    %3123 = vmatpush2.bf16.xpose.msra.mxu0 0
    %3124 = vmatprep.subr.bf16.mxu0 0
    %3125 = vmatpush2.bf16.xpose.msra.mxu0 0
    %3126 = vmatprep.mubr.bf16.mxu0 0
    %3127 = vmatmul.mubr.bf16.gmra.mxu0 %v3089
    %v3128 = vpop.f32.mrf.mxu0
    %v3129 = vadd.f32 %v1900, %v3128
    %v3130 = vpop.f32.mrf.mxu0
    %v3131 = vpop.f32.mrf.mxu0
    %v3132 = vpop.f32.mrf.mxu0
    %3133 = vdwg.mxu0
    %v3134 = vsel %vm1996, %v3077, -inf
    %3135 = vmax.xlane.f32.xlu0 %v3134
    %v3136 = vpop.xlane.xlu0 %3135
    %v3137 = vsel %vm1996, %v3129, -inf
    %3138 = vmax.xlane.f32.xlu0 %v3137
    %v3139 = vpop.xlane.xlu0 %3138
    %v3140 = vsub.f32 %v3077, %v3136
    %v3141 = vsub.f32 %v3129, %v3139
    %v3142 = vmul.f32 %v3140, 1.442695
    %v3143 = vpow.pop %v3142
    %v3144 = vmul.f32 %v3141, 1.442695
    %v3145 = vpow.pop %v3144
    %v3146 = vsel %vm1996, %v3143, 0.0
    %3147 = vadd.xlane.f32.xlu0 %v3146
    %v3148 = vpop.xlane.xlu0 %3147
    %v3149 = vsel %vm1996, %v3145, 0.0
    %3150 = vadd.xlane.f32.xlu0 %v3149
    %v3151 = vpop.xlane.xlu0 %3150
    %v3152 = vpack.c.bf16 %v3143, %v3143
    %v3153 = vpack.c.bf16 %v3145, %v3145
    %v3154 = vrcp.pop %v3148
    %v3155 = vrcp.pop %v3151
    %3156 = vrot.lane.b32.xlu0 %v1894, 64
    %v3157 = vpop.permute.xlu0 %3156
    %v3159 = vsel %vm1996, %v3152, 0
    %v3162 = vsel %vm2022, %v3157, 0
    %3164 = vmatprep.subr.bf16.mxu0 0
    %3165 = vmatpush1.bf16.msra.mxu0 0
    %3166 = vmatprep.subr.bf16.mxu0 0
    %3167 = vmatpush1.bf16.msra.mxu0 0
    %3168 = vmatprep.subr.bf16.mxu0 0
    %3169 = vmatpush1.bf16.msra.mxu0 0
    %3170 = vmatprep.subr.bf16.mxu0 0
    %3171 = vmatpush1.bf16.msra.mxu0 0
    %3172 = vmatprep.subr.bf16.mxu0 0
    %3173 = vmatpush1.bf16.msra.mxu0 0
    %3174 = vmatprep.subr.bf16.mxu0 0
    %3175 = vmatpush1.bf16.msra.mxu0 0
    %3176 = vmatprep.subr.bf16.mxu0 0
    %3177 = vmatpush1.bf16.msra.mxu0 0
    %3178 = vmatprep.subr.bf16.mxu0 0
    %3179 = vmatpush1.bf16.msra.mxu0 %v3162
    %3180 = vmatprep.subr.bf16.mxu0 0
    %3181 = vmatpush2.bf16.msra.mxu0 0
    %3182 = vmatprep.subr.bf16.mxu0 0
    %3183 = vmatpush2.bf16.msra.mxu0 0
    %3184 = vmatprep.subr.bf16.mxu0 0
    %3185 = vmatpush2.bf16.msra.mxu0 0
    %3186 = vmatprep.subr.bf16.mxu0 0
    %3187 = vmatpush2.bf16.msra.mxu0 0
    %3188 = vmatprep.subr.bf16.mxu0 0
    %3189 = vmatpush2.bf16.msra.mxu0 0
    %3190 = vmatprep.subr.bf16.mxu0 0
    %3191 = vmatpush2.bf16.msra.mxu0 0
    %3192 = vmatprep.subr.bf16.mxu0 0
    %3193 = vmatpush2.bf16.msra.mxu0 0
    %3194 = vmatprep.subr.bf16.mxu0 0
    %3195 = vmatpush2.bf16.msra.mxu0 0
    %3196 = vmatprep.mubr.bf16.mxu0 0
    %3197 = vmatmul.mubr.bf16.gmra.mxu0 %v3159
    %v3198 = vpop.f32.mrf.mxu0
    %v3199 = vadd.f32 0.0, %v3198
    %v3200 = vpop.f32.mrf.mxu0
    %v3201 = vpop.f32.mrf.mxu0
    %v3202 = vpop.f32.mrf.mxu0
    %3203 = vdwg.mxu0
    %3204 = vrot.lane.b32.xlu0 %v1899, 64
    %v3205 = vpop.permute.xlu0 %3204
    %v3207 = vsel %vm1996, %v3153, 0
    %v3210 = vsel %vm2022, %v3205, 0
    %3212 = vmatprep.subr.bf16.mxu0 0
    %3213 = vmatpush1.bf16.msra.mxu0 0
    %3214 = vmatprep.subr.bf16.mxu0 0
    %3215 = vmatpush1.bf16.msra.mxu0 0
    %3216 = vmatprep.subr.bf16.mxu0 0
    %3217 = vmatpush1.bf16.msra.mxu0 0
    %3218 = vmatprep.subr.bf16.mxu0 0
    %3219 = vmatpush1.bf16.msra.mxu0 0
    %3220 = vmatprep.subr.bf16.mxu0 0
    %3221 = vmatpush1.bf16.msra.mxu0 0
    %3222 = vmatprep.subr.bf16.mxu0 0
    %3223 = vmatpush1.bf16.msra.mxu0 0
    %3224 = vmatprep.subr.bf16.mxu0 0
    %3225 = vmatpush1.bf16.msra.mxu0 0
    %3226 = vmatprep.subr.bf16.mxu0 0
    %3227 = vmatpush1.bf16.msra.mxu0 %v3210
    %3228 = vmatprep.subr.bf16.mxu0 0
    %3229 = vmatpush2.bf16.msra.mxu0 0
    %3230 = vmatprep.subr.bf16.mxu0 0
    %3231 = vmatpush2.bf16.msra.mxu0 0
    %3232 = vmatprep.subr.bf16.mxu0 0
    %3233 = vmatpush2.bf16.msra.mxu0 0
    %3234 = vmatprep.subr.bf16.mxu0 0
    %3235 = vmatpush2.bf16.msra.mxu0 0
    %3236 = vmatprep.subr.bf16.mxu0 0
    %3237 = vmatpush2.bf16.msra.mxu0 0
    %3238 = vmatprep.subr.bf16.mxu0 0
    %3239 = vmatpush2.bf16.msra.mxu0 0
    %3240 = vmatprep.subr.bf16.mxu0 0
    %3241 = vmatpush2.bf16.msra.mxu0 0
    %3242 = vmatprep.subr.bf16.mxu0 0
    %3243 = vmatpush2.bf16.msra.mxu0 0
    %3244 = vmatprep.mubr.bf16.mxu0 0
    %3245 = vmatmul.mubr.bf16.gmra.mxu0 %v3207
    %v3246 = vpop.f32.mrf.mxu0
    %v3247 = vadd.f32 0.0, %v3246
    %v3248 = vpop.f32.mrf.mxu0
    %v3249 = vpop.f32.mrf.mxu0
    %v3250 = vpop.f32.mrf.mxu0
    %3251 = vdwg.mxu0
    %v3252 = vmul.f32 %v3199, %v3154
    %v3253 = vmul.f32 %v3247, %v3155
    %v3254 = vpack.c.bf16 %v3252, %v3252
    %v3255 = vpack.c.bf16 %v3253, %v3253
    %3258 = vrot.lane.b32.xlu0 %v3254, 64
    %v3259 = vpop.permute.xlu0 %3258
    %3260 = vrot.lane.b32.xlu0 %v3255, 64
    %v3261 = vpop.permute.xlu0 %3260
    %v3264 = vsel %vm1902, %v3028, %v3259
    %v3268 = vsel %vm1902, %v3029, %v3261
    %3270 = vst [vmem:[#allocation2 + $0x8] sm:$0xf] %v3264
    %3271 = vst [vmem:[#allocation2 + $0x14] sm:$0xf] %v3268
    %v3272 = vld [vmem:[#allocation2] sm:$0xff]
    %v3273 = vld [vmem:[#allocation2 + $0x8] sm:$0xf]
    %v3274 = vld [vmem:[#allocation2 + $0xc] sm:$0xff]
    %v3275 = vld [vmem:[#allocation2 + $0x14] sm:$0xf]
    %v3276 = vld [vmem:[#allocation8] sm:$0xff]
    %v3277 = vld [vmem:[#allocation8 + $0x8] sm:$0xf]
    %v3278 = vld [vmem:[#allocation8 + $0xc] sm:$0xff]
    %v3279 = vld [vmem:[#allocation8 + $0x14] sm:$0xf]
    %v3280 = vld [vmem:[#allocation8 + $0x18] sm:$0xff]
    %v3281 = vld [vmem:[#allocation8 + $0x20] sm:$0xf]
    %v3282 = vld [vmem:[#allocation8 + $0x24] sm:$0xff]
    %v3283 = vld [vmem:[#allocation8 + $0x2c] sm:$0xf]
    %v3284 = vld [vmem:[#allocation8 + $0x30] sm:$0xff]
    %v3285 = vld [vmem:[#allocation8 + $0x38] sm:$0xf]
    %v3286 = vld [vmem:[#allocation8 + $0x3c] sm:$0xff]
    %v3287 = vld [vmem:[#allocation8 + $0x44] sm:$0xf]
    %v3288 = vld [vmem:[#allocation8 + $0x48] sm:$0xff]
    %v3289 = vld [vmem:[#allocation8 + $0x50] sm:$0xf]
    %v3290 = vld [vmem:[#allocation8 + $0x54] sm:$0xff]
    %v3291 = vld [vmem:[#allocation8 + $0x5c] sm:$0xf]
    %v3292 = vld [vmem:[#allocation8 + $0x60] sm:$0xff]
    %v3293 = vld [vmem:[#allocation8 + $0x68] sm:$0xf]
    %v3294 = vld [vmem:[#allocation8 + $0x6c] sm:$0xff]
    %v3295 = vld [vmem:[#allocation8 + $0x74] sm:$0xf]
    %v3296 = vld [vmem:[#allocation8 + $0x78] sm:$0xff]
    %v3297 = vld [vmem:[#allocation8 + $0x80] sm:$0xf]
    %v3298 = vld [vmem:[#allocation8 + $0x84] sm:$0xff]
    %v3299 = vld [vmem:[#allocation8 + $0x8c] sm:$0xf]
    %v3300 = vld [vmem:[#allocation8 + $0x90] sm:$0xff]
    %v3301 = vld [vmem:[#allocation8 + $0x98] sm:$0xf]
    %v3302 = vld [vmem:[#allocation8 + $0x9c] sm:$0xff]
    %v3303 = vld [vmem:[#allocation8 + $0xa4] sm:$0xf]
    %v3304 = vld [vmem:[#allocation8 + $0xa8] sm:$0xff]
    %v3305 = vld [vmem:[#allocation8 + $0xb0] sm:$0xf]
    %v3306 = vld [vmem:[#allocation8 + $0xb4] sm:$0xff]
    %v3307 = vld [vmem:[#allocation8 + $0xbc] sm:$0xf]
    %v3308 = vld [vmem:[#allocation8 + $0xc0] sm:$0xff]
    %v3309 = vld [vmem:[#allocation8 + $0xc8] sm:$0xf]
    %v3310 = vld [vmem:[#allocation8 + $0xcc] sm:$0xff]
    %v3311 = vld [vmem:[#allocation8 + $0xd4] sm:$0xf]
    %v3312 = vld [vmem:[#allocation8 + $0xd8] sm:$0xff]
    %v3313 = vld [vmem:[#allocation8 + $0xe0] sm:$0xf]
    %v3314 = vld [vmem:[#allocation8 + $0xe4] sm:$0xff]
    %v3315 = vld [vmem:[#allocation8 + $0xec] sm:$0xf]
    %v3316 = vld [vmem:[#allocation8 + $0xf0] sm:$0xff]
    %v3317 = vld [vmem:[#allocation8 + $0xf8] sm:$0xf]
    %v3318 = vld [vmem:[#allocation8 + $0xfc] sm:$0xff]
    %v3319 = vld [vmem:[#allocation8 + $0x104] sm:$0xf]
    %v3320 = vld [vmem:[#allocation8 + $0x108] sm:$0xff]
    %v3321 = vld [vmem:[#allocation8 + $0x110] sm:$0xf]
    %v3322 = vld [vmem:[#allocation8 + $0x114] sm:$0xff]
    %v3323 = vld [vmem:[#allocation8 + $0x11c] sm:$0xf]
    %v3324 = vld [vmem:[#allocation8 + $0x120] sm:$0xff]
    %v3325 = vld [vmem:[#allocation8 + $0x128] sm:$0xf]
    %v3326 = vld [vmem:[#allocation8 + $0x12c] sm:$0xff]
    %v3327 = vld [vmem:[#allocation8 + $0x134] sm:$0xf]
    %v3328 = vld [vmem:[#allocation8 + $0x138] sm:$0xff]
    %v3329 = vld [vmem:[#allocation8 + $0x140] sm:$0xf]
    %v3330 = vld [vmem:[#allocation8 + $0x144] sm:$0xff]
    %v3331 = vld [vmem:[#allocation8 + $0x14c] sm:$0xf]
    %v3332 = vld [vmem:[#allocation8 + $0x150] sm:$0xff]
    %v3333 = vld [vmem:[#allocation8 + $0x158] sm:$0xf]
    %v3334 = vld [vmem:[#allocation8 + $0x15c] sm:$0xff]
    %v3335 = vld [vmem:[#allocation8 + $0x164] sm:$0xf]
    %v3336 = vld [vmem:[#allocation8 + $0x168] sm:$0xff]
    %v3337 = vld [vmem:[#allocation8 + $0x170] sm:$0xf]
    %v3338 = vld [vmem:[#allocation8 + $0x174] sm:$0xff]
    %v3339 = vld [vmem:[#allocation8 + $0x17c] sm:$0xf]
    %v3340 = vld [vmem:[#allocation8 + $0x180] sm:$0xff]
    %v3341 = vld [vmem:[#allocation8 + $0x188] sm:$0xf]
    %v3342 = vld [vmem:[#allocation8 + $0x18c] sm:$0xff]
    %v3343 = vld [vmem:[#allocation8 + $0x194] sm:$0xf]
    %v3344 = vld [vmem:[#allocation8 + $0x198] sm:$0xff]
    %v3345 = vld [vmem:[#allocation8 + $0x1a0] sm:$0xf]
    %v3346 = vld [vmem:[#allocation8 + $0x1a4] sm:$0xff]
    %v3347 = vld [vmem:[#allocation8 + $0x1ac] sm:$0xf]
    %v3348 = vld [vmem:[#allocation8 + $0x1b0] sm:$0xff]
    %v3349 = vld [vmem:[#allocation8 + $0x1b8] sm:$0xf]
    %v3350 = vld [vmem:[#allocation8 + $0x1bc] sm:$0xff]
    %v3351 = vld [vmem:[#allocation8 + $0x1c4] sm:$0xf]
    %v3352 = vld [vmem:[#allocation8 + $0x1c8] sm:$0xff]
    %v3353 = vld [vmem:[#allocation8 + $0x1d0] sm:$0xf]
    %v3354 = vld [vmem:[#allocation8 + $0x1d4] sm:$0xff]
    %v3355 = vld [vmem:[#allocation8 + $0x1dc] sm:$0xf]
    %v3356 = vld [vmem:[#allocation8 + $0x1e0] sm:$0xff]
    %v3357 = vld [vmem:[#allocation8 + $0x1e8] sm:$0xf]
    %v3358 = vld [vmem:[#allocation8 + $0x1ec] sm:$0xff]
    %v3359 = vld [vmem:[#allocation8 + $0x1f4] sm:$0xf]
    %v3360 = vld [vmem:[#allocation8 + $0x1f8] sm:$0xff]
    %v3361 = vld [vmem:[#allocation8 + $0x200] sm:$0xf]
    %v3362 = vld [vmem:[#allocation8 + $0x204] sm:$0xff]
    %v3363 = vld [vmem:[#allocation8 + $0x20c] sm:$0xf]
    %v3364 = vld [vmem:[#allocation8 + $0x210] sm:$0xff]
    %v3365 = vld [vmem:[#allocation8 + $0x218] sm:$0xf]
    %v3366 = vld [vmem:[#allocation8 + $0x21c] sm:$0xff]
    %v3367 = vld [vmem:[#allocation8 + $0x224] sm:$0xf]
    %v3368 = vld [vmem:[#allocation8 + $0x228] sm:$0xff]
    %v3369 = vld [vmem:[#allocation8 + $0x230] sm:$0xf]
    %v3370 = vld [vmem:[#allocation8 + $0x234] sm:$0xff]
    %v3371 = vld [vmem:[#allocation8 + $0x23c] sm:$0xf]
    %v3372 = vld [vmem:[%s3] sm:$0x7]
    %v3374 = vlaneseq
    %v3375 = vshrl.u32 %v3374, 7
    %v3376 = vsub.s32 0, %v3375
    %v3377 = vrot.slane %v3372, %v3376
    %v3378 = vlaneseq
    %v3379 = vshrl.u32 %v3378, 7
    %v3380 = vsub.s32 1, %v3379
    %v3381 = vrot.slane %v3372, %v3380
    %v3382 = vlaneseq
    %v3383 = vshrl.u32 %v3382, 7
    %v3384 = vsub.s32 2, %v3383
    %v3385 = vrot.slane %v3372, %v3384
    %v3393 = vunpack.c.l.b16 %v3272
    %v3394 = vunpack.c.h.b16 %v3272
    %v3395 = vunpack.c.l.b16 %v3273
    %v3396 = vunpack.c.l.b16 %v3274
    %v3397 = vunpack.c.h.b16 %v3274
    %v3398 = vunpack.c.l.b16 %v3275
    %v3399 = vpack.c.b16 %v3396, %v3393
    %v3400 = vpack.c.b16 %v3397, %v3394
    %v3401 = vpack.c.b16 %v3398, %v3395
    %v3501 = vunpack.c.l.b16 %v3276
    %v3502 = vunpack.c.h.b16 %v3276
    %v3503 = vunpack.c.l.b16 %v3277
    %v3504 = vunpack.c.l.b16 %v3278
    %v3505 = vunpack.c.h.b16 %v3278
    %v3506 = vunpack.c.l.b16 %v3279
    %v3507 = vunpack.c.l.b16 %v3280
    %v3508 = vunpack.c.h.b16 %v3280
    %v3509 = vunpack.c.l.b16 %v3281
    %v3510 = vunpack.c.l.b16 %v3282
    %v3511 = vunpack.c.h.b16 %v3282
    %v3512 = vunpack.c.l.b16 %v3283
    %v3513 = vunpack.c.l.b16 %v3284
    %v3514 = vunpack.c.h.b16 %v3284
    %v3515 = vunpack.c.l.b16 %v3285
    %v3516 = vunpack.c.l.b16 %v3286
    %v3517 = vunpack.c.h.b16 %v3286
    %v3518 = vunpack.c.l.b16 %v3287
    %v3519 = vunpack.c.l.b16 %v3288
    %v3520 = vunpack.c.h.b16 %v3288
    %v3521 = vunpack.c.l.b16 %v3289
    %v3522 = vunpack.c.l.b16 %v3290
    %v3523 = vunpack.c.h.b16 %v3290
    %v3524 = vunpack.c.l.b16 %v3291
    %v3525 = vunpack.c.l.b16 %v3292
    %v3526 = vunpack.c.h.b16 %v3292
    %v3527 = vunpack.c.l.b16 %v3293
    %v3528 = vunpack.c.l.b16 %v3294
    %v3529 = vunpack.c.h.b16 %v3294
    %v3530 = vunpack.c.l.b16 %v3295
    %v3531 = vunpack.c.l.b16 %v3296
    %v3532 = vunpack.c.h.b16 %v3296
    %v3533 = vunpack.c.l.b16 %v3297
    %v3534 = vunpack.c.l.b16 %v3298
    %v3535 = vunpack.c.h.b16 %v3298
    %v3536 = vunpack.c.l.b16 %v3299
    %v3537 = vunpack.c.l.b16 %v3300
    %v3538 = vunpack.c.h.b16 %v3300
    %v3539 = vunpack.c.l.b16 %v3301
    %v3540 = vunpack.c.l.b16 %v3302
    %v3541 = vunpack.c.h.b16 %v3302
    %v3542 = vunpack.c.l.b16 %v3303
    %v3543 = vunpack.c.l.b16 %v3304
    %v3544 = vunpack.c.h.b16 %v3304
    %v3545 = vunpack.c.l.b16 %v3305
    %v3546 = vunpack.c.l.b16 %v3306
    %v3547 = vunpack.c.h.b16 %v3306
    %v3548 = vunpack.c.l.b16 %v3307
    %v3549 = vunpack.c.l.b16 %v3308
    %v3550 = vunpack.c.h.b16 %v3308
    %v3551 = vunpack.c.l.b16 %v3309
    %v3552 = vunpack.c.l.b16 %v3310
    %v3553 = vunpack.c.h.b16 %v3310
    %v3554 = vunpack.c.l.b16 %v3311
    %v3555 = vunpack.c.l.b16 %v3312
    %v3556 = vunpack.c.h.b16 %v3312
    %v3557 = vunpack.c.l.b16 %v3313
    %v3558 = vunpack.c.l.b16 %v3314
    %v3559 = vunpack.c.h.b16 %v3314
    %v3560 = vunpack.c.l.b16 %v3315
    %v3561 = vunpack.c.l.b16 %v3316
    %v3562 = vunpack.c.h.b16 %v3316
    %v3563 = vunpack.c.l.b16 %v3317
    %v3564 = vunpack.c.l.b16 %v3318
    %v3565 = vunpack.c.h.b16 %v3318
    %v3566 = vunpack.c.l.b16 %v3319
    %v3567 = vunpack.c.l.b16 %v3320
    %v3568 = vunpack.c.h.b16 %v3320
    %v3569 = vunpack.c.l.b16 %v3321
    %v3570 = vunpack.c.l.b16 %v3322
    %v3571 = vunpack.c.h.b16 %v3322
    %v3572 = vunpack.c.l.b16 %v3323
    %v3573 = vunpack.c.l.b16 %v3324
    %v3574 = vunpack.c.h.b16 %v3324
    %v3575 = vunpack.c.l.b16 %v3325
    %v3576 = vunpack.c.l.b16 %v3326
    %v3577 = vunpack.c.h.b16 %v3326
    %v3578 = vunpack.c.l.b16 %v3327
    %v3579 = vunpack.c.l.b16 %v3328
    %v3580 = vunpack.c.h.b16 %v3328
    %v3581 = vunpack.c.l.b16 %v3329
    %v3582 = vunpack.c.l.b16 %v3330
    %v3583 = vunpack.c.h.b16 %v3330
    %v3584 = vunpack.c.l.b16 %v3331
    %v3585 = vunpack.c.l.b16 %v3332
    %v3586 = vunpack.c.h.b16 %v3332
    %v3587 = vunpack.c.l.b16 %v3333
    %v3588 = vunpack.c.l.b16 %v3334
    %v3589 = vunpack.c.h.b16 %v3334
    %v3590 = vunpack.c.l.b16 %v3335
    %v3591 = vunpack.c.l.b16 %v3336
    %v3592 = vunpack.c.h.b16 %v3336
    %v3593 = vunpack.c.l.b16 %v3337
    %v3594 = vunpack.c.l.b16 %v3338
    %v3595 = vunpack.c.h.b16 %v3338
    %v3596 = vunpack.c.l.b16 %v3339
    %v3597 = vunpack.c.l.b16 %v3340
    %v3598 = vunpack.c.h.b16 %v3340
    %v3599 = vunpack.c.l.b16 %v3341
    %v3600 = vunpack.c.l.b16 %v3342
    %v3601 = vunpack.c.h.b16 %v3342
    %v3602 = vunpack.c.l.b16 %v3343
    %v3603 = vunpack.c.l.b16 %v3344
    %v3604 = vunpack.c.h.b16 %v3344
    %v3605 = vunpack.c.l.b16 %v3345
    %v3606 = vunpack.c.l.b16 %v3346
    %v3607 = vunpack.c.h.b16 %v3346
    %v3608 = vunpack.c.l.b16 %v3347
    %v3609 = vunpack.c.l.b16 %v3348
    %v3610 = vunpack.c.h.b16 %v3348
    %v3611 = vunpack.c.l.b16 %v3349
    %v3612 = vunpack.c.l.b16 %v3350
    %v3613 = vunpack.c.h.b16 %v3350
    %v3614 = vunpack.c.l.b16 %v3351
    %v3615 = vunpack.c.l.b16 %v3352
    %v3616 = vunpack.c.h.b16 %v3352
    %v3617 = vunpack.c.l.b16 %v3353
    %v3618 = vunpack.c.l.b16 %v3354
    %v3619 = vunpack.c.h.b16 %v3354
    %v3620 = vunpack.c.l.b16 %v3355
    %v3621 = vunpack.c.l.b16 %v3356
    %v3622 = vunpack.c.h.b16 %v3356
    %v3623 = vunpack.c.l.b16 %v3357
    %v3624 = vunpack.c.l.b16 %v3358
    %v3625 = vunpack.c.h.b16 %v3358
    %v3626 = vunpack.c.l.b16 %v3359
    %v3627 = vunpack.c.l.b16 %v3360
    %v3628 = vunpack.c.h.b16 %v3360
    %v3629 = vunpack.c.l.b16 %v3361
    %v3630 = vunpack.c.l.b16 %v3362
    %v3631 = vunpack.c.h.b16 %v3362
    %v3632 = vunpack.c.l.b16 %v3363
    %v3633 = vunpack.c.l.b16 %v3364
    %v3634 = vunpack.c.h.b16 %v3364
    %v3635 = vunpack.c.l.b16 %v3365
    %v3636 = vunpack.c.l.b16 %v3366
    %v3637 = vunpack.c.h.b16 %v3366
    %v3638 = vunpack.c.l.b16 %v3367
    %v3639 = vunpack.c.l.b16 %v3368
    %v3640 = vunpack.c.h.b16 %v3368
    %v3641 = vunpack.c.l.b16 %v3369
    %v3642 = vunpack.c.l.b16 %v3370
    %v3643 = vunpack.c.h.b16 %v3370
    %v3644 = vunpack.c.l.b16 %v3371
    %v3645 = vpack.c.b16 %v3504, %v3501
    %v3646 = vpack.c.b16 %v3505, %v3502
    %v3647 = vpack.c.b16 %v3506, %v3503
    %v3648 = vpack.c.b16 %v3510, %v3507
    %v3649 = vpack.c.b16 %v3511, %v3508
    %v3650 = vpack.c.b16 %v3512, %v3509
    %v3651 = vpack.c.b16 %v3516, %v3513
    %v3652 = vpack.c.b16 %v3517, %v3514
    %v3653 = vpack.c.b16 %v3518, %v3515
    %v3654 = vpack.c.b16 %v3522, %v3519
    %v3655 = vpack.c.b16 %v3523, %v3520
    %v3656 = vpack.c.b16 %v3524, %v3521
    %v3657 = vpack.c.b16 %v3528, %v3525
    %v3658 = vpack.c.b16 %v3529, %v3526
    %v3659 = vpack.c.b16 %v3530, %v3527
    %v3660 = vpack.c.b16 %v3534, %v3531
    %v3661 = vpack.c.b16 %v3535, %v3532
    %v3662 = vpack.c.b16 %v3536, %v3533
    %v3663 = vpack.c.b16 %v3540, %v3537
    %v3664 = vpack.c.b16 %v3541, %v3538
    %v3665 = vpack.c.b16 %v3542, %v3539
    %v3666 = vpack.c.b16 %v3546, %v3543
    %v3667 = vpack.c.b16 %v3547, %v3544
    %v3668 = vpack.c.b16 %v3548, %v3545
    %v3669 = vpack.c.b16 %v3552, %v3549
    %v3670 = vpack.c.b16 %v3553, %v3550
    %v3671 = vpack.c.b16 %v3554, %v3551
    %v3672 = vpack.c.b16 %v3558, %v3555
    %v3673 = vpack.c.b16 %v3559, %v3556
    %v3674 = vpack.c.b16 %v3560, %v3557
    %v3675 = vpack.c.b16 %v3564, %v3561
    %v3676 = vpack.c.b16 %v3565, %v3562
    %v3677 = vpack.c.b16 %v3566, %v3563
    %v3678 = vpack.c.b16 %v3570, %v3567
    %v3679 = vpack.c.b16 %v3571, %v3568
    %v3680 = vpack.c.b16 %v3572, %v3569
    %v3681 = vpack.c.b16 %v3576, %v3573
    %v3682 = vpack.c.b16 %v3577, %v3574
    %v3683 = vpack.c.b16 %v3578, %v3575
    %v3684 = vpack.c.b16 %v3582, %v3579
    %v3685 = vpack.c.b16 %v3583, %v3580
    %v3686 = vpack.c.b16 %v3584, %v3581
    %v3687 = vpack.c.b16 %v3588, %v3585
    %v3688 = vpack.c.b16 %v3589, %v3586
    %v3689 = vpack.c.b16 %v3590, %v3587
    %v3690 = vpack.c.b16 %v3594, %v3591
    %v3691 = vpack.c.b16 %v3595, %v3592
    %v3692 = vpack.c.b16 %v3596, %v3593
    %v3693 = vpack.c.b16 %v3600, %v3597
    %v3694 = vpack.c.b16 %v3601, %v3598
    %v3695 = vpack.c.b16 %v3602, %v3599
    %v3696 = vpack.c.b16 %v3606, %v3603
    %v3697 = vpack.c.b16 %v3607, %v3604
    %v3698 = vpack.c.b16 %v3608, %v3605
    %v3699 = vpack.c.b16 %v3612, %v3609
    %v3700 = vpack.c.b16 %v3613, %v3610
    %v3701 = vpack.c.b16 %v3614, %v3611
    %v3702 = vpack.c.b16 %v3618, %v3615
    %v3703 = vpack.c.b16 %v3619, %v3616
    %v3704 = vpack.c.b16 %v3620, %v3617
    %v3705 = vpack.c.b16 %v3624, %v3621
    %v3706 = vpack.c.b16 %v3625, %v3622
    %v3707 = vpack.c.b16 %v3626, %v3623
    %v3708 = vpack.c.b16 %v3630, %v3627
    %v3709 = vpack.c.b16 %v3631, %v3628
    %v3710 = vpack.c.b16 %v3632, %v3629
    %v3711 = vpack.c.b16 %v3636, %v3633
    %v3712 = vpack.c.b16 %v3637, %v3634
    %v3713 = vpack.c.b16 %v3638, %v3635
    %v3714 = vpack.c.b16 %v3642, %v3639
    %v3715 = vpack.c.b16 %v3643, %v3640
    %v3716 = vpack.c.b16 %v3644, %v3641
    %3789 = vmatprep.subr.bf16.mxu0 %v3667
    %3790 = vmatpush1.bf16.msra.mxu0 %v3666
    %3791 = vmatprep.subr.bf16.mxu0 %v3664
    %3792 = vmatpush1.bf16.msra.mxu0 %v3663
    %3793 = vmatprep.subr.bf16.mxu0 %v3661
    %3794 = vmatpush1.bf16.msra.mxu0 %v3660
    %3795 = vmatprep.subr.bf16.mxu0 %v3658
    %3796 = vmatpush1.bf16.msra.mxu0 %v3657
    %3797 = vmatprep.subr.bf16.mxu0 %v3655
    %3798 = vmatpush1.bf16.msra.mxu0 %v3654
    %3799 = vmatprep.subr.bf16.mxu0 %v3652
    %3800 = vmatpush1.bf16.msra.mxu0 %v3651
    %3801 = vmatprep.subr.bf16.mxu0 %v3649
    %3802 = vmatpush1.bf16.msra.mxu0 %v3648
    %3803 = vmatprep.subr.bf16.mxu0 %v3646
    %3804 = vmatpush1.bf16.msra.mxu0 %v3645
    %3805 = vmatprep.subr.bf16.mxu0 %v3691
    %3806 = vmatpush2.bf16.msra.mxu0 %v3690
    %3807 = vmatprep.subr.bf16.mxu0 %v3688
    %3808 = vmatpush2.bf16.msra.mxu0 %v3687
    %3809 = vmatprep.subr.bf16.mxu0 %v3685
    %3810 = vmatpush2.bf16.msra.mxu0 %v3684
    %3811 = vmatprep.subr.bf16.mxu0 %v3682
    %3812 = vmatpush2.bf16.msra.mxu0 %v3681
    %3813 = vmatprep.subr.bf16.mxu0 %v3679
    %3814 = vmatpush2.bf16.msra.mxu0 %v3678
    %3815 = vmatprep.subr.bf16.mxu0 %v3676
    %3816 = vmatpush2.bf16.msra.mxu0 %v3675
    %3817 = vmatprep.subr.bf16.mxu0 %v3673
    %3818 = vmatpush2.bf16.msra.mxu0 %v3672
    %3819 = vmatprep.subr.bf16.mxu0 %v3670
    %3820 = vmatpush2.bf16.msra.mxu0 %v3669
    %3821 = vmatprep.mubr.bf16.mxu0 %v3400
    %3822 = vmatmul.mubr.bf16.gmra.mxu0 %v3399
    %v3823 = vpop.f32.mrf.mxu0
    %v3824 = vadd.f32 %v3377, %v3823
    %v3825 = vpop.f32.mrf.mxu0
    %v3826 = vadd.f32 %v3381, %v3825
    %v3827 = vpop.f32.mrf.mxu0
    %v3828 = vadd.f32 %v3377, %v3827
    %v3829 = vpop.f32.mrf.mxu0
    %v3830 = vadd.f32 %v3381, %v3829
    %3831 = vdwg.mxu0
    %3832 = vmatprep.subr.bf16.mxu0 %v3715
    %3833 = vmatpush1.bf16.msra.mxu0 %v3714
    %3834 = vmatprep.subr.bf16.mxu0 %v3712
    %3835 = vmatpush1.bf16.msra.mxu0 %v3711
    %3836 = vmatprep.subr.bf16.mxu0 %v3709
    %3837 = vmatpush1.bf16.msra.mxu0 %v3708
    %3838 = vmatprep.subr.bf16.mxu0 %v3706
    %3839 = vmatpush1.bf16.msra.mxu0 %v3705
    %3840 = vmatprep.subr.bf16.mxu0 %v3703
    %3841 = vmatpush1.bf16.msra.mxu0 %v3702
    %3842 = vmatprep.subr.bf16.mxu0 %v3700
    %3843 = vmatpush1.bf16.msra.mxu0 %v3699
    %3844 = vmatprep.subr.bf16.mxu0 %v3697
    %3845 = vmatpush1.bf16.msra.mxu0 %v3696
    %3846 = vmatprep.subr.bf16.mxu0 %v3694
    %3847 = vmatpush1.bf16.msra.mxu0 %v3693
    %3848 = vmatprep.subr.bf16.mxu0 0
    %3849 = vmatpush2.bf16.msra.mxu0 0
    %3850 = vmatprep.subr.bf16.mxu0 0
    %3851 = vmatpush2.bf16.msra.mxu0 0
    %3852 = vmatprep.subr.bf16.mxu0 0
    %3853 = vmatpush2.bf16.msra.mxu0 0
    %3854 = vmatprep.subr.bf16.mxu0 0
    %3855 = vmatpush2.bf16.msra.mxu0 0
    %3856 = vmatprep.subr.bf16.mxu0 0
    %3857 = vmatpush2.bf16.msra.mxu0 0
    %3858 = vmatprep.subr.bf16.mxu0 0
    %3859 = vmatpush2.bf16.msra.mxu0 0
    %3860 = vmatprep.subr.bf16.mxu0 0
    %3861 = vmatpush2.bf16.msra.mxu0 0
    %3862 = vmatprep.subr.bf16.mxu0 0
    %3863 = vmatpush2.bf16.msra.mxu0 0
    %3864 = vmatprep.mubr.bf16.mxu0 0
    %3865 = vmatmul.mubr.bf16.gmra.mxu0 %v3401
    %v3866 = vpop.f32.mrf.mxu0
    %v3867 = vadd.f32 %v3824, %v3866
    %v3868 = vpop.f32.mrf.mxu0
    %v3869 = vadd.f32 %v3826, %v3868
    %v3870 = vpop.f32.mrf.mxu0
    %v3871 = vadd.f32 %v3828, %v3870
    %v3872 = vpop.f32.mrf.mxu0
    %v3873 = vadd.f32 %v3830, %v3872
    %3874 = vdwg.mxu0
    %3875 = vmatprep.subr.bf16.mxu0 0
    %3876 = vmatpush1.bf16.msra.mxu0 %v3668
    %3877 = vmatprep.subr.bf16.mxu0 0
    %3878 = vmatpush1.bf16.msra.mxu0 %v3665
    %3879 = vmatprep.subr.bf16.mxu0 0
    %3880 = vmatpush1.bf16.msra.mxu0 %v3662
    %3881 = vmatprep.subr.bf16.mxu0 0
    %3882 = vmatpush1.bf16.msra.mxu0 %v3659
    %3883 = vmatprep.subr.bf16.mxu0 0
    %3884 = vmatpush1.bf16.msra.mxu0 %v3656
    %3885 = vmatprep.subr.bf16.mxu0 0
    %3886 = vmatpush1.bf16.msra.mxu0 %v3653
    %3887 = vmatprep.subr.bf16.mxu0 0
    %3888 = vmatpush1.bf16.msra.mxu0 %v3650
    %3889 = vmatprep.subr.bf16.mxu0 0
    %3890 = vmatpush1.bf16.msra.mxu0 %v3647
    %3891 = vmatprep.subr.bf16.mxu0 0
    %3892 = vmatpush2.bf16.msra.mxu0 %v3692
    %3893 = vmatprep.subr.bf16.mxu0 0
    %3894 = vmatpush2.bf16.msra.mxu0 %v3689
    %3895 = vmatprep.subr.bf16.mxu0 0
    %3896 = vmatpush2.bf16.msra.mxu0 %v3686
    %3897 = vmatprep.subr.bf16.mxu0 0
    %3898 = vmatpush2.bf16.msra.mxu0 %v3683
    %3899 = vmatprep.subr.bf16.mxu0 0
    %3900 = vmatpush2.bf16.msra.mxu0 %v3680
    %3901 = vmatprep.subr.bf16.mxu0 0
    %3902 = vmatpush2.bf16.msra.mxu0 %v3677
    %3903 = vmatprep.subr.bf16.mxu0 0
    %3904 = vmatpush2.bf16.msra.mxu0 %v3674
    %3905 = vmatprep.subr.bf16.mxu0 0
    %3906 = vmatpush2.bf16.msra.mxu0 %v3671
    %3907 = vmatprep.mubr.bf16.mxu0 %v3400
    %3908 = vmatmul.mubr.bf16.gmra.mxu0 %v3399
    %v3909 = vpop.f32.mrf.mxu0
    %v3910 = vadd.f32 %v3385, %v3909
    %v3911 = vpop.f32.mrf.mxu0
    %v3912 = vpop.f32.mrf.mxu0
    %v3913 = vadd.f32 %v3385, %v3912
    %v3914 = vpop.f32.mrf.mxu0
    %3915 = vdwg.mxu0
    %3916 = vmatprep.subr.bf16.mxu0 0
    %3917 = vmatpush1.bf16.msra.mxu0 %v3716
    %3918 = vmatprep.subr.bf16.mxu0 0
    %3919 = vmatpush1.bf16.msra.mxu0 %v3713
    %3920 = vmatprep.subr.bf16.mxu0 0
    %3921 = vmatpush1.bf16.msra.mxu0 %v3710
    %3922 = vmatprep.subr.bf16.mxu0 0
    %3923 = vmatpush1.bf16.msra.mxu0 %v3707
    %3924 = vmatprep.subr.bf16.mxu0 0
    %3925 = vmatpush1.bf16.msra.mxu0 %v3704
    %3926 = vmatprep.subr.bf16.mxu0 0
    %3927 = vmatpush1.bf16.msra.mxu0 %v3701
    %3928 = vmatprep.subr.bf16.mxu0 0
    %3929 = vmatpush1.bf16.msra.mxu0 %v3698
    %3930 = vmatprep.subr.bf16.mxu0 0
    %3931 = vmatpush1.bf16.msra.mxu0 %v3695
    %3932 = vmatprep.subr.bf16.mxu0 0
    %3933 = vmatpush2.bf16.msra.mxu0 0
    %3934 = vmatprep.subr.bf16.mxu0 0
    %3935 = vmatpush2.bf16.msra.mxu0 0
    %3936 = vmatprep.subr.bf16.mxu0 0
    %3937 = vmatpush2.bf16.msra.mxu0 0
    %3938 = vmatprep.subr.bf16.mxu0 0
    %3939 = vmatpush2.bf16.msra.mxu0 0
    %3940 = vmatprep.subr.bf16.mxu0 0
    %3941 = vmatpush2.bf16.msra.mxu0 0
    %3942 = vmatprep.subr.bf16.mxu0 0
    %3943 = vmatpush2.bf16.msra.mxu0 0
    %3944 = vmatprep.subr.bf16.mxu0 0
    %3945 = vmatpush2.bf16.msra.mxu0 0
    %3946 = vmatprep.subr.bf16.mxu0 0
    %3947 = vmatpush2.bf16.msra.mxu0 0
    %3948 = vmatprep.mubr.bf16.mxu0 0
    %3949 = vmatmul.mubr.bf16.gmra.mxu0 %v3401
    %v3950 = vpop.f32.mrf.mxu0
    %v3951 = vadd.f32 %v3910, %v3950
    %v3952 = vpop.f32.mrf.mxu0
    %v3953 = vpop.f32.mrf.mxu0
    %v3954 = vadd.f32 %v3913, %v3953
    %v3955 = vpop.f32.mrf.mxu0
    %3956 = vdwg.mxu0
    %3957 = vst [vmem:[#allocation11] sm:$0xff] %v3867
    %3958 = vst [vmem:[#allocation11 + $0x8] sm:$0xff] %v3869
    %3959 = vst [vmem:[#allocation11 + $0x10] sm:$0xff] %v3951
    %3960 = vst [vmem:[#allocation11 + $0x18] sm:$0xff] %v3871
    %3961 = vst [vmem:[#allocation11 + $0x20] sm:$0xff] %v3873
    %3962 = vst [vmem:[#allocation11 + $0x28] sm:$0xff] %v3954
    // Predicated region
    $region38: #{tpu_custom_call.1} parent=1 // pred_check
      _
    $region39: #{tpu_custom_call.1} parent=1 // pred_check_branch
      %3964 = sbr.rel (0) target = $region41
    $region40: #{tpu_custom_call.1} parent=1 // pred_region
      %s3966 = ssub.s32 768, 768
      %3967 = vsyncadd [#allocation5], %s3966
      %s3968 = sshll.u32 [#allocation11], 4
      %s3969 = int_to_ptr.vmem [resolvable:$true] %s3968
      %3974 = dma.vmem_to_hbm [thread:$0]  %s3969, 768, %s5, [#allocation5], 384, 384, 24
    $region41: #{tpu_custom_call.1} parent=1 // pred_fallthru
      _
    // Predicated region
    $region42: #{tpu_custom_call.1} parent=1 // pred_check
      _
    $region43: #{tpu_custom_call.1} parent=1 // pred_check_branch
      %3976 = sbr.rel (0) target = $region45
    $region44: #{tpu_custom_call.1} parent=1 // pred_region
      %3977 = dma.done [#allocation5], 768
    $region45: #{tpu_custom_call.1} parent=1 // pred_fallthru
      _
    %3978 = vsyncpa [#allocation4], 1
    %3979 = vsyncpa [#allocation7], 1
    %3980 = vsyncpa [#allocation10], 1
    %3981 = vsyncpa [#allocation5], 1

</llo_original>
